<compile_context>
chip_gen: v7x
topology: tpu7x:2x2x1
jax: 0.10.0
libtpu: 0.0.40
codegen_flags: <defaults>
</compile_context>

<pallas_src>
import functools
import math

import jax
import jax.numpy as jnp
from jax.experimental import pallas as pl
from jax.experimental.pallas import tpu as pltpu

_HIGHEST = jax.lax.Precision.HIGHEST


def _cdiv(a, b):
    return -(-a // b)


def _round_up(a, b):
    return _cdiv(a, b) * b


# ---------------------------- fast bounded sine ------------------------------
# SIREN arguments satisfy |z| = |omega*(Wx+b)| <~ 60 for the standard init, so
# a single nearest-integer reduction mod pi with a 3-term f32 split of pi,
# followed by SLEEF's degree-9 odd minimax polynomial, is accurate to a few
# ulp — at roughly half the VALU ops of XLA's generic sin lowering.

_INV_PI = 0.3183098861837907
_PI_A = 3.1414794921875                # f32-exact split of pi (SLEEF PI_{A,B,C}2f)
_PI_B = 1.1315941810607910156e-04
_PI_C = 1.9841872589410058936e-09

_S9 = 2.6083159809786593541503e-06     # minimax sin coeffs on [-pi/2, pi/2]
_S7 = -1.981069071916863322258e-04
_S5 = 8.33307858556509017944336e-03
_S3 = -1.66666597127914428710938e-01


def _fast_sin(z):
    """sin(z) for moderately bounded f32 z (|z| << 2^18). Pure VPU ops."""
    k = jnp.floor(z * _INV_PI + 0.5)          # nearest integer multiple of pi
    r = z - k * _PI_A
    r = r - k * _PI_B
    r = r - k * _PI_C                          # |r| <= pi/2
    s = r * r
    p = _S9 * s + _S7
    p = p * s + _S5
    p = p * s + _S3
    p = (s * r) * p + r                        # sin(r)
    odd = (k.astype(jnp.int32) & 1) == 1       # sin(r + k*pi) = (-1)^k sin(r)
    return jnp.where(odd, -p, p)


# ----------------------------- Pallas kernel --------------------------------

def _siren_kernel(n_hidden, hid, x_ref, w0_ref, wh_ref, wl_ref, out_ref, h_ref):
    """Feature-major SIREN MLP on one row tile.

    x_ref : [in_f+1, tm]   (last row is the constant 1 -> first-layer bias)
    w0_ref: [hid, in_f+1]  (omega folded in, bias appended as last column)
    wh_ref: [L, hid, hid+1]
    wl_ref: [out_f, hid+1]
    out_ref: [out_f, tm]
    h_ref : VMEM scratch [hid+1, tm]; row `hid` holds the constant 1 so every
            layer's bias rides the MXU contraction instead of a VPU add.
    """
    tm = h_ref.shape[1]
    # (Re)write the ones row every grid step: trivially cheap ([1, tm] store)
    # and megacore-safe (each TensorCore has its own scratch, so a
    # program_id==0 guard would leave the second core uninitialized).
    h_ref[hid:hid + 1, :] = jnp.ones((1, tm), jnp.float32)

    # First sine layer.  K = in_f+1 is tiny but the MXU is ~98% idle here, so
    # this is free; the bias is the last column of w0 against the ones row.
    z = jnp.dot(w0_ref[...], x_ref[...].astype(jnp.float32),
                preferred_element_type=jnp.float32, precision=_HIGHEST)
    h_ref[0:hid, :] = _fast_sin(z)

    if n_hidden <= 4:
        for l in range(n_hidden):              # static unroll for small L
            z = jnp.dot(wh_ref[l], h_ref[...],
                        preferred_element_type=jnp.float32, precision=_HIGHEST)
            h_ref[0:hid, :] = _fast_sin(z)
    else:
        # Deep SIRENs: bound live ranges / code size with a real loop.
        def body(l, carry):
            zl = jnp.dot(wh_ref[l], h_ref[...],
                         preferred_element_type=jnp.float32, precision=_HIGHEST)
            h_ref[0:hid, :] = _fast_sin(zl)
            return carry
        jax.lax.fori_loop(0, n_hidden, body, 0, unroll=False)

    out = jnp.dot(wl_ref[...], h_ref[...],
                  preferred_element_type=jnp.float32, precision=_HIGHEST)
    out_ref[...] = out.astype(out_ref.dtype)


# ------------------------------- wrapper -------------------------------------

def siren_forward(coords, params, omegas, *, tm=8192, interpret=False):
    """coords: [N, in_features] (row-major, like the PyTorch module).
    params: list of (W [out, in], b [out]) in PyTorch nn.Linear layout.
    omegas: one omega per sine layer (len(params) - 1 of them).
    Returns [N, out_features]."""
    N, in_f = coords.shape
    n_layers = len(params)
    assert len(omegas) == n_layers - 1, "outermost layer must be linear"
    hid = params[0][0].shape[0]
    out_f = params[-1][0].shape[0]

    # ---- one-time parameter transform: fold omega, append bias column ----
    def fold(w, b, om=None):
        w = jnp.asarray(w, jnp.float32)
        b = jnp.asarray(b, jnp.float32).reshape(-1, 1)
        if om is not None:
            w = w * om
            b = b * om
        return jnp.concatenate([w, b], axis=1)          # [out, in+1]

    w0a = fold(*params[0], jnp.float32(omegas[0]))      # [hid, in_f+1]
    hid_aug = [fold(w, b, jnp.float32(omegas[i + 1]))
               for i, (w, b) in enumerate(params[1:-1])]
    wla = fold(*params[-1])                             # [out_f, hid+1]
    n_hidden = len(hid_aug)
    wha = (jnp.stack(hid_aug) if hid_aug
           else jnp.zeros((1, hid, hid + 1), jnp.float32))   # dummy, unused

    # ---- balanced row tiles (waste < 128 columns per block) ----
    rows = _round_up(N, 128)
    nblocks = _cdiv(rows, max(128, tm))
    if rows >= 256:
        nblocks = max(nblocks, 2)        # >=2 blocks so v7x megacore engages
    tm_eff = _round_up(_cdiv(N, nblocks), 128)
    n_pad = nblocks * tm_eff

    # Feature-major coords with a ones row appended (first-layer bias column),
    # padded on the point axis (padded columns are computed then discarded).
    # TODO(synk): the host-side transpose/concat is one extra HBM pass; it is
    # negligible next to the VALU-bound sine work, so it stays on the host.
    x_aug = jnp.concatenate(
        [jnp.asarray(coords, jnp.float32).T, jnp.ones((1, N), jnp.float32)],
        axis=0)                                          # [in_f+1, N]
    if n_pad != N:
        x_aug = jnp.pad(x_aug, ((0, 0), (0, n_pad - N)))

    kernel = functools.partial(_siren_kernel, n_hidden, hid)

    out_fm = pl.pallas_call(
        kernel,
        out_shape=jax.ShapeDtypeStruct((out_f, n_pad), coords.dtype),
        grid=(nblocks,),
        in_specs=[
            pl.BlockSpec((in_f + 1, tm_eff), lambda i: (0, i)),
            pl.BlockSpec(w0a.shape, lambda i: (0, 0)),
            pl.BlockSpec(wha.shape, lambda i: (0, 0, 0)),
            pl.BlockSpec(wla.shape, lambda i: (0, 0)),
        ],
        out_specs=pl.BlockSpec((out_f, tm_eff), lambda i: (0, i)),
        scratch_shapes=[pltpu.VMEM((hid + 1, tm_eff), jnp.float32)],
        compiler_params=pltpu.CompilerParams(
            dimension_semantics=("parallel",)),
        interpret=interpret,
    )(x_aug, w0a, wha, wla)

    return out_fm[:, :N].T                               # [N, out_f]


# ------------------------- deterministic parameter init ---------------------

def _uniform(key, shape, lo, hi, dtype=jnp.float32):
    return jax.random.uniform(key, shape, dtype=dtype, minval=lo, maxval=hi)


def init_siren_params(key, in_features, hidden_features, hidden_layers,
                      out_features, first_omega_0=30.0, hidden_omega_0=30.0,
                      outermost_linear=True):
    """Mirrors SIREN.__init__; weights in PyTorch-native [out, in] layout."""
    # TODO(synk): hidden_layers == 0 (single Linear net) and pos_encode=True
    # variants of the module are not implemented here.
    assert hidden_layers >= 1 and outermost_linear
    params, omegas = [], []
    keys = iter(jax.random.split(key, 2 * (hidden_layers + 2)))

    # first SineLayer
    w = _uniform(next(keys), (hidden_features, in_features),
                 -1.0 / in_features, 1.0 / in_features)
    bb = 1.0 / math.sqrt(in_features)
    b = _uniform(next(keys), (hidden_features,), -bb, bb)
    params.append((w, b))
    omegas.append(first_omega_0)

    # hidden SineLayers
    for _ in range(hidden_layers - 1):
        wb = math.sqrt(6.0 / hidden_features) / hidden_omega_0
        w = _uniform(next(keys), (hidden_features, hidden_features), -wb, wb)
        bb = 1.0 / math.sqrt(hidden_features)
        b = _uniform(next(keys), (hidden_features,), -bb, bb)
        params.append((w, b))
        omegas.append(hidden_omega_0)

    # outermost linear (PyTorch default init bounds)
    wb = 1.0 / math.sqrt(hidden_features)
    w = _uniform(next(keys), (out_features, hidden_features), -wb, wb)
    b = _uniform(next(keys), (out_features,), -wb, wb)
    params.append((w, b))
    return params, omegas


# ------------------------------ reference (pure JAX) -------------------------

def siren_reference(coords, params, omegas):
    """Exact PyTorch semantics: sin(omega * (x @ W.T + b)); last layer linear.
    Dots pinned to HIGHEST so the reference is true f32 (TPU default would
    silently truncate operands to bf16)."""
    h = jnp.asarray(coords, jnp.float32)
    for li, (w, b) in enumerate(params):
        z = jnp.dot(h, jnp.asarray(w, jnp.float32).T, precision=_HIGHEST)
        z = z + jnp.asarray(b, jnp.float32)
        h = jnp.sin(omegas[li] * z) if li < len(omegas) else z
    return h.astype(coords.dtype)


# ----------------------------------- main ------------------------------------

if __name__ == "__main__":
    key = jax.random.PRNGKey(0)
    k_params, k_coords = jax.random.split(key)

    in_features = 2
    hidden_features = 32
    hidden_layers = 3
    out_features = 1
    N = 300  # deliberately not a multiple of 128 to exercise the padded path

    params, omegas = init_siren_params(
        k_params, in_features, hidden_features, hidden_layers, out_features,
        first_omega_0=30.0, hidden_omega_0=30.0, outermost_linear=True)

    coords = jax.random.uniform(k_coords, (N, in_features),
                                dtype=jnp.float32, minval=-1.0, maxval=1.0)

    out = jax.block_until_ready(siren_forward(coords, params, omegas))
    ref = siren_reference(coords, params, omegas)

    assert out.shape == (N, out_features)
    # Omega folding, bias-in-matmul and the transposed contraction order
    # reshuffle f32 rounding through the error-amplifying sin(30*x) chain; the
    # custom sine itself is accurate to a few ulp.  3e-4 is a comfortable f32
    # bound for this 4-layer chain.
    assert jnp.allclose(out, ref, atol=3e-4, rtol=1e-4), (
        "mismatch vs JAX reference: max abs diff = "
        f"{float(jnp.max(jnp.abs(out - ref)))}")

    print("KERNEL_OK")
</pallas_src>

<mosaic_0001>
module attributes {stable_mosaic.version = 11 : i64} {
  func.func @_siren_kernel(%arg0: i32, %arg1: memref<3x256xf32, #tpu.memory_space<vmem>>, %arg2: memref<32x3xf32, #tpu.memory_space<vmem>>, %arg3: memref<2x32x33xf32, #tpu.memory_space<vmem>>, %arg4: memref<1x33xf32, #tpu.memory_space<vmem>>, %arg5: memref<1x256xf32, #tpu.memory_space<vmem>>, %arg6: memref<33x256xf32, #tpu.memory_space<vmem>>) attributes {dimension_semantics = [#tpu.dimension_semantics<parallel>], iteration_bounds = array<i64: 2>, scalar_prefetch = 0 : i64, scratch_operands = 1 : i64, tpu.core_type = #tpu.core_type<tc>, window_params = [{transform_indices = @transform_0, window_bounds = array<i64: 3, 256>}, {pipeline_mode = #tpu.pipeline_mode<synchronous>, transform_indices = @transform_1, window_bounds = array<i64: 32, 3>}, {pipeline_mode = #tpu.pipeline_mode<synchronous>, transform_indices = @transform_2, window_bounds = array<i64: 2, 32, 33>}, {pipeline_mode = #tpu.pipeline_mode<synchronous>, transform_indices = @transform_3, window_bounds = array<i64: 1, 33>}, {transform_indices = @transform_4, window_bounds = array<i64: 1, 256>}]} {
    %cst = arith.constant 1.000000e+00 : f32
    %0 = vector.broadcast %cst : f32 to vector<1x256xf32>
    %c32 = arith.constant 32 : index
    %c0 = arith.constant 0 : index
    %1 = vector.load %arg6[%c32, %c0] : memref<33x256xf32, #tpu.memory_space<vmem>>, vector<1x256xf32>
    tpu.vector_store %arg6[%c32, %c0], %0 {strides = array<i32>} : memref<33x256xf32, #tpu.memory_space<vmem>>, vector<1x256xf32>,
    %c0_0 = arith.constant 0 : index
    %c0_1 = arith.constant 0 : index
    %2 = vector.load %arg2[%c0_0, %c0_1] : memref<32x3xf32, #tpu.memory_space<vmem>>, vector<32x3xf32>
    %c0_2 = arith.constant 0 : index
    %c0_3 = arith.constant 0 : index
    %3 = vector.load %arg1[%c0_2, %c0_3] : memref<3x256xf32, #tpu.memory_space<vmem>>, vector<3x256xf32>
    %cst_4 = arith.constant dense<0.000000e+00> : vector<32x256xf32>
    %4 = tpu.matmul %2, %3, %cst_4 {dimension_numbers = #tpu.dot_dimension_numbers<[1], [0], [0], [1], [0, 0, 1, 1], [], []>, precision = #tpu.contract_precision<fp32>} : vector<32x3xf32>, vector<3x256xf32>, vector<32x256xf32> -> vector<32x256xf32>
    %cst_5 = arith.constant 0.318309873 : f32
    %5 = vector.broadcast %cst_5 : f32 to vector<32x256xf32>
    %6 = arith.mulf %4, %5 : vector<32x256xf32>
    %cst_6 = arith.constant 5.000000e-01 : f32
    %7 = vector.broadcast %cst_6 : f32 to vector<32x256xf32>
    %8 = arith.addf %6, %7 : vector<32x256xf32>
    %9 = math.floor %8 : vector<32x256xf32>
    %cst_7 = arith.constant 3.14147949 : f32
    %10 = vector.broadcast %cst_7 : f32 to vector<32x256xf32>
    %11 = arith.mulf %9, %10 : vector<32x256xf32>
    %12 = arith.subf %4, %11 : vector<32x256xf32>
    %cst_8 = arith.constant 1.13159418E-4 : f32
    %13 = vector.broadcast %cst_8 : f32 to vector<32x256xf32>
    %14 = arith.mulf %9, %13 : vector<32x256xf32>
    %15 = arith.subf %12, %14 : vector<32x256xf32>
    %cst_9 = arith.constant 1.98418726E-9 : f32
    %16 = vector.broadcast %cst_9 : f32 to vector<32x256xf32>
    %17 = arith.mulf %9, %16 : vector<32x256xf32>
    %18 = arith.subf %15, %17 : vector<32x256xf32>
    %19 = arith.mulf %18, %18 : vector<32x256xf32>
    %cst_10 = arith.constant 2.60831598E-6 : f32
    %20 = vector.broadcast %cst_10 : f32 to vector<32x256xf32>
    %21 = arith.mulf %20, %19 : vector<32x256xf32>
    %cst_11 = arith.constant -1.98106907E-4 : f32
    %22 = vector.broadcast %cst_11 : f32 to vector<32x256xf32>
    %23 = arith.addf %21, %22 : vector<32x256xf32>
    %24 = arith.mulf %23, %19 : vector<32x256xf32>
    %cst_12 = arith.constant 0.00833307859 : f32
    %25 = vector.broadcast %cst_12 : f32 to vector<32x256xf32>
    %26 = arith.addf %24, %25 : vector<32x256xf32>
    %27 = arith.mulf %26, %19 : vector<32x256xf32>
    %cst_13 = arith.constant -0.166666597 : f32
    %28 = vector.broadcast %cst_13 : f32 to vector<32x256xf32>
    %29 = arith.addf %27, %28 : vector<32x256xf32>
    %30 = arith.mulf %19, %18 : vector<32x256xf32>
    %31 = arith.mulf %30, %29 : vector<32x256xf32>
    %32 = arith.addf %31, %18 : vector<32x256xf32>
    %33 = arith.fptosi %9 : vector<32x256xf32> to vector<32x256xi32>
    %c1_i32 = arith.constant 1 : i32
    %34 = vector.broadcast %c1_i32 : i32 to vector<32x256xi32>
    %35 = arith.andi %33, %34 : vector<32x256xi32>
    %c1_i32_14 = arith.constant 1 : i32
    %36 = vector.broadcast %c1_i32_14 : i32 to vector<32x256xi32>
    %37 = arith.cmpi eq, %35, %36 : vector<32x256xi32>
    %cst_15 = arith.constant 0.000000e+00 : f32
    %38 = vector.broadcast %cst_15 : f32 to vector<32x256xf32>
    %39 = arith.subf %38, %32 : vector<32x256xf32>
    %40 = arith.select %37, %39, %32 : vector<32x256xi1>, vector<32x256xf32>
    %c0_16 = arith.constant 0 : index
    %c0_17 = arith.constant 0 : index
    %41 = vector.load %arg6[%c0_16, %c0_17] : memref<33x256xf32, #tpu.memory_space<vmem>>, vector<32x256xf32>
    tpu.vector_store %arg6[%c0_16, %c0_17], %40 {strides = array<i32>} : memref<33x256xf32, #tpu.memory_space<vmem>>, vector<32x256xf32>,
    %c0_18 = arith.constant 0 : index
    %c0_19 = arith.constant 0 : index
    %c0_20 = arith.constant 0 : index
    %42 = vector.load %arg3[%c0_18, %c0_19, %c0_20] : memref<2x32x33xf32, #tpu.memory_space<vmem>>, vector<1x32x33xf32>
    %43 = vector.shape_cast %42 : vector<1x32x33xf32> to vector<32x33xf32>
    %c0_21 = arith.constant 0 : index
    %c0_22 = arith.constant 0 : index
    %44 = vector.load %arg6[%c0_21, %c0_22] : memref<33x256xf32, #tpu.memory_space<vmem>>, vector<33x256xf32>
    %cst_23 = arith.constant dense<0.000000e+00> : vector<32x256xf32>
    %45 = tpu.matmul %43, %44, %cst_23 {dimension_numbers = #tpu.dot_dimension_numbers<[1], [0], [0], [1], [0, 0, 1, 1], [], []>, precision = #tpu.contract_precision<fp32>} : vector<32x33xf32>, vector<33x256xf32>, vector<32x256xf32> -> vector<32x256xf32>
    %cst_24 = arith.constant 0.318309873 : f32
    %46 = vector.broadcast %cst_24 : f32 to vector<32x256xf32>
    %47 = arith.mulf %45, %46 : vector<32x256xf32>
    %cst_25 = arith.constant 5.000000e-01 : f32
    %48 = vector.broadcast %cst_25 : f32 to vector<32x256xf32>
    %49 = arith.addf %47, %48 : vector<32x256xf32>
    %50 = math.floor %49 : vector<32x256xf32>
    %cst_26 = arith.constant 3.14147949 : f32
    %51 = vector.broadcast %cst_26 : f32 to vector<32x256xf32>
    %52 = arith.mulf %50, %51 : vector<32x256xf32>
    %53 = arith.subf %45, %52 : vector<32x256xf32>
    %cst_27 = arith.constant 1.13159418E-4 : f32
    %54 = vector.broadcast %cst_27 : f32 to vector<32x256xf32>
    %55 = arith.mulf %50, %54 : vector<32x256xf32>
    %56 = arith.subf %53, %55 : vector<32x256xf32>
    %cst_28 = arith.constant 1.98418726E-9 : f32
    %57 = vector.broadcast %cst_28 : f32 to vector<32x256xf32>
    %58 = arith.mulf %50, %57 : vector<32x256xf32>
    %59 = arith.subf %56, %58 : vector<32x256xf32>
    %60 = arith.mulf %59, %59 : vector<32x256xf32>
    %cst_29 = arith.constant 2.60831598E-6 : f32
    %61 = vector.broadcast %cst_29 : f32 to vector<32x256xf32>
    %62 = arith.mulf %61, %60 : vector<32x256xf32>
    %cst_30 = arith.constant -1.98106907E-4 : f32
    %63 = vector.broadcast %cst_30 : f32 to vector<32x256xf32>
    %64 = arith.addf %62, %63 : vector<32x256xf32>
    %65 = arith.mulf %64, %60 : vector<32x256xf32>
    %cst_31 = arith.constant 0.00833307859 : f32
    %66 = vector.broadcast %cst_31 : f32 to vector<32x256xf32>
    %67 = arith.addf %65, %66 : vector<32x256xf32>
    %68 = arith.mulf %67, %60 : vector<32x256xf32>
    %cst_32 = arith.constant -0.166666597 : f32
    %69 = vector.broadcast %cst_32 : f32 to vector<32x256xf32>
    %70 = arith.addf %68, %69 : vector<32x256xf32>
    %71 = arith.mulf %60, %59 : vector<32x256xf32>
    %72 = arith.mulf %71, %70 : vector<32x256xf32>
    %73 = arith.addf %72, %59 : vector<32x256xf32>
    %74 = arith.fptosi %50 : vector<32x256xf32> to vector<32x256xi32>
    %c1_i32_33 = arith.constant 1 : i32
    %75 = vector.broadcast %c1_i32_33 : i32 to vector<32x256xi32>
    %76 = arith.andi %74, %75 : vector<32x256xi32>
    %c1_i32_34 = arith.constant 1 : i32
    %77 = vector.broadcast %c1_i32_34 : i32 to vector<32x256xi32>
    %78 = arith.cmpi eq, %76, %77 : vector<32x256xi32>
    %cst_35 = arith.constant 0.000000e+00 : f32
    %79 = vector.broadcast %cst_35 : f32 to vector<32x256xf32>
    %80 = arith.subf %79, %73 : vector<32x256xf32>
    %81 = arith.select %78, %80, %73 : vector<32x256xi1>, vector<32x256xf32>
    %c0_36 = arith.constant 0 : index
    %c0_37 = arith.constant 0 : index
    %82 = vector.load %arg6[%c0_36, %c0_37] : memref<33x256xf32, #tpu.memory_space<vmem>>, vector<32x256xf32>
    tpu.vector_store %arg6[%c0_36, %c0_37], %81 {strides = array<i32>} : memref<33x256xf32, #tpu.memory_space<vmem>>, vector<32x256xf32>,
    %c1 = arith.constant 1 : index
    %c0_38 = arith.constant 0 : index
    %c0_39 = arith.constant 0 : index
    %83 = vector.load %arg3[%c1, %c0_38, %c0_39] : memref<2x32x33xf32, #tpu.memory_space<vmem>>, vector<1x32x33xf32>
    %84 = vector.shape_cast %83 : vector<1x32x33xf32> to vector<32x33xf32>
    %c0_40 = arith.constant 0 : index
    %c0_41 = arith.constant 0 : index
    %85 = vector.load %arg6[%c0_40, %c0_41] : memref<33x256xf32, #tpu.memory_space<vmem>>, vector<33x256xf32>
    %cst_42 = arith.constant dense<0.000000e+00> : vector<32x256xf32>
    %86 = tpu.matmul %84, %85, %cst_42 {dimension_numbers = #tpu.dot_dimension_numbers<[1], [0], [0], [1], [0, 0, 1, 1], [], []>, precision = #tpu.contract_precision<fp32>} : vector<32x33xf32>, vector<33x256xf32>, vector<32x256xf32> -> vector<32x256xf32>
    %cst_43 = arith.constant 0.318309873 : f32
    %87 = vector.broadcast %cst_43 : f32 to vector<32x256xf32>
    %88 = arith.mulf %86, %87 : vector<32x256xf32>
    %cst_44 = arith.constant 5.000000e-01 : f32
    %89 = vector.broadcast %cst_44 : f32 to vector<32x256xf32>
    %90 = arith.addf %88, %89 : vector<32x256xf32>
    %91 = math.floor %90 : vector<32x256xf32>
    %cst_45 = arith.constant 3.14147949 : f32
    %92 = vector.broadcast %cst_45 : f32 to vector<32x256xf32>
    %93 = arith.mulf %91, %92 : vector<32x256xf32>
    %94 = arith.subf %86, %93 : vector<32x256xf32>
    %cst_46 = arith.constant 1.13159418E-4 : f32
    %95 = vector.broadcast %cst_46 : f32 to vector<32x256xf32>
    %96 = arith.mulf %91, %95 : vector<32x256xf32>
    %97 = arith.subf %94, %96 : vector<32x256xf32>
    %cst_47 = arith.constant 1.98418726E-9 : f32
    %98 = vector.broadcast %cst_47 : f32 to vector<32x256xf32>
    %99 = arith.mulf %91, %98 : vector<32x256xf32>
    %100 = arith.subf %97, %99 : vector<32x256xf32>
    %101 = arith.mulf %100, %100 : vector<32x256xf32>
    %cst_48 = arith.constant 2.60831598E-6 : f32
    %102 = vector.broadcast %cst_48 : f32 to vector<32x256xf32>
    %103 = arith.mulf %102, %101 : vector<32x256xf32>
    %cst_49 = arith.constant -1.98106907E-4 : f32
    %104 = vector.broadcast %cst_49 : f32 to vector<32x256xf32>
    %105 = arith.addf %103, %104 : vector<32x256xf32>
    %106 = arith.mulf %105, %101 : vector<32x256xf32>
    %cst_50 = arith.constant 0.00833307859 : f32
    %107 = vector.broadcast %cst_50 : f32 to vector<32x256xf32>
    %108 = arith.addf %106, %107 : vector<32x256xf32>
    %109 = arith.mulf %108, %101 : vector<32x256xf32>
    %cst_51 = arith.constant -0.166666597 : f32
    %110 = vector.broadcast %cst_51 : f32 to vector<32x256xf32>
    %111 = arith.addf %109, %110 : vector<32x256xf32>
    %112 = arith.mulf %101, %100 : vector<32x256xf32>
    %113 = arith.mulf %112, %111 : vector<32x256xf32>
    %114 = arith.addf %113, %100 : vector<32x256xf32>
    %115 = arith.fptosi %91 : vector<32x256xf32> to vector<32x256xi32>
    %c1_i32_52 = arith.constant 1 : i32
    %116 = vector.broadcast %c1_i32_52 : i32 to vector<32x256xi32>
    %117 = arith.andi %115, %116 : vector<32x256xi32>
    %c1_i32_53 = arith.constant 1 : i32
    %118 = vector.broadcast %c1_i32_53 : i32 to vector<32x256xi32>
    %119 = arith.cmpi eq, %117, %118 : vector<32x256xi32>
    %cst_54 = arith.constant 0.000000e+00 : f32
    %120 = vector.broadcast %cst_54 : f32 to vector<32x256xf32>
    %121 = arith.subf %120, %114 : vector<32x256xf32>
    %122 = arith.select %119, %121, %114 : vector<32x256xi1>, vector<32x256xf32>
    %c0_55 = arith.constant 0 : index
    %c0_56 = arith.constant 0 : index
    %123 = vector.load %arg6[%c0_55, %c0_56] : memref<33x256xf32, #tpu.memory_space<vmem>>, vector<32x256xf32>
    tpu.vector_store %arg6[%c0_55, %c0_56], %122 {strides = array<i32>} : memref<33x256xf32, #tpu.memory_space<vmem>>, vector<32x256xf32>,
    %c0_57 = arith.constant 0 : index
    %c0_58 = arith.constant 0 : index
    %124 = vector.load %arg4[%c0_57, %c0_58] : memref<1x33xf32, #tpu.memory_space<vmem>>, vector<1x33xf32>
    %c0_59 = arith.constant 0 : index
    %c0_60 = arith.constant 0 : index
    %125 = vector.load %arg6[%c0_59, %c0_60] : memref<33x256xf32, #tpu.memory_space<vmem>>, vector<33x256xf32>
    %cst_61 = arith.constant dense<0.000000e+00> : vector<1x256xf32>
    %126 = tpu.matmul %124, %125, %cst_61 {dimension_numbers = #tpu.dot_dimension_numbers<[1], [0], [0], [1], [0, 0, 1, 1], [], []>, precision = #tpu.contract_precision<fp32>} : vector<1x33xf32>, vector<33x256xf32>, vector<1x256xf32> -> vector<1x256xf32>
    %c0_62 = arith.constant 0 : index
    %c0_63 = arith.constant 0 : index
    %127 = vector.load %arg5[%c0_62, %c0_63] : memref<1x256xf32, #tpu.memory_space<vmem>>, vector<1x256xf32>
    tpu.vector_store %arg5[%c0_62, %c0_63], %126 {strides = array<i32>} : memref<1x256xf32, #tpu.memory_space<vmem>>, vector<1x256xf32>,
    return
  }
  func.func @transform_0(%arg0: i32) -> (i32, i32) {
    %c0_i32 = arith.constant 0 : i32
    %c0_i32_0 = arith.constant 0 : i32
    return %c0_i32, %arg0 : i32, i32
  }
  func.func @transform_1(%arg0: i32) -> (i32, i32) {
    %c0_i32 = arith.constant 0 : i32
    %c0_i32_0 = arith.constant 0 : i32
    %c0_i32_1 = arith.constant 0 : i32
    return %c0_i32, %c0_i32_0 : i32, i32
  }
  func.func @transform_2(%arg0: i32) -> (i32, i32, i32) {
    %c0_i32 = arith.constant 0 : i32
    %c0_i32_0 = arith.constant 0 : i32
    %c0_i32_1 = arith.constant 0 : i32
    %c0_i32_2 = arith.constant 0 : i32
    return %c0_i32, %c0_i32_0, %c0_i32_1 : i32, i32, i32
  }
  func.func @transform_3(%arg0: i32) -> (i32, i32) {
    %c0_i32 = arith.constant 0 : i32
    %c0_i32_0 = arith.constant 0 : i32
    %c0_i32_1 = arith.constant 0 : i32
    return %c0_i32, %c0_i32_0 : i32, i32
  }
  func.func @transform_4(%arg0: i32) -> (i32, i32) {
    %c0_i32 = arith.constant 0 : i32
    %c0_i32_0 = arith.constant 0 : i32
    return %c0_i32, %arg0 : i32, i32
  }
}

</mosaic_0001>

<llo_original>
// kernel: tpu_custom_call.1
$region0: #{tpu_custom_call.1}
  #allocation0 [shape = 'u32[]', space=smem, size = 0x4, offset = 0x4, fixed_abs, tag = 'smem constant byte address 0x4 - core index']
  #allocation1 [shape = 'u32[144,128]{1,0:T(1,128)}', space=vmem, size = 0x12000, scoped, tag = 'internal scratch']
  #allocation2 [shape = 'f32[33,256]{1,0:T(8,128)}', space=vmem, size = 0xa000, scoped, tag = 'scratch operand']
  %s0 = inlined_call_operand.vmem [shape: f32[3,512], index: 0, kind: input, shape index: {}]
  %s1 = inlined_call_operand.vmem [shape: f32[32,3], index: 1, kind: input, shape index: {}]
  %s2 = inlined_call_operand.hbm [shape: f32[2,32,33], index: 2, kind: input, shape index: {}]
  %s3 = inlined_call_operand.vmem [shape: f32[1,33], index: 3, kind: input, shape index: {}]
  %s4 = inlined_call_operand.hbm [shape: f32[1,512], index: 4, kind: output, shape index: {}]
  %s5 = sld [smem:[#allocation0]]
  $region53: #{tpu_custom_call.1} parent=0
    _
  %s7 = ssub.s32 1, %s5
  %s8 = scalar_select 0, %s7, %s5
  $region1: #{tpu_custom_call.1} parent=0
    #allocation3 [shape = 'u8[32768]{0}', space=vmem, size = 0x8000, scoped, tag = 'input window, operand 2, single buffered']
    #allocation4 [shape = 's32[2]{0}', space=sflag, size = 0x8, scoped, tag = 'scoped memory for tpu_custom_call.1']
    #allocation5 [shape = 's32[2]{0}', space=sflag, size = 0x8, scoped, tag = 'scoped memory for tpu_custom_call.1']
    #allocation6 [shape = 'u8[2048]{0}', space=vmem, size = 0x800, scoped, tag = 'output window, operand 0']
    %9 = vsyncpa [#allocation4], 0
    %10 = vsyncpa [#allocation5], 0
    %s11 = scalar_lea.sflag [#allocation5], 1
    %12 = vsyncpa %s11, 0
    loop: start=0, step=1, limit=4
    $region2: #{tpu_custom_call.1} parent=1 // loop_pre_header
      _
    $region3: #{tpu_custom_call.1} parent=1 // loop_header
      %s14 = sphi 0, %s18
      %p15 = scmp.ge.s32.totalorder %s14, 4
      %s24 = sphi 0, %s26
      %s27 = sphi 0, %s24
      %s28 = sphi 0, %s27
      %s44 = sphi 0, %s28
      %s48 = sphi 0, %s48
      %s50 = sphi 0, %s48
      %s51 = sphi 0, %s50
      %s65 = sphi 0, %s51
      %s69 = sphi 0, %s69
      %s71 = sphi 0, %s69
      %s72 = sphi 0, %s71
      %s86 = sphi 0, %s72
      %s90 = sphi 0, %s90
      %s92 = sphi 0, %s90
      %s93 = sphi 0, %s92
      %s107 = sphi 0, %s93
      %s113 = sphi 0, %s115
      %s116 = sphi 0, %s113
      %s117 = sphi 0, %s116
      %s133 = sphi 0, %s117
    $region4: #{tpu_custom_call.1} parent=1 // loop_header_branch
      %17 = sbr.rel (%p15) target = $region8
    $region5: #{tpu_custom_call.1} parent=1 // loop_body
      %s19 = ssub.s32 %s14, 1
      %s20 = ssub.s32 %s14, 2
      %s21 = sadd.s32 %s14, 1
      %s22 = ssub.s32 %s14, %s21
      %p23 = scmp.eq.s32.totalorder %s22, 0
      %s25 = sadd.s32 %s24, 1
      %s26 = scalar_select %p23, %s24, %s25
      %p29 = pneg %p23
      %p30 = scmp.eq.s32.totalorder %s14, 1
      %p31 = por %p29, %p30
      %p32 = scmp.ne.s32.totalorder %s24, %s27
      %p33 = scmp.eq.s32.totalorder %s14, 0
      %p34 = por %p32, %p33
      %p35 = scmp.ne.s32.totalorder %s24, %s27
      %p36 = scmp.eq.s32.totalorder %s19, 1
      %p37 = por %p35, %p36
      %p38 = scmp.ne.s32.totalorder %s27, %s28
      %p39 = scmp.eq.s32.totalorder %s19, 0
      %p40 = por %p38, %p39
      %p41 = scmp.ne.s32.totalorder %s27, %s28
      %p42 = scmp.eq.s32.totalorder %s20, 1
      %p43 = por %p41, %p42
      %p45 = scmp.ne.s32.totalorder %s28, %s44
      %p46 = scmp.eq.s32.totalorder %s20, 0
      %p47 = por %p45, %p46
      %s49 = sadd.s32 %s48, 1
      %p52 = scmp.eq.s32.totalorder %s14, 1
      %p53 = scmp.ne.s32.totalorder %s48, %s50
      %p54 = scmp.eq.s32.totalorder %s14, 0
      %p55 = por %p53, %p54
      %p56 = scmp.ne.s32.totalorder %s48, %s50
      %p57 = scmp.eq.s32.totalorder %s19, 1
      %p58 = por %p56, %p57
      %p59 = scmp.ne.s32.totalorder %s50, %s51
      %p60 = scmp.eq.s32.totalorder %s19, 0
      %p61 = por %p59, %p60
      %p62 = scmp.ne.s32.totalorder %s50, %s51
      %p63 = scmp.eq.s32.totalorder %s20, 1
      %p64 = por %p62, %p63
      %p66 = scmp.ne.s32.totalorder %s51, %s65
      %p67 = scmp.eq.s32.totalorder %s20, 0
      %p68 = por %p66, %p67
      %s70 = sadd.s32 %s69, 1
      %p73 = scmp.eq.s32.totalorder %s14, 1
      %p74 = scmp.ne.s32.totalorder %s69, %s71
      %p75 = scmp.eq.s32.totalorder %s14, 0
      %p76 = por %p74, %p75
      %p77 = scmp.ne.s32.totalorder %s69, %s71
      %p78 = scmp.eq.s32.totalorder %s19, 1
      %p79 = por %p77, %p78
      %p80 = scmp.ne.s32.totalorder %s71, %s72
      %p81 = scmp.eq.s32.totalorder %s19, 0
      %p82 = por %p80, %p81
      %p83 = scmp.ne.s32.totalorder %s71, %s72
      %p84 = scmp.eq.s32.totalorder %s20, 1
      %p85 = por %p83, %p84
      %p87 = scmp.ne.s32.totalorder %s72, %s86
      %p88 = scmp.eq.s32.totalorder %s20, 0
      %p89 = por %p87, %p88
      %s91 = sadd.s32 %s90, 1
      %p94 = scmp.eq.s32.totalorder %s14, 1
      %p95 = scmp.ne.s32.totalorder %s90, %s92
      %p96 = scmp.eq.s32.totalorder %s14, 0
      %p97 = por %p95, %p96
      %p98 = scmp.ne.s32.totalorder %s90, %s92
      %p99 = scmp.eq.s32.totalorder %s19, 1
      %p100 = por %p98, %p99
      %p101 = scmp.ne.s32.totalorder %s92, %s93
      %p102 = scmp.eq.s32.totalorder %s19, 0
      %p103 = por %p101, %p102
      %p104 = scmp.ne.s32.totalorder %s92, %s93
      %p105 = scmp.eq.s32.totalorder %s20, 1
      %p106 = por %p104, %p105
      %p108 = scmp.ne.s32.totalorder %s93, %s107
      %p109 = scmp.eq.s32.totalorder %s20, 0
      %p110 = por %p108, %p109
      %s111 = ssub.s32 %s14, %s21
      %p112 = scmp.eq.s32.totalorder %s111, 0
      %s114 = sadd.s32 %s113, 1
      %s115 = scalar_select %p112, %s113, %s114
      %p118 = pneg %p112
      %p119 = scmp.eq.s32.totalorder %s14, 1
      %p120 = por %p118, %p119
      %p121 = scmp.ne.s32.totalorder %s113, %s116
      %p122 = scmp.eq.s32.totalorder %s14, 0
      %p123 = por %p121, %p122
      %p124 = scmp.ne.s32.totalorder %s113, %s116
      %p125 = scmp.eq.s32.totalorder %s19, 1
      %p126 = por %p124, %p125
      %p127 = scmp.ne.s32.totalorder %s116, %s117
      %p128 = scmp.eq.s32.totalorder %s19, 0
      %p129 = por %p127, %p128
      %p130 = scmp.ne.s32.totalorder %s116, %s117
      %p131 = scmp.eq.s32.totalorder %s20, 1
      %p132 = por %p130, %p131
      %p134 = scmp.ne.s32.totalorder %s117, %s133
      %p135 = scmp.eq.s32.totalorder %s20, 0
      %p136 = por %p134, %p135
      %p137 = scmp.le.s32.totalorder 1, %s14
      %p138 = scmp.lt.s32.totalorder %s14, 3
      %p139 = pnand %p137, %p138
      %p140 = pneg %p139
      // Predicated region
      $region9: #{tpu_custom_call.1} parent=5 // pred_check
        _
      $region10: #{tpu_custom_call.1} parent=5 // pred_check_branch
        %142 = sbr.rel (%p139) target = $region12
      $region11: #{tpu_custom_call.1} parent=5 // pred_region
        %s143 = ssub.s32 %s14, 1
        // Predicated region
        $region13: #{tpu_custom_call.1} parent=11 // pred_check
          %p144 = pneg %p61
        $region14: #{tpu_custom_call.1} parent=11 // pred_check_branch
          %146 = sbr.rel (%p144) target = $region16
        $region15: #{tpu_custom_call.1} parent=11 // pred_region
          _
        $region16: #{tpu_custom_call.1} parent=11 // pred_fallthru
          _
        // Predicated region
        $region17: #{tpu_custom_call.1} parent=11 // pred_check
          %p147 = pneg %p82
        $region18: #{tpu_custom_call.1} parent=11 // pred_check_branch
          %149 = sbr.rel (%p147) target = $region20
        $region19: #{tpu_custom_call.1} parent=11 // pred_region
          %s151 = ssub.s32 1024, 1024
          %152 = vsyncadd [#allocation4], %s151
          %s153 = sshll.u32 [#allocation3], 4
          %s154 = int_to_ptr.vmem [resolvable:$true] %s153
          %159 = dma.hbm_to_vmem [thread:$0]  %s2, 1024, %s154, [#allocation4], 128, 128, 8
        $region20: #{tpu_custom_call.1} parent=11 // pred_fallthru
          _
        // Predicated region
        $region21: #{tpu_custom_call.1} parent=11 // pred_check
          %p160 = pneg %p103
        $region22: #{tpu_custom_call.1} parent=11 // pred_check_branch
          %162 = sbr.rel (%p160) target = $region24
        $region23: #{tpu_custom_call.1} parent=11 // pred_region
          _
        $region24: #{tpu_custom_call.1} parent=11 // pred_fallthru
          _
      $region12: #{tpu_custom_call.1} parent=5 // pred_fallthru
        _
      %p163 = scmp.lt.s32.totalorder %s14, 2
      // Predicated region
      $region25: #{tpu_custom_call.1} parent=5 // pred_check
        %p164 = pneg %p163
      $region26: #{tpu_custom_call.1} parent=5 // pred_check_branch
        %166 = sbr.rel (%p164) target = $region28
      $region27: #{tpu_custom_call.1} parent=5 // pred_region
        // Predicated region
        $region29: #{tpu_custom_call.1} parent=27 // pred_check
          %p167 = pneg %p34
        $region30: #{tpu_custom_call.1} parent=27 // pred_check_branch
          %169 = sbr.rel (%p167) target = $region32
        $region31: #{tpu_custom_call.1} parent=27 // pred_region
          %s170 = smul.u32 2, %s14
          %p171 = scmp.lt.s32.totalorder %s170, 3
          %s172 = scalar_select %p171, %s170, 3
          %s173 = smul.addr %s172, 4
          %s174 = scalar_lea.vmem %s0, %s173
          %s175 = smul.u32 2, %s14
        $region32: #{tpu_custom_call.1} parent=27 // pred_fallthru
          _
      $region28: #{tpu_custom_call.1} parent=5 // pred_fallthru
        _
      %p176 = scmp.le.s32.totalorder 1, %s14
      %p177 = scmp.lt.s32.totalorder %s14, 3
      %p178 = pnand %p176, %p177
      %p179 = pneg %p178
      // Predicated region
      $region33: #{tpu_custom_call.1} parent=5 // pred_check
        _
      $region34: #{tpu_custom_call.1} parent=5 // pred_check_branch
        %181 = sbr.rel (%p178) target = $region36
      $region35: #{tpu_custom_call.1} parent=5 // pred_region
        %s182 = ssub.s32 %s14, 1
        // Predicated region
        $region37: #{tpu_custom_call.1} parent=35 // pred_check
          %p183 = pneg %p82
        $region38: #{tpu_custom_call.1} parent=35 // pred_check_branch
          %185 = sbr.rel (%p183) target = $region40
        $region39: #{tpu_custom_call.1} parent=35 // pred_region
          %186 = dma.done [#allocation4], 1024
        $region40: #{tpu_custom_call.1} parent=35 // pred_fallthru
          _
        %s187 = smul.u32 2, %s19
        %p188 = scmp.lt.s32.totalorder %s187, 3
        %s189 = scalar_select %p188, %s187, 3
        %s190 = smul.addr %s189, 4
        %s191 = scalar_lea.vmem %s0, %s190
        %p192 = pneg %p40
        %p193 = pneg %p37
        %p194 = pneg %p61
        %p195 = pneg %p58
        %p196 = pneg %p82
        %p197 = pneg %p79
        %p198 = pneg %p103
        %p199 = pneg %p100
        %p200 = pneg %p129
        %p201 = pneg %p126
        %s202 = sand.u32 %s116, 1
        %s203 = scalar_lea.sflag [#allocation5], %s202
        %s204 = sand.u32 %s116, 1
        %s205 = smul.addr %s204, 2
        %s206 = scalar_lea.vmem [#allocation6], %s205
        %s207 = smul.u32 2, %s19
        %p208 = scmp.lt.s32.totalorder %s207, 3
        %s209 = scalar_select %p208, %s207, 3
        %s210 = smul.addr %s209, 4
        %s211 = scalar_lea.vmem %s0, %s210
        %s212 = smul.u32 2, %s19
        %s213 = smul.u32 2, %s19
        %v214 = vlaneseq
        %vm215 = vcmp.ge.s32.totalorder %v214, 0
        %vm216 = vcmp.lt.s32.totalorder %v214, 256
        %vm217 = vmand %vm215, %vm216
        %s218 = scalar_lea.vmem [#allocation2], 64
        %219 = vst.msk [vmem:[%s218] ss:$8 sm:$0x3] %vm217, 1.0
        %220 = vst.msk [vmem:[%s218] ss:$8 sm:$0x0] %vm217, 1.0
        %v221 = vld [vmem:[%s1] sm:$0xff]
        %v222 = vld [vmem:[%s1 + $0x8] sm:$0xff]
        %v223 = vld [vmem:[%s1 + $0x10] sm:$0xff]
        %v224 = vld [vmem:[%s1 + $0x18] sm:$0xff]
        %v225 = vld [vmem:[%s211] sm:$0x77]
        %v227 = vcombine.high %v225, %v225
        %vm228 = vcmask 23552
        %v230 = vsel %vm228, %v221, 0
        %v233 = vsel %vm228, %v222, 0
        %v236 = vsel %vm228, %v223, 0
        %v239 = vsel %vm228, %v224, 0
        %vm241 = vcmask 1042432
        %v242 = vsel %vm241, %v225, 0
        %v244 = vsel %vm241, %v227, 0
        %v246 = vand.u32 %v244, 4294901760
        %247 = vmatprep.subr.mxu0 %v246
        %v248 = vand.u32 %v242, 4294901760
        %249 = vmatpush1.msra.mxu0 %v248
        %250 = vmatprep.subr.mxu0 0.0
        %251 = vmatpush1.msra.mxu0 0.0
        %252 = vmatprep.subr.mxu0 0.0
        %253 = vmatpush1.msra.mxu0 0.0
        %254 = vmatprep.subr.mxu0 0.0
        %255 = vmatpush1.msra.mxu0 0.0
        %256 = vmatprep.subr.mxu0 0.0
        %257 = vmatpush1.msra.mxu0 0.0
        %258 = vmatprep.subr.mxu0 0.0
        %259 = vmatpush1.msra.mxu0 0.0
        %260 = vmatprep.subr.mxu0 0.0
        %261 = vmatpush1.msra.mxu0 0.0
        %262 = vmatprep.subr.mxu0 0.0
        %263 = vmatpush1.msra.mxu0 0.0
        %264 = vmatprep.subr.mxu0 0.0
        %265 = vmatpush1.msra.mxu0 0.0
        %266 = vmatprep.subr.mxu0 0.0
        %267 = vmatpush1.msra.mxu0 0.0
        %268 = vmatprep.subr.mxu0 0.0
        %269 = vmatpush1.msra.mxu0 0.0
        %270 = vmatprep.subr.mxu0 0.0
        %271 = vmatpush1.msra.mxu0 0.0
        %272 = vmatprep.subr.mxu0 0.0
        %273 = vmatpush1.msra.mxu0 0.0
        %274 = vmatprep.subr.mxu0 0.0
        %275 = vmatpush1.msra.mxu0 0.0
        %276 = vmatprep.subr.mxu0 0.0
        %277 = vmatpush1.msra.mxu0 0.0
        %278 = vmatprep.subr.mxu0 0.0
        %279 = vmatpush1.msra.mxu0 0.0
        %280 = vmatprep.subr.mxu0 0.0
        %281 = vmatpush1.msra.mxu0 0.0
        %282 = vmatprep.subr.mxu0 0.0
        %283 = vmatpush1.msra.mxu0 0.0
        %284 = vmatprep.subr.mxu0 0.0
        %285 = vmatpush1.msra.mxu0 0.0
        %286 = vmatprep.subr.mxu0 0.0
        %287 = vmatpush1.msra.mxu0 0.0
        %288 = vmatprep.subr.mxu0 0.0
        %289 = vmatpush1.msra.mxu0 0.0
        %290 = vmatprep.subr.mxu0 0.0
        %291 = vmatpush1.msra.mxu0 0.0
        %292 = vmatprep.subr.mxu0 0.0
        %293 = vmatpush1.msra.mxu0 0.0
        %294 = vmatprep.subr.mxu0 0.0
        %295 = vmatpush1.msra.mxu0 0.0
        %296 = vmatprep.subr.mxu0 0.0
        %297 = vmatpush1.msra.mxu0 0.0
        %298 = vmatprep.subr.mxu0 0.0
        %299 = vmatpush1.msra.mxu0 0.0
        %300 = vmatprep.subr.mxu0 0.0
        %301 = vmatpush1.msra.mxu0 0.0
        %302 = vmatprep.subr.mxu0 0.0
        %303 = vmatpush1.msra.mxu0 0.0
        %304 = vmatprep.subr.mxu0 0.0
        %305 = vmatpush1.msra.mxu0 0.0
        %306 = vmatprep.subr.mxu0 0.0
        %307 = vmatpush1.msra.mxu0 0.0
        %308 = vmatprep.subr.mxu0 0.0
        %309 = vmatpush1.msra.mxu0 0.0
        %310 = vmatprep.subr.mxu0 0.0
        %311 = vmatpush1.msra.mxu0 0.0
        %312 = vmatprep.mubr.f32.mxu0 0.0
        %v313 = vand.u32 %v230, 4294901760
        %v314 = vsub.f32 %v230, %v313
        %v315 = vand.u32 %v314, 4294901760
        %v316 = vsub.f32 %v314, %v315
        %v317 = vand.u32 %v316, 4294901760
        %318 = vmatmul.mubr.f32.gmra.mrb[0].mxu0 %v317
        %v319 = vpop.f32.mrb[0].mxu0
        %v320 = vadd.f32 0.0, %v319
        %v321 = vpop.f32.mrb[0].mxu0
        %v322 = vadd.f32 0.0, %v321
        %323 = vmatprep.mubr.f32.mxu0 0.0
        %v324 = vand.u32 %v233, 4294901760
        %v325 = vsub.f32 %v233, %v324
        %v326 = vand.u32 %v325, 4294901760
        %v327 = vsub.f32 %v325, %v326
        %v328 = vand.u32 %v327, 4294901760
        %329 = vmatmul.mubr.f32.gmra.mrb[0].mxu0 %v328
        %v330 = vpop.f32.mrb[0].mxu0
        %v331 = vadd.f32 0.0, %v330
        %v332 = vpop.f32.mrb[0].mxu0
        %v333 = vadd.f32 0.0, %v332
        %334 = vmatprep.mubr.f32.mxu0 0.0
        %v335 = vand.u32 %v236, 4294901760
        %v336 = vsub.f32 %v236, %v335
        %v337 = vand.u32 %v336, 4294901760
        %v338 = vsub.f32 %v336, %v337
        %v339 = vand.u32 %v338, 4294901760
        %340 = vmatmul.mubr.f32.gmra.mrb[0].mxu0 %v339
        %v341 = vpop.f32.mrb[0].mxu0
        %v342 = vadd.f32 0.0, %v341
        %v343 = vpop.f32.mrb[0].mxu0
        %v344 = vadd.f32 0.0, %v343
        %345 = vmatprep.mubr.f32.mxu0 0.0
        %v346 = vand.u32 %v239, 4294901760
        %v347 = vsub.f32 %v239, %v346
        %v348 = vand.u32 %v347, 4294901760
        %v349 = vsub.f32 %v347, %v348
        %v350 = vand.u32 %v349, 4294901760
        %351 = vmatmul.mubr.f32.gmra.mrb[0].mxu0 %v350
        %v352 = vpop.f32.mrb[0].mxu0
        %v353 = vadd.f32 0.0, %v352
        %v354 = vpop.f32.mrb[0].mxu0
        %v355 = vadd.f32 0.0, %v354
        %356 = vdwg.mxu0
        %v357 = vand.u32 %v244, 4294901760
        %v358 = vsub.f32 %v244, %v357
        %v359 = vand.u32 %v358, 4294901760
        %v360 = vsub.f32 %v358, %v359
        %v361 = vand.u32 %v360, 4294901760
        %362 = vmatprep.subr.mxu0 %v361
        %v363 = vand.u32 %v242, 4294901760
        %v364 = vsub.f32 %v242, %v363
        %v365 = vand.u32 %v364, 4294901760
        %v366 = vsub.f32 %v364, %v365
        %v367 = vand.u32 %v366, 4294901760
        %368 = vmatpush1.msra.mxu0 %v367
        %369 = vmatprep.subr.mxu0 0.0
        %370 = vmatpush1.msra.mxu0 0.0
        %371 = vmatprep.subr.mxu0 0.0
        %372 = vmatpush1.msra.mxu0 0.0
        %373 = vmatprep.subr.mxu0 0.0
        %374 = vmatpush1.msra.mxu0 0.0
        %375 = vmatprep.subr.mxu0 0.0
        %376 = vmatpush1.msra.mxu0 0.0
        %377 = vmatprep.subr.mxu0 0.0
        %378 = vmatpush1.msra.mxu0 0.0
        %379 = vmatprep.subr.mxu0 0.0
        %380 = vmatpush1.msra.mxu0 0.0
        %381 = vmatprep.subr.mxu0 0.0
        %382 = vmatpush1.msra.mxu0 0.0
        %383 = vmatprep.subr.mxu0 0.0
        %384 = vmatpush1.msra.mxu0 0.0
        %385 = vmatprep.subr.mxu0 0.0
        %386 = vmatpush1.msra.mxu0 0.0
        %387 = vmatprep.subr.mxu0 0.0
        %388 = vmatpush1.msra.mxu0 0.0
        %389 = vmatprep.subr.mxu0 0.0
        %390 = vmatpush1.msra.mxu0 0.0
        %391 = vmatprep.subr.mxu0 0.0
        %392 = vmatpush1.msra.mxu0 0.0
        %393 = vmatprep.subr.mxu0 0.0
        %394 = vmatpush1.msra.mxu0 0.0
        %395 = vmatprep.subr.mxu0 0.0
        %396 = vmatpush1.msra.mxu0 0.0
        %397 = vmatprep.subr.mxu0 0.0
        %398 = vmatpush1.msra.mxu0 0.0
        %399 = vmatprep.subr.mxu0 0.0
        %400 = vmatpush1.msra.mxu0 0.0
        %401 = vmatprep.subr.mxu0 0.0
        %402 = vmatpush1.msra.mxu0 0.0
        %403 = vmatprep.subr.mxu0 0.0
        %404 = vmatpush1.msra.mxu0 0.0
        %405 = vmatprep.subr.mxu0 0.0
        %406 = vmatpush1.msra.mxu0 0.0
        %407 = vmatprep.subr.mxu0 0.0
        %408 = vmatpush1.msra.mxu0 0.0
        %409 = vmatprep.subr.mxu0 0.0
        %410 = vmatpush1.msra.mxu0 0.0
        %411 = vmatprep.subr.mxu0 0.0
        %412 = vmatpush1.msra.mxu0 0.0
        %413 = vmatprep.subr.mxu0 0.0
        %414 = vmatpush1.msra.mxu0 0.0
        %415 = vmatprep.subr.mxu0 0.0
        %416 = vmatpush1.msra.mxu0 0.0
        %417 = vmatprep.subr.mxu0 0.0
        %418 = vmatpush1.msra.mxu0 0.0
        %419 = vmatprep.subr.mxu0 0.0
        %420 = vmatpush1.msra.mxu0 0.0
        %421 = vmatprep.subr.mxu0 0.0
        %422 = vmatpush1.msra.mxu0 0.0
        %423 = vmatprep.subr.mxu0 0.0
        %424 = vmatpush1.msra.mxu0 0.0
        %425 = vmatprep.subr.mxu0 0.0
        %426 = vmatpush1.msra.mxu0 0.0
        %427 = vmatprep.subr.mxu0 0.0
        %428 = vmatpush1.msra.mxu0 0.0
        %429 = vmatprep.subr.mxu0 0.0
        %430 = vmatpush1.msra.mxu0 0.0
        %431 = vmatprep.mubr.f32.mxu0 0.0
        %v432 = vand.u32 %v230, 4294901760
        %433 = vmatmul.mubr.f32.gmra.mrb[0].mxu0 %v432
        %v434 = vpop.f32.mrb[0].mxu0
        %v435 = vadd.f32 %v320, %v434
        %v436 = vpop.f32.mrb[0].mxu0
        %v437 = vadd.f32 %v322, %v436
        %438 = vmatprep.mubr.f32.mxu0 0.0
        %v439 = vand.u32 %v233, 4294901760
        %440 = vmatmul.mubr.f32.gmra.mrb[0].mxu0 %v439
        %v441 = vpop.f32.mrb[0].mxu0
        %v442 = vadd.f32 %v331, %v441
        %v443 = vpop.f32.mrb[0].mxu0
        %v444 = vadd.f32 %v333, %v443
        %445 = vmatprep.mubr.f32.mxu0 0.0
        %v446 = vand.u32 %v236, 4294901760
        %447 = vmatmul.mubr.f32.gmra.mrb[0].mxu0 %v446
        %v448 = vpop.f32.mrb[0].mxu0
        %v449 = vadd.f32 %v342, %v448
        %v450 = vpop.f32.mrb[0].mxu0
        %v451 = vadd.f32 %v344, %v450
        %452 = vmatprep.mubr.f32.mxu0 0.0
        %v453 = vand.u32 %v239, 4294901760
        %454 = vmatmul.mubr.f32.gmra.mrb[0].mxu0 %v453
        %v455 = vpop.f32.mrb[0].mxu0
        %v456 = vadd.f32 %v353, %v455
        %v457 = vpop.f32.mrb[0].mxu0
        %v458 = vadd.f32 %v355, %v457
        %459 = vdwg.mxu0
        %v460 = vand.u32 %v244, 4294901760
        %v461 = vsub.f32 %v244, %v460
        %462 = vmatprep.subr.mxu0 %v461
        %v463 = vand.u32 %v242, 4294901760
        %v464 = vsub.f32 %v242, %v463
        %465 = vmatpush1.msra.mxu0 %v464
        %466 = vmatprep.subr.mxu0 0.0
        %467 = vmatpush1.msra.mxu0 0.0
        %468 = vmatprep.subr.mxu0 0.0
        %469 = vmatpush1.msra.mxu0 0.0
        %470 = vmatprep.subr.mxu0 0.0
        %471 = vmatpush1.msra.mxu0 0.0
        %472 = vmatprep.subr.mxu0 0.0
        %473 = vmatpush1.msra.mxu0 0.0
        %474 = vmatprep.subr.mxu0 0.0
        %475 = vmatpush1.msra.mxu0 0.0
        %476 = vmatprep.subr.mxu0 0.0
        %477 = vmatpush1.msra.mxu0 0.0
        %478 = vmatprep.subr.mxu0 0.0
        %479 = vmatpush1.msra.mxu0 0.0
        %480 = vmatprep.subr.mxu0 0.0
        %481 = vmatpush1.msra.mxu0 0.0
        %482 = vmatprep.subr.mxu0 0.0
        %483 = vmatpush1.msra.mxu0 0.0
        %484 = vmatprep.subr.mxu0 0.0
        %485 = vmatpush1.msra.mxu0 0.0
        %486 = vmatprep.subr.mxu0 0.0
        %487 = vmatpush1.msra.mxu0 0.0
        %488 = vmatprep.subr.mxu0 0.0
        %489 = vmatpush1.msra.mxu0 0.0
        %490 = vmatprep.subr.mxu0 0.0
        %491 = vmatpush1.msra.mxu0 0.0
        %492 = vmatprep.subr.mxu0 0.0
        %493 = vmatpush1.msra.mxu0 0.0
        %494 = vmatprep.subr.mxu0 0.0
        %495 = vmatpush1.msra.mxu0 0.0
        %496 = vmatprep.subr.mxu0 0.0
        %497 = vmatpush1.msra.mxu0 0.0
        %498 = vmatprep.subr.mxu0 0.0
        %499 = vmatpush1.msra.mxu0 0.0
        %500 = vmatprep.subr.mxu0 0.0
        %501 = vmatpush1.msra.mxu0 0.0
        %502 = vmatprep.subr.mxu0 0.0
        %503 = vmatpush1.msra.mxu0 0.0
        %504 = vmatprep.subr.mxu0 0.0
        %505 = vmatpush1.msra.mxu0 0.0
        %506 = vmatprep.subr.mxu0 0.0
        %507 = vmatpush1.msra.mxu0 0.0
        %508 = vmatprep.subr.mxu0 0.0
        %509 = vmatpush1.msra.mxu0 0.0
        %510 = vmatprep.subr.mxu0 0.0
        %511 = vmatpush1.msra.mxu0 0.0
        %512 = vmatprep.subr.mxu0 0.0
        %513 = vmatpush1.msra.mxu0 0.0
        %514 = vmatprep.subr.mxu0 0.0
        %515 = vmatpush1.msra.mxu0 0.0
        %516 = vmatprep.subr.mxu0 0.0
        %517 = vmatpush1.msra.mxu0 0.0
        %518 = vmatprep.subr.mxu0 0.0
        %519 = vmatpush1.msra.mxu0 0.0
        %520 = vmatprep.subr.mxu0 0.0
        %521 = vmatpush1.msra.mxu0 0.0
        %522 = vmatprep.subr.mxu0 0.0
        %523 = vmatpush1.msra.mxu0 0.0
        %524 = vmatprep.subr.mxu0 0.0
        %525 = vmatpush1.msra.mxu0 0.0
        %526 = vmatprep.subr.mxu0 0.0
        %527 = vmatpush1.msra.mxu0 0.0
        %528 = vmatprep.mubr.f32.mxu0 0.0
        %v529 = vand.u32 %v230, 4294901760
        %v530 = vsub.f32 %v230, %v529
        %531 = vmatmul.mubr.f32.gmra.mrb[0].mxu0 %v530
        %v532 = vpop.f32.mrb[0].mxu0
        %v533 = vadd.f32 %v435, %v532
        %v534 = vpop.f32.mrb[0].mxu0
        %v535 = vadd.f32 %v437, %v534
        %536 = vmatprep.mubr.f32.mxu0 0.0
        %v537 = vand.u32 %v233, 4294901760
        %v538 = vsub.f32 %v233, %v537
        %539 = vmatmul.mubr.f32.gmra.mrb[0].mxu0 %v538
        %v540 = vpop.f32.mrb[0].mxu0
        %v541 = vadd.f32 %v442, %v540
        %v542 = vpop.f32.mrb[0].mxu0
        %v543 = vadd.f32 %v444, %v542
        %544 = vmatprep.mubr.f32.mxu0 0.0
        %v545 = vand.u32 %v236, 4294901760
        %v546 = vsub.f32 %v236, %v545
        %547 = vmatmul.mubr.f32.gmra.mrb[0].mxu0 %v546
        %v548 = vpop.f32.mrb[0].mxu0
        %v549 = vadd.f32 %v449, %v548
        %v550 = vpop.f32.mrb[0].mxu0
        %v551 = vadd.f32 %v451, %v550
        %552 = vmatprep.mubr.f32.mxu0 0.0
        %v553 = vand.u32 %v239, 4294901760
        %v554 = vsub.f32 %v239, %v553
        %555 = vmatmul.mubr.f32.gmra.mrb[0].mxu0 %v554
        %v556 = vpop.f32.mrb[0].mxu0
        %v557 = vadd.f32 %v456, %v556
        %v558 = vpop.f32.mrb[0].mxu0
        %v559 = vadd.f32 %v458, %v558
        %560 = vdwg.mxu0
        %v561 = vand.u32 %v244, 4294901760
        %562 = vmatprep.subr.mxu0 %v561
        %v563 = vand.u32 %v242, 4294901760
        %564 = vmatpush1.msra.mxu0 %v563
        %565 = vmatprep.subr.mxu0 0.0
        %566 = vmatpush1.msra.mxu0 0.0
        %567 = vmatprep.subr.mxu0 0.0
        %568 = vmatpush1.msra.mxu0 0.0
        %569 = vmatprep.subr.mxu0 0.0
        %570 = vmatpush1.msra.mxu0 0.0
        %571 = vmatprep.subr.mxu0 0.0
        %572 = vmatpush1.msra.mxu0 0.0
        %573 = vmatprep.subr.mxu0 0.0
        %574 = vmatpush1.msra.mxu0 0.0
        %575 = vmatprep.subr.mxu0 0.0
        %576 = vmatpush1.msra.mxu0 0.0
        %577 = vmatprep.subr.mxu0 0.0
        %578 = vmatpush1.msra.mxu0 0.0
        %579 = vmatprep.subr.mxu0 0.0
        %580 = vmatpush1.msra.mxu0 0.0
        %581 = vmatprep.subr.mxu0 0.0
        %582 = vmatpush1.msra.mxu0 0.0
        %583 = vmatprep.subr.mxu0 0.0
        %584 = vmatpush1.msra.mxu0 0.0
        %585 = vmatprep.subr.mxu0 0.0
        %586 = vmatpush1.msra.mxu0 0.0
        %587 = vmatprep.subr.mxu0 0.0
        %588 = vmatpush1.msra.mxu0 0.0
        %589 = vmatprep.subr.mxu0 0.0
        %590 = vmatpush1.msra.mxu0 0.0
        %591 = vmatprep.subr.mxu0 0.0
        %592 = vmatpush1.msra.mxu0 0.0
        %593 = vmatprep.subr.mxu0 0.0
        %594 = vmatpush1.msra.mxu0 0.0
        %595 = vmatprep.subr.mxu0 0.0
        %596 = vmatpush1.msra.mxu0 0.0
        %597 = vmatprep.subr.mxu0 0.0
        %598 = vmatpush1.msra.mxu0 0.0
        %599 = vmatprep.subr.mxu0 0.0
        %600 = vmatpush1.msra.mxu0 0.0
        %601 = vmatprep.subr.mxu0 0.0
        %602 = vmatpush1.msra.mxu0 0.0
        %603 = vmatprep.subr.mxu0 0.0
        %604 = vmatpush1.msra.mxu0 0.0
        %605 = vmatprep.subr.mxu0 0.0
        %606 = vmatpush1.msra.mxu0 0.0
        %607 = vmatprep.subr.mxu0 0.0
        %608 = vmatpush1.msra.mxu0 0.0
        %609 = vmatprep.subr.mxu0 0.0
        %610 = vmatpush1.msra.mxu0 0.0
        %611 = vmatprep.subr.mxu0 0.0
        %612 = vmatpush1.msra.mxu0 0.0
        %613 = vmatprep.subr.mxu0 0.0
        %614 = vmatpush1.msra.mxu0 0.0
        %615 = vmatprep.subr.mxu0 0.0
        %616 = vmatpush1.msra.mxu0 0.0
        %617 = vmatprep.subr.mxu0 0.0
        %618 = vmatpush1.msra.mxu0 0.0
        %619 = vmatprep.subr.mxu0 0.0
        %620 = vmatpush1.msra.mxu0 0.0
        %621 = vmatprep.subr.mxu0 0.0
        %622 = vmatpush1.msra.mxu0 0.0
        %623 = vmatprep.subr.mxu0 0.0
        %624 = vmatpush1.msra.mxu0 0.0
        %625 = vmatprep.subr.mxu0 0.0
        %626 = vmatpush1.msra.mxu0 0.0
        %627 = vmatprep.mubr.f32.mxu0 0.0
        %v628 = vand.u32 %v230, 4294901760
        %v629 = vsub.f32 %v230, %v628
        %v630 = vand.u32 %v629, 4294901760
        %631 = vmatmul.mubr.f32.gmra.mrb[0].mxu0 %v630
        %v632 = vpop.f32.mrb[0].mxu0
        %v633 = vadd.f32 %v533, %v632
        %v634 = vpop.f32.mrb[0].mxu0
        %v635 = vadd.f32 %v535, %v634
        %636 = vmatprep.mubr.f32.mxu0 0.0
        %v637 = vand.u32 %v233, 4294901760
        %v638 = vsub.f32 %v233, %v637
        %v639 = vand.u32 %v638, 4294901760
        %640 = vmatmul.mubr.f32.gmra.mrb[0].mxu0 %v639
        %v641 = vpop.f32.mrb[0].mxu0
        %v642 = vadd.f32 %v541, %v641
        %v643 = vpop.f32.mrb[0].mxu0
        %v644 = vadd.f32 %v543, %v643
        %645 = vmatprep.mubr.f32.mxu0 0.0
        %v646 = vand.u32 %v236, 4294901760
        %v647 = vsub.f32 %v236, %v646
        %v648 = vand.u32 %v647, 4294901760
        %649 = vmatmul.mubr.f32.gmra.mrb[0].mxu0 %v648
        %v650 = vpop.f32.mrb[0].mxu0
        %v651 = vadd.f32 %v549, %v650
        %v652 = vpop.f32.mrb[0].mxu0
        %v653 = vadd.f32 %v551, %v652
        %654 = vmatprep.mubr.f32.mxu0 0.0
        %v655 = vand.u32 %v239, 4294901760
        %v656 = vsub.f32 %v239, %v655
        %v657 = vand.u32 %v656, 4294901760
        %658 = vmatmul.mubr.f32.gmra.mrb[0].mxu0 %v657
        %v659 = vpop.f32.mrb[0].mxu0
        %v660 = vadd.f32 %v557, %v659
        %v661 = vpop.f32.mrb[0].mxu0
        %v662 = vadd.f32 %v559, %v661
        %663 = vdwg.mxu0
        %v664 = vand.u32 %v244, 4294901760
        %v665 = vsub.f32 %v244, %v664
        %v666 = vand.u32 %v665, 4294901760
        %667 = vmatprep.subr.mxu0 %v666
        %v668 = vand.u32 %v242, 4294901760
        %v669 = vsub.f32 %v242, %v668
        %v670 = vand.u32 %v669, 4294901760
        %671 = vmatpush1.msra.mxu0 %v670
        %672 = vmatprep.subr.mxu0 0.0
        %673 = vmatpush1.msra.mxu0 0.0
        %674 = vmatprep.subr.mxu0 0.0
        %675 = vmatpush1.msra.mxu0 0.0
        %676 = vmatprep.subr.mxu0 0.0
        %677 = vmatpush1.msra.mxu0 0.0
        %678 = vmatprep.subr.mxu0 0.0
        %679 = vmatpush1.msra.mxu0 0.0
        %680 = vmatprep.subr.mxu0 0.0
        %681 = vmatpush1.msra.mxu0 0.0
        %682 = vmatprep.subr.mxu0 0.0
        %683 = vmatpush1.msra.mxu0 0.0
        %684 = vmatprep.subr.mxu0 0.0
        %685 = vmatpush1.msra.mxu0 0.0
        %686 = vmatprep.subr.mxu0 0.0
        %687 = vmatpush1.msra.mxu0 0.0
        %688 = vmatprep.subr.mxu0 0.0
        %689 = vmatpush1.msra.mxu0 0.0
        %690 = vmatprep.subr.mxu0 0.0
        %691 = vmatpush1.msra.mxu0 0.0
        %692 = vmatprep.subr.mxu0 0.0
        %693 = vmatpush1.msra.mxu0 0.0
        %694 = vmatprep.subr.mxu0 0.0
        %695 = vmatpush1.msra.mxu0 0.0
        %696 = vmatprep.subr.mxu0 0.0
        %697 = vmatpush1.msra.mxu0 0.0
        %698 = vmatprep.subr.mxu0 0.0
        %699 = vmatpush1.msra.mxu0 0.0
        %700 = vmatprep.subr.mxu0 0.0
        %701 = vmatpush1.msra.mxu0 0.0
        %702 = vmatprep.subr.mxu0 0.0
        %703 = vmatpush1.msra.mxu0 0.0
        %704 = vmatprep.subr.mxu0 0.0
        %705 = vmatpush1.msra.mxu0 0.0
        %706 = vmatprep.subr.mxu0 0.0
        %707 = vmatpush1.msra.mxu0 0.0
        %708 = vmatprep.subr.mxu0 0.0
        %709 = vmatpush1.msra.mxu0 0.0
        %710 = vmatprep.subr.mxu0 0.0
        %711 = vmatpush1.msra.mxu0 0.0
        %712 = vmatprep.subr.mxu0 0.0
        %713 = vmatpush1.msra.mxu0 0.0
        %714 = vmatprep.subr.mxu0 0.0
        %715 = vmatpush1.msra.mxu0 0.0
        %716 = vmatprep.subr.mxu0 0.0
        %717 = vmatpush1.msra.mxu0 0.0
        %718 = vmatprep.subr.mxu0 0.0
        %719 = vmatpush1.msra.mxu0 0.0
        %720 = vmatprep.subr.mxu0 0.0
        %721 = vmatpush1.msra.mxu0 0.0
        %722 = vmatprep.subr.mxu0 0.0
        %723 = vmatpush1.msra.mxu0 0.0
        %724 = vmatprep.subr.mxu0 0.0
        %725 = vmatpush1.msra.mxu0 0.0
        %726 = vmatprep.subr.mxu0 0.0
        %727 = vmatpush1.msra.mxu0 0.0
        %728 = vmatprep.subr.mxu0 0.0
        %729 = vmatpush1.msra.mxu0 0.0
        %730 = vmatprep.subr.mxu0 0.0
        %731 = vmatpush1.msra.mxu0 0.0
        %732 = vmatprep.subr.mxu0 0.0
        %733 = vmatpush1.msra.mxu0 0.0
        %734 = vmatprep.mubr.f32.mxu0 0.0
        %v735 = vand.u32 %v230, 4294901760
        %736 = vmatmul.mubr.f32.gmra.mrb[0].mxu0 %v735
        %v737 = vpop.f32.mrb[0].mxu0
        %v738 = vadd.f32 %v633, %v737
        %v739 = vpop.f32.mrb[0].mxu0
        %v740 = vadd.f32 %v635, %v739
        %741 = vmatprep.mubr.f32.mxu0 0.0
        %v742 = vand.u32 %v233, 4294901760
        %743 = vmatmul.mubr.f32.gmra.mrb[0].mxu0 %v742
        %v744 = vpop.f32.mrb[0].mxu0
        %v745 = vadd.f32 %v642, %v744
        %v746 = vpop.f32.mrb[0].mxu0
        %v747 = vadd.f32 %v644, %v746
        %748 = vmatprep.mubr.f32.mxu0 0.0
        %v749 = vand.u32 %v236, 4294901760
        %750 = vmatmul.mubr.f32.gmra.mrb[0].mxu0 %v749
        %v751 = vpop.f32.mrb[0].mxu0
        %v752 = vadd.f32 %v651, %v751
        %v753 = vpop.f32.mrb[0].mxu0
        %v754 = vadd.f32 %v653, %v753
        %755 = vmatprep.mubr.f32.mxu0 0.0
        %v756 = vand.u32 %v239, 4294901760
        %757 = vmatmul.mubr.f32.gmra.mrb[0].mxu0 %v756
        %v758 = vpop.f32.mrb[0].mxu0
        %v759 = vadd.f32 %v660, %v758
        %v760 = vpop.f32.mrb[0].mxu0
        %v761 = vadd.f32 %v662, %v760
        %762 = vdwg.mxu0
        %v763 = vand.u32 %v244, 4294901760
        %764 = vmatprep.subr.mxu0 %v763
        %v765 = vand.u32 %v242, 4294901760
        %766 = vmatpush1.msra.mxu0 %v765
        %767 = vmatprep.subr.mxu0 0.0
        %768 = vmatpush1.msra.mxu0 0.0
        %769 = vmatprep.subr.mxu0 0.0
        %770 = vmatpush1.msra.mxu0 0.0
        %771 = vmatprep.subr.mxu0 0.0
        %772 = vmatpush1.msra.mxu0 0.0
        %773 = vmatprep.subr.mxu0 0.0
        %774 = vmatpush1.msra.mxu0 0.0
        %775 = vmatprep.subr.mxu0 0.0
        %776 = vmatpush1.msra.mxu0 0.0
        %777 = vmatprep.subr.mxu0 0.0
        %778 = vmatpush1.msra.mxu0 0.0
        %779 = vmatprep.subr.mxu0 0.0
        %780 = vmatpush1.msra.mxu0 0.0
        %781 = vmatprep.subr.mxu0 0.0
        %782 = vmatpush1.msra.mxu0 0.0
        %783 = vmatprep.subr.mxu0 0.0
        %784 = vmatpush1.msra.mxu0 0.0
        %785 = vmatprep.subr.mxu0 0.0
        %786 = vmatpush1.msra.mxu0 0.0
        %787 = vmatprep.subr.mxu0 0.0
        %788 = vmatpush1.msra.mxu0 0.0
        %789 = vmatprep.subr.mxu0 0.0
        %790 = vmatpush1.msra.mxu0 0.0
        %791 = vmatprep.subr.mxu0 0.0
        %792 = vmatpush1.msra.mxu0 0.0
        %793 = vmatprep.subr.mxu0 0.0
        %794 = vmatpush1.msra.mxu0 0.0
        %795 = vmatprep.subr.mxu0 0.0
        %796 = vmatpush1.msra.mxu0 0.0
        %797 = vmatprep.subr.mxu0 0.0
        %798 = vmatpush1.msra.mxu0 0.0
        %799 = vmatprep.subr.mxu0 0.0
        %800 = vmatpush1.msra.mxu0 0.0
        %801 = vmatprep.subr.mxu0 0.0
        %802 = vmatpush1.msra.mxu0 0.0
        %803 = vmatprep.subr.mxu0 0.0
        %804 = vmatpush1.msra.mxu0 0.0
        %805 = vmatprep.subr.mxu0 0.0
        %806 = vmatpush1.msra.mxu0 0.0
        %807 = vmatprep.subr.mxu0 0.0
        %808 = vmatpush1.msra.mxu0 0.0
        %809 = vmatprep.subr.mxu0 0.0
        %810 = vmatpush1.msra.mxu0 0.0
        %811 = vmatprep.subr.mxu0 0.0
        %812 = vmatpush1.msra.mxu0 0.0
        %813 = vmatprep.subr.mxu0 0.0
        %814 = vmatpush1.msra.mxu0 0.0
        %815 = vmatprep.subr.mxu0 0.0
        %816 = vmatpush1.msra.mxu0 0.0
        %817 = vmatprep.subr.mxu0 0.0
        %818 = vmatpush1.msra.mxu0 0.0
        %819 = vmatprep.subr.mxu0 0.0
        %820 = vmatpush1.msra.mxu0 0.0
        %821 = vmatprep.subr.mxu0 0.0
        %822 = vmatpush1.msra.mxu0 0.0
        %823 = vmatprep.subr.mxu0 0.0
        %824 = vmatpush1.msra.mxu0 0.0
        %825 = vmatprep.subr.mxu0 0.0
        %826 = vmatpush1.msra.mxu0 0.0
        %827 = vmatprep.subr.mxu0 0.0
        %828 = vmatpush1.msra.mxu0 0.0
        %829 = vmatprep.mubr.f32.mxu0 0.0
        %v830 = vand.u32 %v230, 4294901760
        %831 = vmatmul.mubr.f32.gmra.mrb[0].mxu0 %v830
        %v832 = vpop.f32.mrb[0].mxu0
        %v833 = vadd.f32 %v738, %v832
        %v834 = vpop.f32.mrb[0].mxu0
        %v835 = vadd.f32 %v740, %v834
        %836 = vmatprep.mubr.f32.mxu0 0.0
        %v837 = vand.u32 %v233, 4294901760
        %838 = vmatmul.mubr.f32.gmra.mrb[0].mxu0 %v837
        %v839 = vpop.f32.mrb[0].mxu0
        %v840 = vadd.f32 %v745, %v839
        %v841 = vpop.f32.mrb[0].mxu0
        %v842 = vadd.f32 %v747, %v841
        %843 = vmatprep.mubr.f32.mxu0 0.0
        %v844 = vand.u32 %v236, 4294901760
        %845 = vmatmul.mubr.f32.gmra.mrb[0].mxu0 %v844
        %v846 = vpop.f32.mrb[0].mxu0
        %v847 = vadd.f32 %v752, %v846
        %v848 = vpop.f32.mrb[0].mxu0
        %v849 = vadd.f32 %v754, %v848
        %850 = vmatprep.mubr.f32.mxu0 0.0
        %v851 = vand.u32 %v239, 4294901760
        %852 = vmatmul.mubr.f32.gmra.mrb[0].mxu0 %v851
        %v853 = vpop.f32.mrb[0].mxu0
        %v854 = vadd.f32 %v759, %v853
        %v855 = vpop.f32.mrb[0].mxu0
        %v856 = vadd.f32 %v761, %v855
        %857 = vdwg.mxu0
        %v858 = vmul.f32 %v833, 0.31830987
        %v859 = vmul.f32 %v835, 0.31830987
        %v860 = vmul.f32 %v840, 0.31830987
        %v861 = vmul.f32 %v842, 0.31830987
        %v862 = vmul.f32 %v847, 0.31830987
        %v863 = vmul.f32 %v849, 0.31830987
        %v864 = vmul.f32 %v854, 0.31830987
        %v865 = vmul.f32 %v856, 0.31830987
        %v866 = vadd.f32 %v858, 0.5
        %v867 = vadd.f32 %v859, 0.5
        %v868 = vadd.f32 %v860, 0.5
        %v869 = vadd.f32 %v861, 0.5
        %v870 = vadd.f32 %v862, 0.5
        %v871 = vadd.f32 %v863, 0.5
        %v872 = vadd.f32 %v864, 0.5
        %v873 = vadd.f32 %v865, 0.5
        %v874 = vfloor.f32 %v866
        %v875 = vfloor.f32 %v867
        %v876 = vfloor.f32 %v868
        %v877 = vfloor.f32 %v869
        %v878 = vfloor.f32 %v870
        %v879 = vfloor.f32 %v871
        %v880 = vfloor.f32 %v872
        %v881 = vfloor.f32 %v873
        %v882 = vmul.f32 %v874, 3.1414795
        %v883 = vmul.f32 %v875, 3.1414795
        %v884 = vmul.f32 %v876, 3.1414795
        %v885 = vmul.f32 %v877, 3.1414795
        %v886 = vmul.f32 %v878, 3.1414795
        %v887 = vmul.f32 %v879, 3.1414795
        %v888 = vmul.f32 %v880, 3.1414795
        %v889 = vmul.f32 %v881, 3.1414795
        %v890 = vsub.f32 %v833, %v882
        %v891 = vsub.f32 %v835, %v883
        %v892 = vsub.f32 %v840, %v884
        %v893 = vsub.f32 %v842, %v885
        %v894 = vsub.f32 %v847, %v886
        %v895 = vsub.f32 %v849, %v887
        %v896 = vsub.f32 %v854, %v888
        %v897 = vsub.f32 %v856, %v889
        %v898 = vmul.f32 %v874, 0.00011315942
        %v899 = vmul.f32 %v875, 0.00011315942
        %v900 = vmul.f32 %v876, 0.00011315942
        %v901 = vmul.f32 %v877, 0.00011315942
        %v902 = vmul.f32 %v878, 0.00011315942
        %v903 = vmul.f32 %v879, 0.00011315942
        %v904 = vmul.f32 %v880, 0.00011315942
        %v905 = vmul.f32 %v881, 0.00011315942
        %v906 = vsub.f32 %v890, %v898
        %v907 = vsub.f32 %v891, %v899
        %v908 = vsub.f32 %v892, %v900
        %v909 = vsub.f32 %v893, %v901
        %v910 = vsub.f32 %v894, %v902
        %v911 = vsub.f32 %v895, %v903
        %v912 = vsub.f32 %v896, %v904
        %v913 = vsub.f32 %v897, %v905
        %v914 = vmul.f32 %v874, 1.9841873e-09
        %v915 = vmul.f32 %v875, 1.9841873e-09
        %v916 = vmul.f32 %v876, 1.9841873e-09
        %v917 = vmul.f32 %v877, 1.9841873e-09
        %v918 = vmul.f32 %v878, 1.9841873e-09
        %v919 = vmul.f32 %v879, 1.9841873e-09
        %v920 = vmul.f32 %v880, 1.9841873e-09
        %v921 = vmul.f32 %v881, 1.9841873e-09
        %v922 = vsub.f32 %v906, %v914
        %v923 = vsub.f32 %v907, %v915
        %v924 = vsub.f32 %v908, %v916
        %v925 = vsub.f32 %v909, %v917
        %v926 = vsub.f32 %v910, %v918
        %v927 = vsub.f32 %v911, %v919
        %v928 = vsub.f32 %v912, %v920
        %v929 = vsub.f32 %v913, %v921
        %v930 = vmul.f32 %v922, %v922
        %v931 = vmul.f32 %v923, %v923
        %v932 = vmul.f32 %v924, %v924
        %v933 = vmul.f32 %v925, %v925
        %v934 = vmul.f32 %v926, %v926
        %v935 = vmul.f32 %v927, %v927
        %v936 = vmul.f32 %v928, %v928
        %v937 = vmul.f32 %v929, %v929
        %v938 = vmul.f32 %v930, 2.608316e-06
        %v939 = vmul.f32 %v931, 2.608316e-06
        %v940 = vmul.f32 %v932, 2.608316e-06
        %v941 = vmul.f32 %v933, 2.608316e-06
        %v942 = vmul.f32 %v934, 2.608316e-06
        %v943 = vmul.f32 %v935, 2.608316e-06
        %v944 = vmul.f32 %v936, 2.608316e-06
        %v945 = vmul.f32 %v937, 2.608316e-06
        %v946 = vadd.f32 %v938, -0.0001981069
        %v947 = vadd.f32 %v939, -0.0001981069
        %v948 = vadd.f32 %v940, -0.0001981069
        %v949 = vadd.f32 %v941, -0.0001981069
        %v950 = vadd.f32 %v942, -0.0001981069
        %v951 = vadd.f32 %v943, -0.0001981069
        %v952 = vadd.f32 %v944, -0.0001981069
        %v953 = vadd.f32 %v945, -0.0001981069
        %v954 = vmul.f32 %v946, %v930
        %v955 = vmul.f32 %v947, %v931
        %v956 = vmul.f32 %v948, %v932
        %v957 = vmul.f32 %v949, %v933
        %v958 = vmul.f32 %v950, %v934
        %v959 = vmul.f32 %v951, %v935
        %v960 = vmul.f32 %v952, %v936
        %v961 = vmul.f32 %v953, %v937
        %v962 = vadd.f32 %v954, 0.008333079
        %v963 = vadd.f32 %v955, 0.008333079
        %v964 = vadd.f32 %v956, 0.008333079
        %v965 = vadd.f32 %v957, 0.008333079
        %v966 = vadd.f32 %v958, 0.008333079
        %v967 = vadd.f32 %v959, 0.008333079
        %v968 = vadd.f32 %v960, 0.008333079
        %v969 = vadd.f32 %v961, 0.008333079
        %v970 = vmul.f32 %v962, %v930
        %v971 = vmul.f32 %v963, %v931
        %v972 = vmul.f32 %v964, %v932
        %v973 = vmul.f32 %v965, %v933
        %v974 = vmul.f32 %v966, %v934
        %v975 = vmul.f32 %v967, %v935
        %v976 = vmul.f32 %v968, %v936
        %v977 = vmul.f32 %v969, %v937
        %v978 = vadd.f32 %v970, -0.1666666
        %v979 = vadd.f32 %v971, -0.1666666
        %v980 = vadd.f32 %v972, -0.1666666
        %v981 = vadd.f32 %v973, -0.1666666
        %v982 = vadd.f32 %v974, -0.1666666
        %v983 = vadd.f32 %v975, -0.1666666
        %v984 = vadd.f32 %v976, -0.1666666
        %v985 = vadd.f32 %v977, -0.1666666
        %v986 = vmul.f32 %v930, %v922
        %v987 = vmul.f32 %v931, %v923
        %v988 = vmul.f32 %v932, %v924
        %v989 = vmul.f32 %v933, %v925
        %v990 = vmul.f32 %v934, %v926
        %v991 = vmul.f32 %v935, %v927
        %v992 = vmul.f32 %v936, %v928
        %v993 = vmul.f32 %v937, %v929
        %v994 = vmul.f32 %v986, %v978
        %v995 = vmul.f32 %v987, %v979
        %v996 = vmul.f32 %v988, %v980
        %v997 = vmul.f32 %v989, %v981
        %v998 = vmul.f32 %v990, %v982
        %v999 = vmul.f32 %v991, %v983
        %v1000 = vmul.f32 %v992, %v984
        %v1001 = vmul.f32 %v993, %v985
        %v1002 = vadd.f32 %v994, %v922
        %v1003 = vadd.f32 %v995, %v923
        %v1004 = vadd.f32 %v996, %v924
        %v1005 = vadd.f32 %v997, %v925
        %v1006 = vadd.f32 %v998, %v926
        %v1007 = vadd.f32 %v999, %v927
        %v1008 = vadd.f32 %v1000, %v928
        %v1009 = vadd.f32 %v1001, %v929
        %v1010 = vcvt.f32.s32.to.zero.pseudo %v874
        %v1011 = vcvt.f32.s32.to.zero.pseudo %v875
        %v1012 = vcvt.f32.s32.to.zero.pseudo %v876
        %v1013 = vcvt.f32.s32.to.zero.pseudo %v877
        %v1014 = vcvt.f32.s32.to.zero.pseudo %v878
        %v1015 = vcvt.f32.s32.to.zero.pseudo %v879
        %v1016 = vcvt.f32.s32.to.zero.pseudo %v880
        %v1017 = vcvt.f32.s32.to.zero.pseudo %v881
        %v1018 = vand.u32 %v1010, 1
        %v1019 = vand.u32 %v1011, 1
        %v1020 = vand.u32 %v1012, 1
        %v1021 = vand.u32 %v1013, 1
        %v1022 = vand.u32 %v1014, 1
        %v1023 = vand.u32 %v1015, 1
        %v1024 = vand.u32 %v1016, 1
        %v1025 = vand.u32 %v1017, 1
        %vm1026 = vcmp.eq.s32.totalorder %v1018, 1
        %vm1027 = vcmp.eq.s32.totalorder %v1019, 1
        %vm1028 = vcmp.eq.s32.totalorder %v1020, 1
        %vm1029 = vcmp.eq.s32.totalorder %v1021, 1
        %vm1030 = vcmp.eq.s32.totalorder %v1022, 1
        %vm1031 = vcmp.eq.s32.totalorder %v1023, 1
        %vm1032 = vcmp.eq.s32.totalorder %v1024, 1
        %vm1033 = vcmp.eq.s32.totalorder %v1025, 1
        %v1034 = vsub.f32 0.0, %v1002
        %v1035 = vsub.f32 0.0, %v1003
        %v1036 = vsub.f32 0.0, %v1004
        %v1037 = vsub.f32 0.0, %v1005
        %v1038 = vsub.f32 0.0, %v1006
        %v1039 = vsub.f32 0.0, %v1007
        %v1040 = vsub.f32 0.0, %v1008
        %v1041 = vsub.f32 0.0, %v1009
        %v1042 = vsel %vm1026, %v1034, %v1002
        %v1043 = vsel %vm1027, %v1035, %v1003
        %v1044 = vsel %vm1028, %v1036, %v1004
        %v1045 = vsel %vm1029, %v1037, %v1005
        %v1046 = vsel %vm1030, %v1038, %v1006
        %v1047 = vsel %vm1031, %v1039, %v1007
        %v1048 = vsel %vm1032, %v1040, %v1008
        %v1049 = vsel %vm1033, %v1041, %v1009
        %1050 = vst [vmem:[#allocation2] sm:$0xff] %v1042
        %1051 = vst [vmem:[#allocation2 + $0x8] sm:$0xff] %v1043
        %1052 = vst [vmem:[#allocation2 + $0x10] sm:$0xff] %v1044
        %1053 = vst [vmem:[#allocation2 + $0x18] sm:$0xff] %v1045
        %1054 = vst [vmem:[#allocation2 + $0x20] sm:$0xff] %v1046
        %1055 = vst [vmem:[#allocation2 + $0x28] sm:$0xff] %v1047
        %1056 = vst [vmem:[#allocation2 + $0x30] sm:$0xff] %v1048
        %1057 = vst [vmem:[#allocation2 + $0x38] sm:$0xff] %v1049
        %v1058 = vld [vmem:[#allocation3] sm:$0xff]
        %v1059 = vld [vmem:[#allocation3 + $0x8] sm:$0xff]
        %v1060 = vld [vmem:[#allocation3 + $0x10] sm:$0xff]
        %v1061 = vld [vmem:[#allocation3 + $0x18] sm:$0xff]
        %v1062 = vld [vmem:[#allocation2] sm:$0xff]
        %v1063 = vld [vmem:[#allocation2 + $0x8] sm:$0xff]
        %v1064 = vld [vmem:[#allocation2 + $0x10] sm:$0xff]
        %v1065 = vld [vmem:[#allocation2 + $0x18] sm:$0xff]
        %v1066 = vld [vmem:[#allocation2 + $0x20] sm:$0xff]
        %v1067 = vld [vmem:[#allocation2 + $0x28] sm:$0xff]
        %v1068 = vld [vmem:[#allocation2 + $0x30] sm:$0xff]
        %v1069 = vld [vmem:[#allocation2 + $0x38] sm:$0xff]
        %v1070 = vld [vmem:[#allocation2 + $0x40] sm:$0x1]
        %v1071 = vld [vmem:[#allocation2 + $0x48] sm:$0x1]
        %vm1072 = vcmask 269312
        %v1074 = vsel %vm1072, %v1058, 0
        %v1077 = vsel %vm1072, %v1059, 0
        %v1080 = vsel %vm1072, %v1060, 0
        %v1083 = vsel %vm1072, %v1061, 0
        %vm1085 = vcmask 1040384
        %v1087 = vsel %vm1085, %v1070, 0
        %v1090 = vsel %vm1085, %v1071, 0
        %v1092 = vand.u32 %v1063, 4294901760
        %1093 = vmatprep.subr.mxu0 %v1092
        %v1094 = vand.u32 %v1062, 4294901760
        %1095 = vmatpush1.msra.mxu0 %v1094
        %v1096 = vand.u32 %v1065, 4294901760
        %1097 = vmatprep.subr.mxu0 %v1096
        %v1098 = vand.u32 %v1064, 4294901760
        %1099 = vmatpush1.msra.mxu0 %v1098
        %v1100 = vand.u32 %v1067, 4294901760
        %1101 = vmatprep.subr.mxu0 %v1100
        %v1102 = vand.u32 %v1066, 4294901760
        %1103 = vmatpush1.msra.mxu0 %v1102
        %v1104 = vand.u32 %v1069, 4294901760
        %1105 = vmatprep.subr.mxu0 %v1104
        %v1106 = vand.u32 %v1068, 4294901760
        %1107 = vmatpush1.msra.mxu0 %v1106
        %v1108 = vand.u32 %v1090, 4294901760
        %1109 = vmatprep.subr.mxu0 %v1108
        %v1110 = vand.u32 %v1087, 4294901760
        %1111 = vmatpush1.msra.mxu0 %v1110
        %1112 = vmatprep.subr.mxu0 0.0
        %1113 = vmatpush1.msra.mxu0 0.0
        %1114 = vmatprep.subr.mxu0 0.0
        %1115 = vmatpush1.msra.mxu0 0.0
        %1116 = vmatprep.subr.mxu0 0.0
        %1117 = vmatpush1.msra.mxu0 0.0
        %1118 = vmatprep.subr.mxu0 0.0
        %1119 = vmatpush1.msra.mxu0 0.0
        %1120 = vmatprep.subr.mxu0 0.0
        %1121 = vmatpush1.msra.mxu0 0.0
        %1122 = vmatprep.subr.mxu0 0.0
        %1123 = vmatpush1.msra.mxu0 0.0
        %1124 = vmatprep.subr.mxu0 0.0
        %1125 = vmatpush1.msra.mxu0 0.0
        %1126 = vmatprep.subr.mxu0 0.0
        %1127 = vmatpush1.msra.mxu0 0.0
        %1128 = vmatprep.subr.mxu0 0.0
        %1129 = vmatpush1.msra.mxu0 0.0
        %1130 = vmatprep.subr.mxu0 0.0
        %1131 = vmatpush1.msra.mxu0 0.0
        %1132 = vmatprep.subr.mxu0 0.0
        %1133 = vmatpush1.msra.mxu0 0.0
        %1134 = vmatprep.subr.mxu0 0.0
        %1135 = vmatpush1.msra.mxu0 0.0
        %1136 = vmatprep.subr.mxu0 0.0
        %1137 = vmatpush1.msra.mxu0 0.0
        %1138 = vmatprep.subr.mxu0 0.0
        %1139 = vmatpush1.msra.mxu0 0.0
        %1140 = vmatprep.subr.mxu0 0.0
        %1141 = vmatpush1.msra.mxu0 0.0
        %1142 = vmatprep.subr.mxu0 0.0
        %1143 = vmatpush1.msra.mxu0 0.0
        %1144 = vmatprep.subr.mxu0 0.0
        %1145 = vmatpush1.msra.mxu0 0.0
        %1146 = vmatprep.subr.mxu0 0.0
        %1147 = vmatpush1.msra.mxu0 0.0
        %1148 = vmatprep.subr.mxu0 0.0
        %1149 = vmatpush1.msra.mxu0 0.0
        %1150 = vmatprep.subr.mxu0 0.0
        %1151 = vmatpush1.msra.mxu0 0.0
        %1152 = vmatprep.subr.mxu0 0.0
        %1153 = vmatpush1.msra.mxu0 0.0
        %1154 = vmatprep.subr.mxu0 0.0
        %1155 = vmatpush1.msra.mxu0 0.0
        %1156 = vmatprep.subr.mxu0 0.0
        %1157 = vmatpush1.msra.mxu0 0.0
        %1158 = vmatprep.subr.mxu0 0.0
        %1159 = vmatpush1.msra.mxu0 0.0
        %1160 = vmatprep.subr.mxu0 0.0
        %1161 = vmatpush1.msra.mxu0 0.0
        %1162 = vmatprep.subr.mxu0 0.0
        %1163 = vmatpush1.msra.mxu0 0.0
        %1164 = vmatprep.subr.mxu0 0.0
        %1165 = vmatpush1.msra.mxu0 0.0
        %1166 = vmatprep.mubr.f32.mxu0 0.0
        %v1167 = vand.u32 %v1074, 4294901760
        %v1168 = vsub.f32 %v1074, %v1167
        %v1169 = vand.u32 %v1168, 4294901760
        %v1170 = vsub.f32 %v1168, %v1169
        %v1171 = vand.u32 %v1170, 4294901760
        %1172 = vmatmul.mubr.f32.gmra.mrb[0].mxu0 %v1171
        %v1173 = vpop.f32.mrb[0].mxu0
        %v1174 = vadd.f32 0.0, %v1173
        %v1175 = vpop.f32.mrb[0].mxu0
        %v1176 = vadd.f32 0.0, %v1175
        %1177 = vmatprep.mubr.f32.mxu0 0.0
        %v1178 = vand.u32 %v1077, 4294901760
        %v1179 = vsub.f32 %v1077, %v1178
        %v1180 = vand.u32 %v1179, 4294901760
        %v1181 = vsub.f32 %v1179, %v1180
        %v1182 = vand.u32 %v1181, 4294901760
        %1183 = vmatmul.mubr.f32.gmra.mrb[0].mxu0 %v1182
        %v1184 = vpop.f32.mrb[0].mxu0
        %v1185 = vadd.f32 0.0, %v1184
        %v1186 = vpop.f32.mrb[0].mxu0
        %v1187 = vadd.f32 0.0, %v1186
        %1188 = vmatprep.mubr.f32.mxu0 0.0
        %v1189 = vand.u32 %v1080, 4294901760
        %v1190 = vsub.f32 %v1080, %v1189
        %v1191 = vand.u32 %v1190, 4294901760
        %v1192 = vsub.f32 %v1190, %v1191
        %v1193 = vand.u32 %v1192, 4294901760
        %1194 = vmatmul.mubr.f32.gmra.mrb[0].mxu0 %v1193
        %v1195 = vpop.f32.mrb[0].mxu0
        %v1196 = vadd.f32 0.0, %v1195
        %v1197 = vpop.f32.mrb[0].mxu0
        %v1198 = vadd.f32 0.0, %v1197
        %1199 = vmatprep.mubr.f32.mxu0 0.0
        %v1200 = vand.u32 %v1083, 4294901760
        %v1201 = vsub.f32 %v1083, %v1200
        %v1202 = vand.u32 %v1201, 4294901760
        %v1203 = vsub.f32 %v1201, %v1202
        %v1204 = vand.u32 %v1203, 4294901760
        %1205 = vmatmul.mubr.f32.gmra.mrb[0].mxu0 %v1204
        %v1206 = vpop.f32.mrb[0].mxu0
        %v1207 = vadd.f32 0.0, %v1206
        %v1208 = vpop.f32.mrb[0].mxu0
        %v1209 = vadd.f32 0.0, %v1208
        %1210 = vdwg.mxu0
        %v1211 = vand.u32 %v1063, 4294901760
        %v1212 = vsub.f32 %v1063, %v1211
        %v1213 = vand.u32 %v1212, 4294901760
        %v1214 = vsub.f32 %v1212, %v1213
        %v1215 = vand.u32 %v1214, 4294901760
        %1216 = vmatprep.subr.mxu0 %v1215
        %v1217 = vand.u32 %v1062, 4294901760
        %v1218 = vsub.f32 %v1062, %v1217
        %v1219 = vand.u32 %v1218, 4294901760
        %v1220 = vsub.f32 %v1218, %v1219
        %v1221 = vand.u32 %v1220, 4294901760
        %1222 = vmatpush1.msra.mxu0 %v1221
        %v1223 = vand.u32 %v1065, 4294901760
        %v1224 = vsub.f32 %v1065, %v1223
        %v1225 = vand.u32 %v1224, 4294901760
        %v1226 = vsub.f32 %v1224, %v1225
        %v1227 = vand.u32 %v1226, 4294901760
        %1228 = vmatprep.subr.mxu0 %v1227
        %v1229 = vand.u32 %v1064, 4294901760
        %v1230 = vsub.f32 %v1064, %v1229
        %v1231 = vand.u32 %v1230, 4294901760
        %v1232 = vsub.f32 %v1230, %v1231
        %v1233 = vand.u32 %v1232, 4294901760
        %1234 = vmatpush1.msra.mxu0 %v1233
        %v1235 = vand.u32 %v1067, 4294901760
        %v1236 = vsub.f32 %v1067, %v1235
        %v1237 = vand.u32 %v1236, 4294901760
        %v1238 = vsub.f32 %v1236, %v1237
        %v1239 = vand.u32 %v1238, 4294901760
        %1240 = vmatprep.subr.mxu0 %v1239
        %v1241 = vand.u32 %v1066, 4294901760
        %v1242 = vsub.f32 %v1066, %v1241
        %v1243 = vand.u32 %v1242, 4294901760
        %v1244 = vsub.f32 %v1242, %v1243
        %v1245 = vand.u32 %v1244, 4294901760
        %1246 = vmatpush1.msra.mxu0 %v1245
        %v1247 = vand.u32 %v1069, 4294901760
        %v1248 = vsub.f32 %v1069, %v1247
        %v1249 = vand.u32 %v1248, 4294901760
        %v1250 = vsub.f32 %v1248, %v1249
        %v1251 = vand.u32 %v1250, 4294901760
        %1252 = vmatprep.subr.mxu0 %v1251
        %v1253 = vand.u32 %v1068, 4294901760
        %v1254 = vsub.f32 %v1068, %v1253
        %v1255 = vand.u32 %v1254, 4294901760
        %v1256 = vsub.f32 %v1254, %v1255
        %v1257 = vand.u32 %v1256, 4294901760
        %1258 = vmatpush1.msra.mxu0 %v1257
        %v1259 = vand.u32 %v1090, 4294901760
        %v1260 = vsub.f32 %v1090, %v1259
        %v1261 = vand.u32 %v1260, 4294901760
        %v1262 = vsub.f32 %v1260, %v1261
        %v1263 = vand.u32 %v1262, 4294901760
        %1264 = vmatprep.subr.mxu0 %v1263
        %v1265 = vand.u32 %v1087, 4294901760
        %v1266 = vsub.f32 %v1087, %v1265
        %v1267 = vand.u32 %v1266, 4294901760
        %v1268 = vsub.f32 %v1266, %v1267
        %v1269 = vand.u32 %v1268, 4294901760
        %1270 = vmatpush1.msra.mxu0 %v1269
        %1271 = vmatprep.subr.mxu0 0.0
        %1272 = vmatpush1.msra.mxu0 0.0
        %1273 = vmatprep.subr.mxu0 0.0
        %1274 = vmatpush1.msra.mxu0 0.0
        %1275 = vmatprep.subr.mxu0 0.0
        %1276 = vmatpush1.msra.mxu0 0.0
        %1277 = vmatprep.subr.mxu0 0.0
        %1278 = vmatpush1.msra.mxu0 0.0
        %1279 = vmatprep.subr.mxu0 0.0
        %1280 = vmatpush1.msra.mxu0 0.0
        %1281 = vmatprep.subr.mxu0 0.0
        %1282 = vmatpush1.msra.mxu0 0.0
        %1283 = vmatprep.subr.mxu0 0.0
        %1284 = vmatpush1.msra.mxu0 0.0
        %1285 = vmatprep.subr.mxu0 0.0
        %1286 = vmatpush1.msra.mxu0 0.0
        %1287 = vmatprep.subr.mxu0 0.0
        %1288 = vmatpush1.msra.mxu0 0.0
        %1289 = vmatprep.subr.mxu0 0.0
        %1290 = vmatpush1.msra.mxu0 0.0
        %1291 = vmatprep.subr.mxu0 0.0
        %1292 = vmatpush1.msra.mxu0 0.0
        %1293 = vmatprep.subr.mxu0 0.0
        %1294 = vmatpush1.msra.mxu0 0.0
        %1295 = vmatprep.subr.mxu0 0.0
        %1296 = vmatpush1.msra.mxu0 0.0
        %1297 = vmatprep.subr.mxu0 0.0
        %1298 = vmatpush1.msra.mxu0 0.0
        %1299 = vmatprep.subr.mxu0 0.0
        %1300 = vmatpush1.msra.mxu0 0.0
        %1301 = vmatprep.subr.mxu0 0.0
        %1302 = vmatpush1.msra.mxu0 0.0
        %1303 = vmatprep.subr.mxu0 0.0
        %1304 = vmatpush1.msra.mxu0 0.0
        %1305 = vmatprep.subr.mxu0 0.0
        %1306 = vmatpush1.msra.mxu0 0.0
        %1307 = vmatprep.subr.mxu0 0.0
        %1308 = vmatpush1.msra.mxu0 0.0
        %1309 = vmatprep.subr.mxu0 0.0
        %1310 = vmatpush1.msra.mxu0 0.0
        %1311 = vmatprep.subr.mxu0 0.0
        %1312 = vmatpush1.msra.mxu0 0.0
        %1313 = vmatprep.subr.mxu0 0.0
        %1314 = vmatpush1.msra.mxu0 0.0
        %1315 = vmatprep.subr.mxu0 0.0
        %1316 = vmatpush1.msra.mxu0 0.0
        %1317 = vmatprep.subr.mxu0 0.0
        %1318 = vmatpush1.msra.mxu0 0.0
        %1319 = vmatprep.subr.mxu0 0.0
        %1320 = vmatpush1.msra.mxu0 0.0
        %1321 = vmatprep.subr.mxu0 0.0
        %1322 = vmatpush1.msra.mxu0 0.0
        %1323 = vmatprep.subr.mxu0 0.0
        %1324 = vmatpush1.msra.mxu0 0.0
        %1325 = vmatprep.mubr.f32.mxu0 0.0
        %v1326 = vand.u32 %v1074, 4294901760
        %1327 = vmatmul.mubr.f32.gmra.mrb[0].mxu0 %v1326
        %v1328 = vpop.f32.mrb[0].mxu0
        %v1329 = vadd.f32 %v1174, %v1328
        %v1330 = vpop.f32.mrb[0].mxu0
        %v1331 = vadd.f32 %v1176, %v1330
        %1332 = vmatprep.mubr.f32.mxu0 0.0
        %v1333 = vand.u32 %v1077, 4294901760
        %1334 = vmatmul.mubr.f32.gmra.mrb[0].mxu0 %v1333
        %v1335 = vpop.f32.mrb[0].mxu0
        %v1336 = vadd.f32 %v1185, %v1335
        %v1337 = vpop.f32.mrb[0].mxu0
        %v1338 = vadd.f32 %v1187, %v1337
        %1339 = vmatprep.mubr.f32.mxu0 0.0
        %v1340 = vand.u32 %v1080, 4294901760
        %1341 = vmatmul.mubr.f32.gmra.mrb[0].mxu0 %v1340
        %v1342 = vpop.f32.mrb[0].mxu0
        %v1343 = vadd.f32 %v1196, %v1342
        %v1344 = vpop.f32.mrb[0].mxu0
        %v1345 = vadd.f32 %v1198, %v1344
        %1346 = vmatprep.mubr.f32.mxu0 0.0
        %v1347 = vand.u32 %v1083, 4294901760
        %1348 = vmatmul.mubr.f32.gmra.mrb[0].mxu0 %v1347
        %v1349 = vpop.f32.mrb[0].mxu0
        %v1350 = vadd.f32 %v1207, %v1349
        %v1351 = vpop.f32.mrb[0].mxu0
        %v1352 = vadd.f32 %v1209, %v1351
        %1353 = vdwg.mxu0
        %v1354 = vand.u32 %v1063, 4294901760
        %v1355 = vsub.f32 %v1063, %v1354
        %1356 = vmatprep.subr.mxu0 %v1355
        %v1357 = vand.u32 %v1062, 4294901760
        %v1358 = vsub.f32 %v1062, %v1357
        %1359 = vmatpush1.msra.mxu0 %v1358
        %v1360 = vand.u32 %v1065, 4294901760
        %v1361 = vsub.f32 %v1065, %v1360
        %1362 = vmatprep.subr.mxu0 %v1361
        %v1363 = vand.u32 %v1064, 4294901760
        %v1364 = vsub.f32 %v1064, %v1363
        %1365 = vmatpush1.msra.mxu0 %v1364
        %v1366 = vand.u32 %v1067, 4294901760
        %v1367 = vsub.f32 %v1067, %v1366
        %1368 = vmatprep.subr.mxu0 %v1367
        %v1369 = vand.u32 %v1066, 4294901760
        %v1370 = vsub.f32 %v1066, %v1369
        %1371 = vmatpush1.msra.mxu0 %v1370
        %v1372 = vand.u32 %v1069, 4294901760
        %v1373 = vsub.f32 %v1069, %v1372
        %1374 = vmatprep.subr.mxu0 %v1373
        %v1375 = vand.u32 %v1068, 4294901760
        %v1376 = vsub.f32 %v1068, %v1375
        %1377 = vmatpush1.msra.mxu0 %v1376
        %v1378 = vand.u32 %v1090, 4294901760
        %v1379 = vsub.f32 %v1090, %v1378
        %1380 = vmatprep.subr.mxu0 %v1379
        %v1381 = vand.u32 %v1087, 4294901760
        %v1382 = vsub.f32 %v1087, %v1381
        %1383 = vmatpush1.msra.mxu0 %v1382
        %1384 = vmatprep.subr.mxu0 0.0
        %1385 = vmatpush1.msra.mxu0 0.0
        %1386 = vmatprep.subr.mxu0 0.0
        %1387 = vmatpush1.msra.mxu0 0.0
        %1388 = vmatprep.subr.mxu0 0.0
        %1389 = vmatpush1.msra.mxu0 0.0
        %1390 = vmatprep.subr.mxu0 0.0
        %1391 = vmatpush1.msra.mxu0 0.0
        %1392 = vmatprep.subr.mxu0 0.0
        %1393 = vmatpush1.msra.mxu0 0.0
        %1394 = vmatprep.subr.mxu0 0.0
        %1395 = vmatpush1.msra.mxu0 0.0
        %1396 = vmatprep.subr.mxu0 0.0
        %1397 = vmatpush1.msra.mxu0 0.0
        %1398 = vmatprep.subr.mxu0 0.0
        %1399 = vmatpush1.msra.mxu0 0.0
        %1400 = vmatprep.subr.mxu0 0.0
        %1401 = vmatpush1.msra.mxu0 0.0
        %1402 = vmatprep.subr.mxu0 0.0
        %1403 = vmatpush1.msra.mxu0 0.0
        %1404 = vmatprep.subr.mxu0 0.0
        %1405 = vmatpush1.msra.mxu0 0.0
        %1406 = vmatprep.subr.mxu0 0.0
        %1407 = vmatpush1.msra.mxu0 0.0
        %1408 = vmatprep.subr.mxu0 0.0
        %1409 = vmatpush1.msra.mxu0 0.0
        %1410 = vmatprep.subr.mxu0 0.0
        %1411 = vmatpush1.msra.mxu0 0.0
        %1412 = vmatprep.subr.mxu0 0.0
        %1413 = vmatpush1.msra.mxu0 0.0
        %1414 = vmatprep.subr.mxu0 0.0
        %1415 = vmatpush1.msra.mxu0 0.0
        %1416 = vmatprep.subr.mxu0 0.0
        %1417 = vmatpush1.msra.mxu0 0.0
        %1418 = vmatprep.subr.mxu0 0.0
        %1419 = vmatpush1.msra.mxu0 0.0
        %1420 = vmatprep.subr.mxu0 0.0
        %1421 = vmatpush1.msra.mxu0 0.0
        %1422 = vmatprep.subr.mxu0 0.0
        %1423 = vmatpush1.msra.mxu0 0.0
        %1424 = vmatprep.subr.mxu0 0.0
        %1425 = vmatpush1.msra.mxu0 0.0
        %1426 = vmatprep.subr.mxu0 0.0
        %1427 = vmatpush1.msra.mxu0 0.0
        %1428 = vmatprep.subr.mxu0 0.0
        %1429 = vmatpush1.msra.mxu0 0.0
        %1430 = vmatprep.subr.mxu0 0.0
        %1431 = vmatpush1.msra.mxu0 0.0
        %1432 = vmatprep.subr.mxu0 0.0
        %1433 = vmatpush1.msra.mxu0 0.0
        %1434 = vmatprep.subr.mxu0 0.0
        %1435 = vmatpush1.msra.mxu0 0.0
        %1436 = vmatprep.subr.mxu0 0.0
        %1437 = vmatpush1.msra.mxu0 0.0
        %1438 = vmatprep.mubr.f32.mxu0 0.0
        %v1439 = vand.u32 %v1074, 4294901760
        %v1440 = vsub.f32 %v1074, %v1439
        %1441 = vmatmul.mubr.f32.gmra.mrb[0].mxu0 %v1440
        %v1442 = vpop.f32.mrb[0].mxu0
        %v1443 = vadd.f32 %v1329, %v1442
        %v1444 = vpop.f32.mrb[0].mxu0
        %v1445 = vadd.f32 %v1331, %v1444
        %1446 = vmatprep.mubr.f32.mxu0 0.0
        %v1447 = vand.u32 %v1077, 4294901760
        %v1448 = vsub.f32 %v1077, %v1447
        %1449 = vmatmul.mubr.f32.gmra.mrb[0].mxu0 %v1448
        %v1450 = vpop.f32.mrb[0].mxu0
        %v1451 = vadd.f32 %v1336, %v1450
        %v1452 = vpop.f32.mrb[0].mxu0
        %v1453 = vadd.f32 %v1338, %v1452
        %1454 = vmatprep.mubr.f32.mxu0 0.0
        %v1455 = vand.u32 %v1080, 4294901760
        %v1456 = vsub.f32 %v1080, %v1455
        %1457 = vmatmul.mubr.f32.gmra.mrb[0].mxu0 %v1456
        %v1458 = vpop.f32.mrb[0].mxu0
        %v1459 = vadd.f32 %v1343, %v1458
        %v1460 = vpop.f32.mrb[0].mxu0
        %v1461 = vadd.f32 %v1345, %v1460
        %1462 = vmatprep.mubr.f32.mxu0 0.0
        %v1463 = vand.u32 %v1083, 4294901760
        %v1464 = vsub.f32 %v1083, %v1463
        %1465 = vmatmul.mubr.f32.gmra.mrb[0].mxu0 %v1464
        %v1466 = vpop.f32.mrb[0].mxu0
        %v1467 = vadd.f32 %v1350, %v1466
        %v1468 = vpop.f32.mrb[0].mxu0
        %v1469 = vadd.f32 %v1352, %v1468
        %1470 = vdwg.mxu0
        %v1471 = vand.u32 %v1063, 4294901760
        %1472 = vmatprep.subr.mxu0 %v1471
        %v1473 = vand.u32 %v1062, 4294901760
        %1474 = vmatpush1.msra.mxu0 %v1473
        %v1475 = vand.u32 %v1065, 4294901760
        %1476 = vmatprep.subr.mxu0 %v1475
        %v1477 = vand.u32 %v1064, 4294901760
        %1478 = vmatpush1.msra.mxu0 %v1477
        %v1479 = vand.u32 %v1067, 4294901760
        %1480 = vmatprep.subr.mxu0 %v1479
        %v1481 = vand.u32 %v1066, 4294901760
        %1482 = vmatpush1.msra.mxu0 %v1481
        %v1483 = vand.u32 %v1069, 4294901760
        %1484 = vmatprep.subr.mxu0 %v1483
        %v1485 = vand.u32 %v1068, 4294901760
        %1486 = vmatpush1.msra.mxu0 %v1485
        %v1487 = vand.u32 %v1090, 4294901760
        %1488 = vmatprep.subr.mxu0 %v1487
        %v1489 = vand.u32 %v1087, 4294901760
        %1490 = vmatpush1.msra.mxu0 %v1489
        %1491 = vmatprep.subr.mxu0 0.0
        %1492 = vmatpush1.msra.mxu0 0.0
        %1493 = vmatprep.subr.mxu0 0.0
        %1494 = vmatpush1.msra.mxu0 0.0
        %1495 = vmatprep.subr.mxu0 0.0
        %1496 = vmatpush1.msra.mxu0 0.0
        %1497 = vmatprep.subr.mxu0 0.0
        %1498 = vmatpush1.msra.mxu0 0.0
        %1499 = vmatprep.subr.mxu0 0.0
        %1500 = vmatpush1.msra.mxu0 0.0
        %1501 = vmatprep.subr.mxu0 0.0
        %1502 = vmatpush1.msra.mxu0 0.0
        %1503 = vmatprep.subr.mxu0 0.0
        %1504 = vmatpush1.msra.mxu0 0.0
        %1505 = vmatprep.subr.mxu0 0.0
        %1506 = vmatpush1.msra.mxu0 0.0
        %1507 = vmatprep.subr.mxu0 0.0
        %1508 = vmatpush1.msra.mxu0 0.0
        %1509 = vmatprep.subr.mxu0 0.0
        %1510 = vmatpush1.msra.mxu0 0.0
        %1511 = vmatprep.subr.mxu0 0.0
        %1512 = vmatpush1.msra.mxu0 0.0
        %1513 = vmatprep.subr.mxu0 0.0
        %1514 = vmatpush1.msra.mxu0 0.0
        %1515 = vmatprep.subr.mxu0 0.0
        %1516 = vmatpush1.msra.mxu0 0.0
        %1517 = vmatprep.subr.mxu0 0.0
        %1518 = vmatpush1.msra.mxu0 0.0
        %1519 = vmatprep.subr.mxu0 0.0
        %1520 = vmatpush1.msra.mxu0 0.0
        %1521 = vmatprep.subr.mxu0 0.0
        %1522 = vmatpush1.msra.mxu0 0.0
        %1523 = vmatprep.subr.mxu0 0.0
        %1524 = vmatpush1.msra.mxu0 0.0
        %1525 = vmatprep.subr.mxu0 0.0
        %1526 = vmatpush1.msra.mxu0 0.0
        %1527 = vmatprep.subr.mxu0 0.0
        %1528 = vmatpush1.msra.mxu0 0.0
        %1529 = vmatprep.subr.mxu0 0.0
        %1530 = vmatpush1.msra.mxu0 0.0
        %1531 = vmatprep.subr.mxu0 0.0
        %1532 = vmatpush1.msra.mxu0 0.0
        %1533 = vmatprep.subr.mxu0 0.0
        %1534 = vmatpush1.msra.mxu0 0.0
        %1535 = vmatprep.subr.mxu0 0.0
        %1536 = vmatpush1.msra.mxu0 0.0
        %1537 = vmatprep.subr.mxu0 0.0
        %1538 = vmatpush1.msra.mxu0 0.0
        %1539 = vmatprep.subr.mxu0 0.0
        %1540 = vmatpush1.msra.mxu0 0.0
        %1541 = vmatprep.subr.mxu0 0.0
        %1542 = vmatpush1.msra.mxu0 0.0
        %1543 = vmatprep.subr.mxu0 0.0
        %1544 = vmatpush1.msra.mxu0 0.0
        %1545 = vmatprep.mubr.f32.mxu0 0.0
        %v1546 = vand.u32 %v1074, 4294901760
        %v1547 = vsub.f32 %v1074, %v1546
        %v1548 = vand.u32 %v1547, 4294901760
        %1549 = vmatmul.mubr.f32.gmra.mrb[0].mxu0 %v1548
        %v1550 = vpop.f32.mrb[0].mxu0
        %v1551 = vadd.f32 %v1443, %v1550
        %v1552 = vpop.f32.mrb[0].mxu0
        %v1553 = vadd.f32 %v1445, %v1552
        %1554 = vmatprep.mubr.f32.mxu0 0.0
        %v1555 = vand.u32 %v1077, 4294901760
        %v1556 = vsub.f32 %v1077, %v1555
        %v1557 = vand.u32 %v1556, 4294901760
        %1558 = vmatmul.mubr.f32.gmra.mrb[0].mxu0 %v1557
        %v1559 = vpop.f32.mrb[0].mxu0
        %v1560 = vadd.f32 %v1451, %v1559
        %v1561 = vpop.f32.mrb[0].mxu0
        %v1562 = vadd.f32 %v1453, %v1561
        %1563 = vmatprep.mubr.f32.mxu0 0.0
        %v1564 = vand.u32 %v1080, 4294901760
        %v1565 = vsub.f32 %v1080, %v1564
        %v1566 = vand.u32 %v1565, 4294901760
        %1567 = vmatmul.mubr.f32.gmra.mrb[0].mxu0 %v1566
        %v1568 = vpop.f32.mrb[0].mxu0
        %v1569 = vadd.f32 %v1459, %v1568
        %v1570 = vpop.f32.mrb[0].mxu0
        %v1571 = vadd.f32 %v1461, %v1570
        %1572 = vmatprep.mubr.f32.mxu0 0.0
        %v1573 = vand.u32 %v1083, 4294901760
        %v1574 = vsub.f32 %v1083, %v1573
        %v1575 = vand.u32 %v1574, 4294901760
        %1576 = vmatmul.mubr.f32.gmra.mrb[0].mxu0 %v1575
        %v1577 = vpop.f32.mrb[0].mxu0
        %v1578 = vadd.f32 %v1467, %v1577
        %v1579 = vpop.f32.mrb[0].mxu0
        %v1580 = vadd.f32 %v1469, %v1579
        %1581 = vdwg.mxu0
        %v1582 = vand.u32 %v1063, 4294901760
        %v1583 = vsub.f32 %v1063, %v1582
        %v1584 = vand.u32 %v1583, 4294901760
        %1585 = vmatprep.subr.mxu0 %v1584
        %v1586 = vand.u32 %v1062, 4294901760
        %v1587 = vsub.f32 %v1062, %v1586
        %v1588 = vand.u32 %v1587, 4294901760
        %1589 = vmatpush1.msra.mxu0 %v1588
        %v1590 = vand.u32 %v1065, 4294901760
        %v1591 = vsub.f32 %v1065, %v1590
        %v1592 = vand.u32 %v1591, 4294901760
        %1593 = vmatprep.subr.mxu0 %v1592
        %v1594 = vand.u32 %v1064, 4294901760
        %v1595 = vsub.f32 %v1064, %v1594
        %v1596 = vand.u32 %v1595, 4294901760
        %1597 = vmatpush1.msra.mxu0 %v1596
        %v1598 = vand.u32 %v1067, 4294901760
        %v1599 = vsub.f32 %v1067, %v1598
        %v1600 = vand.u32 %v1599, 4294901760
        %1601 = vmatprep.subr.mxu0 %v1600
        %v1602 = vand.u32 %v1066, 4294901760
        %v1603 = vsub.f32 %v1066, %v1602
        %v1604 = vand.u32 %v1603, 4294901760
        %1605 = vmatpush1.msra.mxu0 %v1604
        %v1606 = vand.u32 %v1069, 4294901760
        %v1607 = vsub.f32 %v1069, %v1606
        %v1608 = vand.u32 %v1607, 4294901760
        %1609 = vmatprep.subr.mxu0 %v1608
        %v1610 = vand.u32 %v1068, 4294901760
        %v1611 = vsub.f32 %v1068, %v1610
        %v1612 = vand.u32 %v1611, 4294901760
        %1613 = vmatpush1.msra.mxu0 %v1612
        %v1614 = vand.u32 %v1090, 4294901760
        %v1615 = vsub.f32 %v1090, %v1614
        %v1616 = vand.u32 %v1615, 4294901760
        %1617 = vmatprep.subr.mxu0 %v1616
        %v1618 = vand.u32 %v1087, 4294901760
        %v1619 = vsub.f32 %v1087, %v1618
        %v1620 = vand.u32 %v1619, 4294901760
        %1621 = vmatpush1.msra.mxu0 %v1620
        %1622 = vmatprep.subr.mxu0 0.0
        %1623 = vmatpush1.msra.mxu0 0.0
        %1624 = vmatprep.subr.mxu0 0.0
        %1625 = vmatpush1.msra.mxu0 0.0
        %1626 = vmatprep.subr.mxu0 0.0
        %1627 = vmatpush1.msra.mxu0 0.0
        %1628 = vmatprep.subr.mxu0 0.0
        %1629 = vmatpush1.msra.mxu0 0.0
        %1630 = vmatprep.subr.mxu0 0.0
        %1631 = vmatpush1.msra.mxu0 0.0
        %1632 = vmatprep.subr.mxu0 0.0
        %1633 = vmatpush1.msra.mxu0 0.0
        %1634 = vmatprep.subr.mxu0 0.0
        %1635 = vmatpush1.msra.mxu0 0.0
        %1636 = vmatprep.subr.mxu0 0.0
        %1637 = vmatpush1.msra.mxu0 0.0
        %1638 = vmatprep.subr.mxu0 0.0
        %1639 = vmatpush1.msra.mxu0 0.0
        %1640 = vmatprep.subr.mxu0 0.0
        %1641 = vmatpush1.msra.mxu0 0.0
        %1642 = vmatprep.subr.mxu0 0.0
        %1643 = vmatpush1.msra.mxu0 0.0
        %1644 = vmatprep.subr.mxu0 0.0
        %1645 = vmatpush1.msra.mxu0 0.0
        %1646 = vmatprep.subr.mxu0 0.0
        %1647 = vmatpush1.msra.mxu0 0.0
        %1648 = vmatprep.subr.mxu0 0.0
        %1649 = vmatpush1.msra.mxu0 0.0
        %1650 = vmatprep.subr.mxu0 0.0
        %1651 = vmatpush1.msra.mxu0 0.0
        %1652 = vmatprep.subr.mxu0 0.0
        %1653 = vmatpush1.msra.mxu0 0.0
        %1654 = vmatprep.subr.mxu0 0.0
        %1655 = vmatpush1.msra.mxu0 0.0
        %1656 = vmatprep.subr.mxu0 0.0
        %1657 = vmatpush1.msra.mxu0 0.0
        %1658 = vmatprep.subr.mxu0 0.0
        %1659 = vmatpush1.msra.mxu0 0.0
        %1660 = vmatprep.subr.mxu0 0.0
        %1661 = vmatpush1.msra.mxu0 0.0
        %1662 = vmatprep.subr.mxu0 0.0
        %1663 = vmatpush1.msra.mxu0 0.0
        %1664 = vmatprep.subr.mxu0 0.0
        %1665 = vmatpush1.msra.mxu0 0.0
        %1666 = vmatprep.subr.mxu0 0.0
        %1667 = vmatpush1.msra.mxu0 0.0
        %1668 = vmatprep.subr.mxu0 0.0
        %1669 = vmatpush1.msra.mxu0 0.0
        %1670 = vmatprep.subr.mxu0 0.0
        %1671 = vmatpush1.msra.mxu0 0.0
        %1672 = vmatprep.subr.mxu0 0.0
        %1673 = vmatpush1.msra.mxu0 0.0
        %1674 = vmatprep.subr.mxu0 0.0
        %1675 = vmatpush1.msra.mxu0 0.0
        %1676 = vmatprep.mubr.f32.mxu0 0.0
        %v1677 = vand.u32 %v1074, 4294901760
        %1678 = vmatmul.mubr.f32.gmra.mrb[0].mxu0 %v1677
        %v1679 = vpop.f32.mrb[0].mxu0
        %v1680 = vadd.f32 %v1551, %v1679
        %v1681 = vpop.f32.mrb[0].mxu0
        %v1682 = vadd.f32 %v1553, %v1681
        %1683 = vmatprep.mubr.f32.mxu0 0.0
        %v1684 = vand.u32 %v1077, 4294901760
        %1685 = vmatmul.mubr.f32.gmra.mrb[0].mxu0 %v1684
        %v1686 = vpop.f32.mrb[0].mxu0
        %v1687 = vadd.f32 %v1560, %v1686
        %v1688 = vpop.f32.mrb[0].mxu0
        %v1689 = vadd.f32 %v1562, %v1688
        %1690 = vmatprep.mubr.f32.mxu0 0.0
        %v1691 = vand.u32 %v1080, 4294901760
        %1692 = vmatmul.mubr.f32.gmra.mrb[0].mxu0 %v1691
        %v1693 = vpop.f32.mrb[0].mxu0
        %v1694 = vadd.f32 %v1569, %v1693
        %v1695 = vpop.f32.mrb[0].mxu0
        %v1696 = vadd.f32 %v1571, %v1695
        %1697 = vmatprep.mubr.f32.mxu0 0.0
        %v1698 = vand.u32 %v1083, 4294901760
        %1699 = vmatmul.mubr.f32.gmra.mrb[0].mxu0 %v1698
        %v1700 = vpop.f32.mrb[0].mxu0
        %v1701 = vadd.f32 %v1578, %v1700
        %v1702 = vpop.f32.mrb[0].mxu0
        %v1703 = vadd.f32 %v1580, %v1702
        %1704 = vdwg.mxu0
        %v1705 = vand.u32 %v1063, 4294901760
        %1706 = vmatprep.subr.mxu0 %v1705
        %v1707 = vand.u32 %v1062, 4294901760
        %1708 = vmatpush1.msra.mxu0 %v1707
        %v1709 = vand.u32 %v1065, 4294901760
        %1710 = vmatprep.subr.mxu0 %v1709
        %v1711 = vand.u32 %v1064, 4294901760
        %1712 = vmatpush1.msra.mxu0 %v1711
        %v1713 = vand.u32 %v1067, 4294901760
        %1714 = vmatprep.subr.mxu0 %v1713
        %v1715 = vand.u32 %v1066, 4294901760
        %1716 = vmatpush1.msra.mxu0 %v1715
        %v1717 = vand.u32 %v1069, 4294901760
        %1718 = vmatprep.subr.mxu0 %v1717
        %v1719 = vand.u32 %v1068, 4294901760
        %1720 = vmatpush1.msra.mxu0 %v1719
        %v1721 = vand.u32 %v1090, 4294901760
        %1722 = vmatprep.subr.mxu0 %v1721
        %v1723 = vand.u32 %v1087, 4294901760
        %1724 = vmatpush1.msra.mxu0 %v1723
        %1725 = vmatprep.subr.mxu0 0.0
        %1726 = vmatpush1.msra.mxu0 0.0
        %1727 = vmatprep.subr.mxu0 0.0
        %1728 = vmatpush1.msra.mxu0 0.0
        %1729 = vmatprep.subr.mxu0 0.0
        %1730 = vmatpush1.msra.mxu0 0.0
        %1731 = vmatprep.subr.mxu0 0.0
        %1732 = vmatpush1.msra.mxu0 0.0
        %1733 = vmatprep.subr.mxu0 0.0
        %1734 = vmatpush1.msra.mxu0 0.0
        %1735 = vmatprep.subr.mxu0 0.0
        %1736 = vmatpush1.msra.mxu0 0.0
        %1737 = vmatprep.subr.mxu0 0.0
        %1738 = vmatpush1.msra.mxu0 0.0
        %1739 = vmatprep.subr.mxu0 0.0
        %1740 = vmatpush1.msra.mxu0 0.0
        %1741 = vmatprep.subr.mxu0 0.0
        %1742 = vmatpush1.msra.mxu0 0.0
        %1743 = vmatprep.subr.mxu0 0.0
        %1744 = vmatpush1.msra.mxu0 0.0
        %1745 = vmatprep.subr.mxu0 0.0
        %1746 = vmatpush1.msra.mxu0 0.0
        %1747 = vmatprep.subr.mxu0 0.0
        %1748 = vmatpush1.msra.mxu0 0.0
        %1749 = vmatprep.subr.mxu0 0.0
        %1750 = vmatpush1.msra.mxu0 0.0
        %1751 = vmatprep.subr.mxu0 0.0
        %1752 = vmatpush1.msra.mxu0 0.0
        %1753 = vmatprep.subr.mxu0 0.0
        %1754 = vmatpush1.msra.mxu0 0.0
        %1755 = vmatprep.subr.mxu0 0.0
        %1756 = vmatpush1.msra.mxu0 0.0
        %1757 = vmatprep.subr.mxu0 0.0
        %1758 = vmatpush1.msra.mxu0 0.0
        %1759 = vmatprep.subr.mxu0 0.0
        %1760 = vmatpush1.msra.mxu0 0.0
        %1761 = vmatprep.subr.mxu0 0.0
        %1762 = vmatpush1.msra.mxu0 0.0
        %1763 = vmatprep.subr.mxu0 0.0
        %1764 = vmatpush1.msra.mxu0 0.0
        %1765 = vmatprep.subr.mxu0 0.0
        %1766 = vmatpush1.msra.mxu0 0.0
        %1767 = vmatprep.subr.mxu0 0.0
        %1768 = vmatpush1.msra.mxu0 0.0
        %1769 = vmatprep.subr.mxu0 0.0
        %1770 = vmatpush1.msra.mxu0 0.0
        %1771 = vmatprep.subr.mxu0 0.0
        %1772 = vmatpush1.msra.mxu0 0.0
        %1773 = vmatprep.subr.mxu0 0.0
        %1774 = vmatpush1.msra.mxu0 0.0
        %1775 = vmatprep.subr.mxu0 0.0
        %1776 = vmatpush1.msra.mxu0 0.0
        %1777 = vmatprep.subr.mxu0 0.0
        %1778 = vmatpush1.msra.mxu0 0.0
        %1779 = vmatprep.mubr.f32.mxu0 0.0
        %v1780 = vand.u32 %v1074, 4294901760
        %1781 = vmatmul.mubr.f32.gmra.mrb[0].mxu0 %v1780
        %v1782 = vpop.f32.mrb[0].mxu0
        %v1783 = vadd.f32 %v1680, %v1782
        %v1784 = vpop.f32.mrb[0].mxu0
        %v1785 = vadd.f32 %v1682, %v1784
        %1786 = vmatprep.mubr.f32.mxu0 0.0
        %v1787 = vand.u32 %v1077, 4294901760
        %1788 = vmatmul.mubr.f32.gmra.mrb[0].mxu0 %v1787
        %v1789 = vpop.f32.mrb[0].mxu0
        %v1790 = vadd.f32 %v1687, %v1789
        %v1791 = vpop.f32.mrb[0].mxu0
        %v1792 = vadd.f32 %v1689, %v1791
        %1793 = vmatprep.mubr.f32.mxu0 0.0
        %v1794 = vand.u32 %v1080, 4294901760
        %1795 = vmatmul.mubr.f32.gmra.mrb[0].mxu0 %v1794
        %v1796 = vpop.f32.mrb[0].mxu0
        %v1797 = vadd.f32 %v1694, %v1796
        %v1798 = vpop.f32.mrb[0].mxu0
        %v1799 = vadd.f32 %v1696, %v1798
        %1800 = vmatprep.mubr.f32.mxu0 0.0
        %v1801 = vand.u32 %v1083, 4294901760
        %1802 = vmatmul.mubr.f32.gmra.mrb[0].mxu0 %v1801
        %v1803 = vpop.f32.mrb[0].mxu0
        %v1804 = vadd.f32 %v1701, %v1803
        %v1805 = vpop.f32.mrb[0].mxu0
        %v1806 = vadd.f32 %v1703, %v1805
        %1807 = vdwg.mxu0
        %v1808 = vmul.f32 %v1783, 0.31830987
        %v1809 = vmul.f32 %v1785, 0.31830987
        %v1810 = vmul.f32 %v1790, 0.31830987
        %v1811 = vmul.f32 %v1792, 0.31830987
        %v1812 = vmul.f32 %v1797, 0.31830987
        %v1813 = vmul.f32 %v1799, 0.31830987
        %v1814 = vmul.f32 %v1804, 0.31830987
        %v1815 = vmul.f32 %v1806, 0.31830987
        %v1816 = vadd.f32 %v1808, 0.5
        %v1817 = vadd.f32 %v1809, 0.5
        %v1818 = vadd.f32 %v1810, 0.5
        %v1819 = vadd.f32 %v1811, 0.5
        %v1820 = vadd.f32 %v1812, 0.5
        %v1821 = vadd.f32 %v1813, 0.5
        %v1822 = vadd.f32 %v1814, 0.5
        %v1823 = vadd.f32 %v1815, 0.5
        %v1824 = vfloor.f32 %v1816
        %v1825 = vfloor.f32 %v1817
        %v1826 = vfloor.f32 %v1818
        %v1827 = vfloor.f32 %v1819
        %v1828 = vfloor.f32 %v1820
        %v1829 = vfloor.f32 %v1821
        %v1830 = vfloor.f32 %v1822
        %v1831 = vfloor.f32 %v1823
        %v1832 = vmul.f32 %v1824, 3.1414795
        %v1833 = vmul.f32 %v1825, 3.1414795
        %v1834 = vmul.f32 %v1826, 3.1414795
        %v1835 = vmul.f32 %v1827, 3.1414795
        %v1836 = vmul.f32 %v1828, 3.1414795
        %v1837 = vmul.f32 %v1829, 3.1414795
        %v1838 = vmul.f32 %v1830, 3.1414795
        %v1839 = vmul.f32 %v1831, 3.1414795
        %v1840 = vsub.f32 %v1783, %v1832
        %v1841 = vsub.f32 %v1785, %v1833
        %v1842 = vsub.f32 %v1790, %v1834
        %v1843 = vsub.f32 %v1792, %v1835
        %v1844 = vsub.f32 %v1797, %v1836
        %v1845 = vsub.f32 %v1799, %v1837
        %v1846 = vsub.f32 %v1804, %v1838
        %v1847 = vsub.f32 %v1806, %v1839
        %v1848 = vmul.f32 %v1824, 0.00011315942
        %v1849 = vmul.f32 %v1825, 0.00011315942
        %v1850 = vmul.f32 %v1826, 0.00011315942
        %v1851 = vmul.f32 %v1827, 0.00011315942
        %v1852 = vmul.f32 %v1828, 0.00011315942
        %v1853 = vmul.f32 %v1829, 0.00011315942
        %v1854 = vmul.f32 %v1830, 0.00011315942
        %v1855 = vmul.f32 %v1831, 0.00011315942
        %v1856 = vsub.f32 %v1840, %v1848
        %v1857 = vsub.f32 %v1841, %v1849
        %v1858 = vsub.f32 %v1842, %v1850
        %v1859 = vsub.f32 %v1843, %v1851
        %v1860 = vsub.f32 %v1844, %v1852
        %v1861 = vsub.f32 %v1845, %v1853
        %v1862 = vsub.f32 %v1846, %v1854
        %v1863 = vsub.f32 %v1847, %v1855
        %v1864 = vmul.f32 %v1824, 1.9841873e-09
        %v1865 = vmul.f32 %v1825, 1.9841873e-09
        %v1866 = vmul.f32 %v1826, 1.9841873e-09
        %v1867 = vmul.f32 %v1827, 1.9841873e-09
        %v1868 = vmul.f32 %v1828, 1.9841873e-09
        %v1869 = vmul.f32 %v1829, 1.9841873e-09
        %v1870 = vmul.f32 %v1830, 1.9841873e-09
        %v1871 = vmul.f32 %v1831, 1.9841873e-09
        %v1872 = vsub.f32 %v1856, %v1864
        %v1873 = vsub.f32 %v1857, %v1865
        %v1874 = vsub.f32 %v1858, %v1866
        %v1875 = vsub.f32 %v1859, %v1867
        %v1876 = vsub.f32 %v1860, %v1868
        %v1877 = vsub.f32 %v1861, %v1869
        %v1878 = vsub.f32 %v1862, %v1870
        %v1879 = vsub.f32 %v1863, %v1871
        %v1880 = vmul.f32 %v1872, %v1872
        %v1881 = vmul.f32 %v1873, %v1873
        %v1882 = vmul.f32 %v1874, %v1874
        %v1883 = vmul.f32 %v1875, %v1875
        %v1884 = vmul.f32 %v1876, %v1876
        %v1885 = vmul.f32 %v1877, %v1877
        %v1886 = vmul.f32 %v1878, %v1878
        %v1887 = vmul.f32 %v1879, %v1879
        %v1888 = vmul.f32 %v1880, 2.608316e-06
        %v1889 = vmul.f32 %v1881, 2.608316e-06
        %v1890 = vmul.f32 %v1882, 2.608316e-06
        %v1891 = vmul.f32 %v1883, 2.608316e-06
        %v1892 = vmul.f32 %v1884, 2.608316e-06
        %v1893 = vmul.f32 %v1885, 2.608316e-06
        %v1894 = vmul.f32 %v1886, 2.608316e-06
        %v1895 = vmul.f32 %v1887, 2.608316e-06
        %v1896 = vadd.f32 %v1888, -0.0001981069
        %v1897 = vadd.f32 %v1889, -0.0001981069
        %v1898 = vadd.f32 %v1890, -0.0001981069
        %v1899 = vadd.f32 %v1891, -0.0001981069
        %v1900 = vadd.f32 %v1892, -0.0001981069
        %v1901 = vadd.f32 %v1893, -0.0001981069
        %v1902 = vadd.f32 %v1894, -0.0001981069
        %v1903 = vadd.f32 %v1895, -0.0001981069
        %v1904 = vmul.f32 %v1896, %v1880
        %v1905 = vmul.f32 %v1897, %v1881
        %v1906 = vmul.f32 %v1898, %v1882
        %v1907 = vmul.f32 %v1899, %v1883
        %v1908 = vmul.f32 %v1900, %v1884
        %v1909 = vmul.f32 %v1901, %v1885
        %v1910 = vmul.f32 %v1902, %v1886
        %v1911 = vmul.f32 %v1903, %v1887
        %v1912 = vadd.f32 %v1904, 0.008333079
        %v1913 = vadd.f32 %v1905, 0.008333079
        %v1914 = vadd.f32 %v1906, 0.008333079
        %v1915 = vadd.f32 %v1907, 0.008333079
        %v1916 = vadd.f32 %v1908, 0.008333079
        %v1917 = vadd.f32 %v1909, 0.008333079
        %v1918 = vadd.f32 %v1910, 0.008333079
        %v1919 = vadd.f32 %v1911, 0.008333079
        %v1920 = vmul.f32 %v1912, %v1880
        %v1921 = vmul.f32 %v1913, %v1881
        %v1922 = vmul.f32 %v1914, %v1882
        %v1923 = vmul.f32 %v1915, %v1883
        %v1924 = vmul.f32 %v1916, %v1884
        %v1925 = vmul.f32 %v1917, %v1885
        %v1926 = vmul.f32 %v1918, %v1886
        %v1927 = vmul.f32 %v1919, %v1887
        %v1928 = vadd.f32 %v1920, -0.1666666
        %v1929 = vadd.f32 %v1921, -0.1666666
        %v1930 = vadd.f32 %v1922, -0.1666666
        %v1931 = vadd.f32 %v1923, -0.1666666
        %v1932 = vadd.f32 %v1924, -0.1666666
        %v1933 = vadd.f32 %v1925, -0.1666666
        %v1934 = vadd.f32 %v1926, -0.1666666
        %v1935 = vadd.f32 %v1927, -0.1666666
        %v1936 = vmul.f32 %v1880, %v1872
        %v1937 = vmul.f32 %v1881, %v1873
        %v1938 = vmul.f32 %v1882, %v1874
        %v1939 = vmul.f32 %v1883, %v1875
        %v1940 = vmul.f32 %v1884, %v1876
        %v1941 = vmul.f32 %v1885, %v1877
        %v1942 = vmul.f32 %v1886, %v1878
        %v1943 = vmul.f32 %v1887, %v1879
        %v1944 = vmul.f32 %v1936, %v1928
        %v1945 = vmul.f32 %v1937, %v1929
        %v1946 = vmul.f32 %v1938, %v1930
        %v1947 = vmul.f32 %v1939, %v1931
        %v1948 = vmul.f32 %v1940, %v1932
        %v1949 = vmul.f32 %v1941, %v1933
        %v1950 = vmul.f32 %v1942, %v1934
        %v1951 = vmul.f32 %v1943, %v1935
        %v1952 = vadd.f32 %v1944, %v1872
        %v1953 = vadd.f32 %v1945, %v1873
        %v1954 = vadd.f32 %v1946, %v1874
        %v1955 = vadd.f32 %v1947, %v1875
        %v1956 = vadd.f32 %v1948, %v1876
        %v1957 = vadd.f32 %v1949, %v1877
        %v1958 = vadd.f32 %v1950, %v1878
        %v1959 = vadd.f32 %v1951, %v1879
        %v1960 = vcvt.f32.s32.to.zero.pseudo %v1824
        %v1961 = vcvt.f32.s32.to.zero.pseudo %v1825
        %v1962 = vcvt.f32.s32.to.zero.pseudo %v1826
        %v1963 = vcvt.f32.s32.to.zero.pseudo %v1827
        %v1964 = vcvt.f32.s32.to.zero.pseudo %v1828
        %v1965 = vcvt.f32.s32.to.zero.pseudo %v1829
        %v1966 = vcvt.f32.s32.to.zero.pseudo %v1830
        %v1967 = vcvt.f32.s32.to.zero.pseudo %v1831
        %v1968 = vand.u32 %v1960, 1
        %v1969 = vand.u32 %v1961, 1
        %v1970 = vand.u32 %v1962, 1
        %v1971 = vand.u32 %v1963, 1
        %v1972 = vand.u32 %v1964, 1
        %v1973 = vand.u32 %v1965, 1
        %v1974 = vand.u32 %v1966, 1
        %v1975 = vand.u32 %v1967, 1
        %vm1976 = vcmp.eq.s32.totalorder %v1968, 1
        %vm1977 = vcmp.eq.s32.totalorder %v1969, 1
        %vm1978 = vcmp.eq.s32.totalorder %v1970, 1
        %vm1979 = vcmp.eq.s32.totalorder %v1971, 1
        %vm1980 = vcmp.eq.s32.totalorder %v1972, 1
        %vm1981 = vcmp.eq.s32.totalorder %v1973, 1
        %vm1982 = vcmp.eq.s32.totalorder %v1974, 1
        %vm1983 = vcmp.eq.s32.totalorder %v1975, 1
        %v1984 = vsub.f32 0.0, %v1952
        %v1985 = vsub.f32 0.0, %v1953
        %v1986 = vsub.f32 0.0, %v1954
        %v1987 = vsub.f32 0.0, %v1955
        %v1988 = vsub.f32 0.0, %v1956
        %v1989 = vsub.f32 0.0, %v1957
        %v1990 = vsub.f32 0.0, %v1958
        %v1991 = vsub.f32 0.0, %v1959
        %v1992 = vsel %vm1976, %v1984, %v1952
        %v1993 = vsel %vm1977, %v1985, %v1953
        %v1994 = vsel %vm1978, %v1986, %v1954
        %v1995 = vsel %vm1979, %v1987, %v1955
        %v1996 = vsel %vm1980, %v1988, %v1956
        %v1997 = vsel %vm1981, %v1989, %v1957
        %v1998 = vsel %vm1982, %v1990, %v1958
        %v1999 = vsel %vm1983, %v1991, %v1959
        %2000 = vst [vmem:[#allocation2] sm:$0xff] %v1992
        %2001 = vst [vmem:[#allocation2 + $0x8] sm:$0xff] %v1993
        %2002 = vst [vmem:[#allocation2 + $0x10] sm:$0xff] %v1994
        %2003 = vst [vmem:[#allocation2 + $0x18] sm:$0xff] %v1995
        %2004 = vst [vmem:[#allocation2 + $0x20] sm:$0xff] %v1996
        %2005 = vst [vmem:[#allocation2 + $0x28] sm:$0xff] %v1997
        %2006 = vst [vmem:[#allocation2 + $0x30] sm:$0xff] %v1998
        %2007 = vst [vmem:[#allocation2 + $0x38] sm:$0xff] %v1999
        %s2008 = scalar_lea.vmem [#allocation3], 32
        %v2009 = vld [vmem:[%s2008] sm:$0xff]
        %v2010 = vld [vmem:[%s2008 + $0x8] sm:$0xff]
        %v2011 = vld [vmem:[%s2008 + $0x10] sm:$0xff]
        %v2012 = vld [vmem:[%s2008 + $0x18] sm:$0xff]
        %v2013 = vld [vmem:[#allocation2] sm:$0xff]
        %v2014 = vld [vmem:[#allocation2 + $0x8] sm:$0xff]
        %v2015 = vld [vmem:[#allocation2 + $0x10] sm:$0xff]
        %v2016 = vld [vmem:[#allocation2 + $0x18] sm:$0xff]
        %v2017 = vld [vmem:[#allocation2 + $0x20] sm:$0xff]
        %v2018 = vld [vmem:[#allocation2 + $0x28] sm:$0xff]
        %v2019 = vld [vmem:[#allocation2 + $0x30] sm:$0xff]
        %v2020 = vld [vmem:[#allocation2 + $0x38] sm:$0xff]
        %v2021 = vld [vmem:[#allocation2 + $0x40] sm:$0x1]
        %v2022 = vld [vmem:[#allocation2 + $0x48] sm:$0x1]
        %v2024 = vsel %vm1072, %v2009, 0
        %v2027 = vsel %vm1072, %v2010, 0
        %v2030 = vsel %vm1072, %v2011, 0
        %v2033 = vsel %vm1072, %v2012, 0
        %v2036 = vsel %vm1085, %v2021, 0
        %v2039 = vsel %vm1085, %v2022, 0
        %v2041 = vand.u32 %v2014, 4294901760
        %2042 = vmatprep.subr.mxu0 %v2041
        %v2043 = vand.u32 %v2013, 4294901760
        %2044 = vmatpush1.msra.mxu0 %v2043
        %v2045 = vand.u32 %v2016, 4294901760
        %2046 = vmatprep.subr.mxu0 %v2045
        %v2047 = vand.u32 %v2015, 4294901760
        %2048 = vmatpush1.msra.mxu0 %v2047
        %v2049 = vand.u32 %v2018, 4294901760
        %2050 = vmatprep.subr.mxu0 %v2049
        %v2051 = vand.u32 %v2017, 4294901760
        %2052 = vmatpush1.msra.mxu0 %v2051
        %v2053 = vand.u32 %v2020, 4294901760
        %2054 = vmatprep.subr.mxu0 %v2053
        %v2055 = vand.u32 %v2019, 4294901760
        %2056 = vmatpush1.msra.mxu0 %v2055
        %v2057 = vand.u32 %v2039, 4294901760
        %2058 = vmatprep.subr.mxu0 %v2057
        %v2059 = vand.u32 %v2036, 4294901760
        %2060 = vmatpush1.msra.mxu0 %v2059
        %2061 = vmatprep.subr.mxu0 0.0
        %2062 = vmatpush1.msra.mxu0 0.0
        %2063 = vmatprep.subr.mxu0 0.0
        %2064 = vmatpush1.msra.mxu0 0.0
        %2065 = vmatprep.subr.mxu0 0.0
        %2066 = vmatpush1.msra.mxu0 0.0
        %2067 = vmatprep.subr.mxu0 0.0
        %2068 = vmatpush1.msra.mxu0 0.0
        %2069 = vmatprep.subr.mxu0 0.0
        %2070 = vmatpush1.msra.mxu0 0.0
        %2071 = vmatprep.subr.mxu0 0.0
        %2072 = vmatpush1.msra.mxu0 0.0
        %2073 = vmatprep.subr.mxu0 0.0
        %2074 = vmatpush1.msra.mxu0 0.0
        %2075 = vmatprep.subr.mxu0 0.0
        %2076 = vmatpush1.msra.mxu0 0.0
        %2077 = vmatprep.subr.mxu0 0.0
        %2078 = vmatpush1.msra.mxu0 0.0
        %2079 = vmatprep.subr.mxu0 0.0
        %2080 = vmatpush1.msra.mxu0 0.0
        %2081 = vmatprep.subr.mxu0 0.0
        %2082 = vmatpush1.msra.mxu0 0.0
        %2083 = vmatprep.subr.mxu0 0.0
        %2084 = vmatpush1.msra.mxu0 0.0
        %2085 = vmatprep.subr.mxu0 0.0
        %2086 = vmatpush1.msra.mxu0 0.0
        %2087 = vmatprep.subr.mxu0 0.0
        %2088 = vmatpush1.msra.mxu0 0.0
        %2089 = vmatprep.subr.mxu0 0.0
        %2090 = vmatpush1.msra.mxu0 0.0
        %2091 = vmatprep.subr.mxu0 0.0
        %2092 = vmatpush1.msra.mxu0 0.0
        %2093 = vmatprep.subr.mxu0 0.0
        %2094 = vmatpush1.msra.mxu0 0.0
        %2095 = vmatprep.subr.mxu0 0.0
        %2096 = vmatpush1.msra.mxu0 0.0
        %2097 = vmatprep.subr.mxu0 0.0
        %2098 = vmatpush1.msra.mxu0 0.0
        %2099 = vmatprep.subr.mxu0 0.0
        %2100 = vmatpush1.msra.mxu0 0.0
        %2101 = vmatprep.subr.mxu0 0.0
        %2102 = vmatpush1.msra.mxu0 0.0
        %2103 = vmatprep.subr.mxu0 0.0
        %2104 = vmatpush1.msra.mxu0 0.0
        %2105 = vmatprep.subr.mxu0 0.0
        %2106 = vmatpush1.msra.mxu0 0.0
        %2107 = vmatprep.subr.mxu0 0.0
        %2108 = vmatpush1.msra.mxu0 0.0
        %2109 = vmatprep.subr.mxu0 0.0
        %2110 = vmatpush1.msra.mxu0 0.0
        %2111 = vmatprep.subr.mxu0 0.0
        %2112 = vmatpush1.msra.mxu0 0.0
        %2113 = vmatprep.subr.mxu0 0.0
        %2114 = vmatpush1.msra.mxu0 0.0
        %2115 = vmatprep.mubr.f32.mxu0 0.0
        %v2116 = vand.u32 %v2024, 4294901760
        %v2117 = vsub.f32 %v2024, %v2116
        %v2118 = vand.u32 %v2117, 4294901760
        %v2119 = vsub.f32 %v2117, %v2118
        %v2120 = vand.u32 %v2119, 4294901760
        %2121 = vmatmul.mubr.f32.gmra.mrb[0].mxu0 %v2120
        %v2122 = vpop.f32.mrb[0].mxu0
        %v2123 = vadd.f32 0.0, %v2122
        %v2124 = vpop.f32.mrb[0].mxu0
        %v2125 = vadd.f32 0.0, %v2124
        %2126 = vmatprep.mubr.f32.mxu0 0.0
        %v2127 = vand.u32 %v2027, 4294901760
        %v2128 = vsub.f32 %v2027, %v2127
        %v2129 = vand.u32 %v2128, 4294901760
        %v2130 = vsub.f32 %v2128, %v2129
        %v2131 = vand.u32 %v2130, 4294901760
        %2132 = vmatmul.mubr.f32.gmra.mrb[0].mxu0 %v2131
        %v2133 = vpop.f32.mrb[0].mxu0
        %v2134 = vadd.f32 0.0, %v2133
        %v2135 = vpop.f32.mrb[0].mxu0
        %v2136 = vadd.f32 0.0, %v2135
        %2137 = vmatprep.mubr.f32.mxu0 0.0
        %v2138 = vand.u32 %v2030, 4294901760
        %v2139 = vsub.f32 %v2030, %v2138
        %v2140 = vand.u32 %v2139, 4294901760
        %v2141 = vsub.f32 %v2139, %v2140
        %v2142 = vand.u32 %v2141, 4294901760
        %2143 = vmatmul.mubr.f32.gmra.mrb[0].mxu0 %v2142
        %v2144 = vpop.f32.mrb[0].mxu0
        %v2145 = vadd.f32 0.0, %v2144
        %v2146 = vpop.f32.mrb[0].mxu0
        %v2147 = vadd.f32 0.0, %v2146
        %2148 = vmatprep.mubr.f32.mxu0 0.0
        %v2149 = vand.u32 %v2033, 4294901760
        %v2150 = vsub.f32 %v2033, %v2149
        %v2151 = vand.u32 %v2150, 4294901760
        %v2152 = vsub.f32 %v2150, %v2151
        %v2153 = vand.u32 %v2152, 4294901760
        %2154 = vmatmul.mubr.f32.gmra.mrb[0].mxu0 %v2153
        %v2155 = vpop.f32.mrb[0].mxu0
        %v2156 = vadd.f32 0.0, %v2155
        %v2157 = vpop.f32.mrb[0].mxu0
        %v2158 = vadd.f32 0.0, %v2157
        %2159 = vdwg.mxu0
        %v2160 = vand.u32 %v2014, 4294901760
        %v2161 = vsub.f32 %v2014, %v2160
        %v2162 = vand.u32 %v2161, 4294901760
        %v2163 = vsub.f32 %v2161, %v2162
        %v2164 = vand.u32 %v2163, 4294901760
        %2165 = vmatprep.subr.mxu0 %v2164
        %v2166 = vand.u32 %v2013, 4294901760
        %v2167 = vsub.f32 %v2013, %v2166
        %v2168 = vand.u32 %v2167, 4294901760
        %v2169 = vsub.f32 %v2167, %v2168
        %v2170 = vand.u32 %v2169, 4294901760
        %2171 = vmatpush1.msra.mxu0 %v2170
        %v2172 = vand.u32 %v2016, 4294901760
        %v2173 = vsub.f32 %v2016, %v2172
        %v2174 = vand.u32 %v2173, 4294901760
        %v2175 = vsub.f32 %v2173, %v2174
        %v2176 = vand.u32 %v2175, 4294901760
        %2177 = vmatprep.subr.mxu0 %v2176
        %v2178 = vand.u32 %v2015, 4294901760
        %v2179 = vsub.f32 %v2015, %v2178
        %v2180 = vand.u32 %v2179, 4294901760
        %v2181 = vsub.f32 %v2179, %v2180
        %v2182 = vand.u32 %v2181, 4294901760
        %2183 = vmatpush1.msra.mxu0 %v2182
        %v2184 = vand.u32 %v2018, 4294901760
        %v2185 = vsub.f32 %v2018, %v2184
        %v2186 = vand.u32 %v2185, 4294901760
        %v2187 = vsub.f32 %v2185, %v2186
        %v2188 = vand.u32 %v2187, 4294901760
        %2189 = vmatprep.subr.mxu0 %v2188
        %v2190 = vand.u32 %v2017, 4294901760
        %v2191 = vsub.f32 %v2017, %v2190
        %v2192 = vand.u32 %v2191, 4294901760
        %v2193 = vsub.f32 %v2191, %v2192
        %v2194 = vand.u32 %v2193, 4294901760
        %2195 = vmatpush1.msra.mxu0 %v2194
        %v2196 = vand.u32 %v2020, 4294901760
        %v2197 = vsub.f32 %v2020, %v2196
        %v2198 = vand.u32 %v2197, 4294901760
        %v2199 = vsub.f32 %v2197, %v2198
        %v2200 = vand.u32 %v2199, 4294901760
        %2201 = vmatprep.subr.mxu0 %v2200
        %v2202 = vand.u32 %v2019, 4294901760
        %v2203 = vsub.f32 %v2019, %v2202
        %v2204 = vand.u32 %v2203, 4294901760
        %v2205 = vsub.f32 %v2203, %v2204
        %v2206 = vand.u32 %v2205, 4294901760
        %2207 = vmatpush1.msra.mxu0 %v2206
        %v2208 = vand.u32 %v2039, 4294901760
        %v2209 = vsub.f32 %v2039, %v2208
        %v2210 = vand.u32 %v2209, 4294901760
        %v2211 = vsub.f32 %v2209, %v2210
        %v2212 = vand.u32 %v2211, 4294901760
        %2213 = vmatprep.subr.mxu0 %v2212
        %v2214 = vand.u32 %v2036, 4294901760
        %v2215 = vsub.f32 %v2036, %v2214
        %v2216 = vand.u32 %v2215, 4294901760
        %v2217 = vsub.f32 %v2215, %v2216
        %v2218 = vand.u32 %v2217, 4294901760
        %2219 = vmatpush1.msra.mxu0 %v2218
        %2220 = vmatprep.subr.mxu0 0.0
        %2221 = vmatpush1.msra.mxu0 0.0
        %2222 = vmatprep.subr.mxu0 0.0
        %2223 = vmatpush1.msra.mxu0 0.0
        %2224 = vmatprep.subr.mxu0 0.0
        %2225 = vmatpush1.msra.mxu0 0.0
        %2226 = vmatprep.subr.mxu0 0.0
        %2227 = vmatpush1.msra.mxu0 0.0
        %2228 = vmatprep.subr.mxu0 0.0
        %2229 = vmatpush1.msra.mxu0 0.0
        %2230 = vmatprep.subr.mxu0 0.0
        %2231 = vmatpush1.msra.mxu0 0.0
        %2232 = vmatprep.subr.mxu0 0.0
        %2233 = vmatpush1.msra.mxu0 0.0
        %2234 = vmatprep.subr.mxu0 0.0
        %2235 = vmatpush1.msra.mxu0 0.0
        %2236 = vmatprep.subr.mxu0 0.0
        %2237 = vmatpush1.msra.mxu0 0.0
        %2238 = vmatprep.subr.mxu0 0.0
        %2239 = vmatpush1.msra.mxu0 0.0
        %2240 = vmatprep.subr.mxu0 0.0
        %2241 = vmatpush1.msra.mxu0 0.0
        %2242 = vmatprep.subr.mxu0 0.0
        %2243 = vmatpush1.msra.mxu0 0.0
        %2244 = vmatprep.subr.mxu0 0.0
        %2245 = vmatpush1.msra.mxu0 0.0
        %2246 = vmatprep.subr.mxu0 0.0
        %2247 = vmatpush1.msra.mxu0 0.0
        %2248 = vmatprep.subr.mxu0 0.0
        %2249 = vmatpush1.msra.mxu0 0.0
        %2250 = vmatprep.subr.mxu0 0.0
        %2251 = vmatpush1.msra.mxu0 0.0
        %2252 = vmatprep.subr.mxu0 0.0
        %2253 = vmatpush1.msra.mxu0 0.0
        %2254 = vmatprep.subr.mxu0 0.0
        %2255 = vmatpush1.msra.mxu0 0.0
        %2256 = vmatprep.subr.mxu0 0.0
        %2257 = vmatpush1.msra.mxu0 0.0
        %2258 = vmatprep.subr.mxu0 0.0
        %2259 = vmatpush1.msra.mxu0 0.0
        %2260 = vmatprep.subr.mxu0 0.0
        %2261 = vmatpush1.msra.mxu0 0.0
        %2262 = vmatprep.subr.mxu0 0.0
        %2263 = vmatpush1.msra.mxu0 0.0
        %2264 = vmatprep.subr.mxu0 0.0
        %2265 = vmatpush1.msra.mxu0 0.0
        %2266 = vmatprep.subr.mxu0 0.0
        %2267 = vmatpush1.msra.mxu0 0.0
        %2268 = vmatprep.subr.mxu0 0.0
        %2269 = vmatpush1.msra.mxu0 0.0
        %2270 = vmatprep.subr.mxu0 0.0
        %2271 = vmatpush1.msra.mxu0 0.0
        %2272 = vmatprep.subr.mxu0 0.0
        %2273 = vmatpush1.msra.mxu0 0.0
        %2274 = vmatprep.mubr.f32.mxu0 0.0
        %v2275 = vand.u32 %v2024, 4294901760
        %2276 = vmatmul.mubr.f32.gmra.mrb[0].mxu0 %v2275
        %v2277 = vpop.f32.mrb[0].mxu0
        %v2278 = vadd.f32 %v2123, %v2277
        %v2279 = vpop.f32.mrb[0].mxu0
        %v2280 = vadd.f32 %v2125, %v2279
        %2281 = vmatprep.mubr.f32.mxu0 0.0
        %v2282 = vand.u32 %v2027, 4294901760
        %2283 = vmatmul.mubr.f32.gmra.mrb[0].mxu0 %v2282
        %v2284 = vpop.f32.mrb[0].mxu0
        %v2285 = vadd.f32 %v2134, %v2284
        %v2286 = vpop.f32.mrb[0].mxu0
        %v2287 = vadd.f32 %v2136, %v2286
        %2288 = vmatprep.mubr.f32.mxu0 0.0
        %v2289 = vand.u32 %v2030, 4294901760
        %2290 = vmatmul.mubr.f32.gmra.mrb[0].mxu0 %v2289
        %v2291 = vpop.f32.mrb[0].mxu0
        %v2292 = vadd.f32 %v2145, %v2291
        %v2293 = vpop.f32.mrb[0].mxu0
        %v2294 = vadd.f32 %v2147, %v2293
        %2295 = vmatprep.mubr.f32.mxu0 0.0
        %v2296 = vand.u32 %v2033, 4294901760
        %2297 = vmatmul.mubr.f32.gmra.mrb[0].mxu0 %v2296
        %v2298 = vpop.f32.mrb[0].mxu0
        %v2299 = vadd.f32 %v2156, %v2298
        %v2300 = vpop.f32.mrb[0].mxu0
        %v2301 = vadd.f32 %v2158, %v2300
        %2302 = vdwg.mxu0
        %v2303 = vand.u32 %v2014, 4294901760
        %v2304 = vsub.f32 %v2014, %v2303
        %2305 = vmatprep.subr.mxu0 %v2304
        %v2306 = vand.u32 %v2013, 4294901760
        %v2307 = vsub.f32 %v2013, %v2306
        %2308 = vmatpush1.msra.mxu0 %v2307
        %v2309 = vand.u32 %v2016, 4294901760
        %v2310 = vsub.f32 %v2016, %v2309
        %2311 = vmatprep.subr.mxu0 %v2310
        %v2312 = vand.u32 %v2015, 4294901760
        %v2313 = vsub.f32 %v2015, %v2312
        %2314 = vmatpush1.msra.mxu0 %v2313
        %v2315 = vand.u32 %v2018, 4294901760
        %v2316 = vsub.f32 %v2018, %v2315
        %2317 = vmatprep.subr.mxu0 %v2316
        %v2318 = vand.u32 %v2017, 4294901760
        %v2319 = vsub.f32 %v2017, %v2318
        %2320 = vmatpush1.msra.mxu0 %v2319
        %v2321 = vand.u32 %v2020, 4294901760
        %v2322 = vsub.f32 %v2020, %v2321
        %2323 = vmatprep.subr.mxu0 %v2322
        %v2324 = vand.u32 %v2019, 4294901760
        %v2325 = vsub.f32 %v2019, %v2324
        %2326 = vmatpush1.msra.mxu0 %v2325
        %v2327 = vand.u32 %v2039, 4294901760
        %v2328 = vsub.f32 %v2039, %v2327
        %2329 = vmatprep.subr.mxu0 %v2328
        %v2330 = vand.u32 %v2036, 4294901760
        %v2331 = vsub.f32 %v2036, %v2330
        %2332 = vmatpush1.msra.mxu0 %v2331
        %2333 = vmatprep.subr.mxu0 0.0
        %2334 = vmatpush1.msra.mxu0 0.0
        %2335 = vmatprep.subr.mxu0 0.0
        %2336 = vmatpush1.msra.mxu0 0.0
        %2337 = vmatprep.subr.mxu0 0.0
        %2338 = vmatpush1.msra.mxu0 0.0
        %2339 = vmatprep.subr.mxu0 0.0
        %2340 = vmatpush1.msra.mxu0 0.0
        %2341 = vmatprep.subr.mxu0 0.0
        %2342 = vmatpush1.msra.mxu0 0.0
        %2343 = vmatprep.subr.mxu0 0.0
        %2344 = vmatpush1.msra.mxu0 0.0
        %2345 = vmatprep.subr.mxu0 0.0
        %2346 = vmatpush1.msra.mxu0 0.0
        %2347 = vmatprep.subr.mxu0 0.0
        %2348 = vmatpush1.msra.mxu0 0.0
        %2349 = vmatprep.subr.mxu0 0.0
        %2350 = vmatpush1.msra.mxu0 0.0
        %2351 = vmatprep.subr.mxu0 0.0
        %2352 = vmatpush1.msra.mxu0 0.0
        %2353 = vmatprep.subr.mxu0 0.0
        %2354 = vmatpush1.msra.mxu0 0.0
        %2355 = vmatprep.subr.mxu0 0.0
        %2356 = vmatpush1.msra.mxu0 0.0
        %2357 = vmatprep.subr.mxu0 0.0
        %2358 = vmatpush1.msra.mxu0 0.0
        %2359 = vmatprep.subr.mxu0 0.0
        %2360 = vmatpush1.msra.mxu0 0.0
        %2361 = vmatprep.subr.mxu0 0.0
        %2362 = vmatpush1.msra.mxu0 0.0
        %2363 = vmatprep.subr.mxu0 0.0
        %2364 = vmatpush1.msra.mxu0 0.0
        %2365 = vmatprep.subr.mxu0 0.0
        %2366 = vmatpush1.msra.mxu0 0.0
        %2367 = vmatprep.subr.mxu0 0.0
        %2368 = vmatpush1.msra.mxu0 0.0
        %2369 = vmatprep.subr.mxu0 0.0
        %2370 = vmatpush1.msra.mxu0 0.0
        %2371 = vmatprep.subr.mxu0 0.0
        %2372 = vmatpush1.msra.mxu0 0.0
        %2373 = vmatprep.subr.mxu0 0.0
        %2374 = vmatpush1.msra.mxu0 0.0
        %2375 = vmatprep.subr.mxu0 0.0
        %2376 = vmatpush1.msra.mxu0 0.0
        %2377 = vmatprep.subr.mxu0 0.0
        %2378 = vmatpush1.msra.mxu0 0.0
        %2379 = vmatprep.subr.mxu0 0.0
        %2380 = vmatpush1.msra.mxu0 0.0
        %2381 = vmatprep.subr.mxu0 0.0
        %2382 = vmatpush1.msra.mxu0 0.0
        %2383 = vmatprep.subr.mxu0 0.0
        %2384 = vmatpush1.msra.mxu0 0.0
        %2385 = vmatprep.subr.mxu0 0.0
        %2386 = vmatpush1.msra.mxu0 0.0
        %2387 = vmatprep.mubr.f32.mxu0 0.0
        %v2388 = vand.u32 %v2024, 4294901760
        %v2389 = vsub.f32 %v2024, %v2388
        %2390 = vmatmul.mubr.f32.gmra.mrb[0].mxu0 %v2389
        %v2391 = vpop.f32.mrb[0].mxu0
        %v2392 = vadd.f32 %v2278, %v2391
        %v2393 = vpop.f32.mrb[0].mxu0
        %v2394 = vadd.f32 %v2280, %v2393
        %2395 = vmatprep.mubr.f32.mxu0 0.0
        %v2396 = vand.u32 %v2027, 4294901760
        %v2397 = vsub.f32 %v2027, %v2396
        %2398 = vmatmul.mubr.f32.gmra.mrb[0].mxu0 %v2397
        %v2399 = vpop.f32.mrb[0].mxu0
        %v2400 = vadd.f32 %v2285, %v2399
        %v2401 = vpop.f32.mrb[0].mxu0
        %v2402 = vadd.f32 %v2287, %v2401
        %2403 = vmatprep.mubr.f32.mxu0 0.0
        %v2404 = vand.u32 %v2030, 4294901760
        %v2405 = vsub.f32 %v2030, %v2404
        %2406 = vmatmul.mubr.f32.gmra.mrb[0].mxu0 %v2405
        %v2407 = vpop.f32.mrb[0].mxu0
        %v2408 = vadd.f32 %v2292, %v2407
        %v2409 = vpop.f32.mrb[0].mxu0
        %v2410 = vadd.f32 %v2294, %v2409
        %2411 = vmatprep.mubr.f32.mxu0 0.0
        %v2412 = vand.u32 %v2033, 4294901760
        %v2413 = vsub.f32 %v2033, %v2412
        %2414 = vmatmul.mubr.f32.gmra.mrb[0].mxu0 %v2413
        %v2415 = vpop.f32.mrb[0].mxu0
        %v2416 = vadd.f32 %v2299, %v2415
        %v2417 = vpop.f32.mrb[0].mxu0
        %v2418 = vadd.f32 %v2301, %v2417
        %2419 = vdwg.mxu0
        %v2420 = vand.u32 %v2014, 4294901760
        %2421 = vmatprep.subr.mxu0 %v2420
        %v2422 = vand.u32 %v2013, 4294901760
        %2423 = vmatpush1.msra.mxu0 %v2422
        %v2424 = vand.u32 %v2016, 4294901760
        %2425 = vmatprep.subr.mxu0 %v2424
        %v2426 = vand.u32 %v2015, 4294901760
        %2427 = vmatpush1.msra.mxu0 %v2426
        %v2428 = vand.u32 %v2018, 4294901760
        %2429 = vmatprep.subr.mxu0 %v2428
        %v2430 = vand.u32 %v2017, 4294901760
        %2431 = vmatpush1.msra.mxu0 %v2430
        %v2432 = vand.u32 %v2020, 4294901760
        %2433 = vmatprep.subr.mxu0 %v2432
        %v2434 = vand.u32 %v2019, 4294901760
        %2435 = vmatpush1.msra.mxu0 %v2434
        %v2436 = vand.u32 %v2039, 4294901760
        %2437 = vmatprep.subr.mxu0 %v2436
        %v2438 = vand.u32 %v2036, 4294901760
        %2439 = vmatpush1.msra.mxu0 %v2438
        %2440 = vmatprep.subr.mxu0 0.0
        %2441 = vmatpush1.msra.mxu0 0.0
        %2442 = vmatprep.subr.mxu0 0.0
        %2443 = vmatpush1.msra.mxu0 0.0
        %2444 = vmatprep.subr.mxu0 0.0
        %2445 = vmatpush1.msra.mxu0 0.0
        %2446 = vmatprep.subr.mxu0 0.0
        %2447 = vmatpush1.msra.mxu0 0.0
        %2448 = vmatprep.subr.mxu0 0.0
        %2449 = vmatpush1.msra.mxu0 0.0
        %2450 = vmatprep.subr.mxu0 0.0
        %2451 = vmatpush1.msra.mxu0 0.0
        %2452 = vmatprep.subr.mxu0 0.0
        %2453 = vmatpush1.msra.mxu0 0.0
        %2454 = vmatprep.subr.mxu0 0.0
        %2455 = vmatpush1.msra.mxu0 0.0
        %2456 = vmatprep.subr.mxu0 0.0
        %2457 = vmatpush1.msra.mxu0 0.0
        %2458 = vmatprep.subr.mxu0 0.0
        %2459 = vmatpush1.msra.mxu0 0.0
        %2460 = vmatprep.subr.mxu0 0.0
        %2461 = vmatpush1.msra.mxu0 0.0
        %2462 = vmatprep.subr.mxu0 0.0
        %2463 = vmatpush1.msra.mxu0 0.0
        %2464 = vmatprep.subr.mxu0 0.0
        %2465 = vmatpush1.msra.mxu0 0.0
        %2466 = vmatprep.subr.mxu0 0.0
        %2467 = vmatpush1.msra.mxu0 0.0
        %2468 = vmatprep.subr.mxu0 0.0
        %2469 = vmatpush1.msra.mxu0 0.0
        %2470 = vmatprep.subr.mxu0 0.0
        %2471 = vmatpush1.msra.mxu0 0.0
        %2472 = vmatprep.subr.mxu0 0.0
        %2473 = vmatpush1.msra.mxu0 0.0
        %2474 = vmatprep.subr.mxu0 0.0
        %2475 = vmatpush1.msra.mxu0 0.0
        %2476 = vmatprep.subr.mxu0 0.0
        %2477 = vmatpush1.msra.mxu0 0.0
        %2478 = vmatprep.subr.mxu0 0.0
        %2479 = vmatpush1.msra.mxu0 0.0
        %2480 = vmatprep.subr.mxu0 0.0
        %2481 = vmatpush1.msra.mxu0 0.0
        %2482 = vmatprep.subr.mxu0 0.0
        %2483 = vmatpush1.msra.mxu0 0.0
        %2484 = vmatprep.subr.mxu0 0.0
        %2485 = vmatpush1.msra.mxu0 0.0
        %2486 = vmatprep.subr.mxu0 0.0
        %2487 = vmatpush1.msra.mxu0 0.0
        %2488 = vmatprep.subr.mxu0 0.0
        %2489 = vmatpush1.msra.mxu0 0.0
        %2490 = vmatprep.subr.mxu0 0.0
        %2491 = vmatpush1.msra.mxu0 0.0
        %2492 = vmatprep.subr.mxu0 0.0
        %2493 = vmatpush1.msra.mxu0 0.0
        %2494 = vmatprep.mubr.f32.mxu0 0.0
        %v2495 = vand.u32 %v2024, 4294901760
        %v2496 = vsub.f32 %v2024, %v2495
        %v2497 = vand.u32 %v2496, 4294901760
        %2498 = vmatmul.mubr.f32.gmra.mrb[0].mxu0 %v2497
        %v2499 = vpop.f32.mrb[0].mxu0
        %v2500 = vadd.f32 %v2392, %v2499
        %v2501 = vpop.f32.mrb[0].mxu0
        %v2502 = vadd.f32 %v2394, %v2501
        %2503 = vmatprep.mubr.f32.mxu0 0.0
        %v2504 = vand.u32 %v2027, 4294901760
        %v2505 = vsub.f32 %v2027, %v2504
        %v2506 = vand.u32 %v2505, 4294901760
        %2507 = vmatmul.mubr.f32.gmra.mrb[0].mxu0 %v2506
        %v2508 = vpop.f32.mrb[0].mxu0
        %v2509 = vadd.f32 %v2400, %v2508
        %v2510 = vpop.f32.mrb[0].mxu0
        %v2511 = vadd.f32 %v2402, %v2510
        %2512 = vmatprep.mubr.f32.mxu0 0.0
        %v2513 = vand.u32 %v2030, 4294901760
        %v2514 = vsub.f32 %v2030, %v2513
        %v2515 = vand.u32 %v2514, 4294901760
        %2516 = vmatmul.mubr.f32.gmra.mrb[0].mxu0 %v2515
        %v2517 = vpop.f32.mrb[0].mxu0
        %v2518 = vadd.f32 %v2408, %v2517
        %v2519 = vpop.f32.mrb[0].mxu0
        %v2520 = vadd.f32 %v2410, %v2519
        %2521 = vmatprep.mubr.f32.mxu0 0.0
        %v2522 = vand.u32 %v2033, 4294901760
        %v2523 = vsub.f32 %v2033, %v2522
        %v2524 = vand.u32 %v2523, 4294901760
        %2525 = vmatmul.mubr.f32.gmra.mrb[0].mxu0 %v2524
        %v2526 = vpop.f32.mrb[0].mxu0
        %v2527 = vadd.f32 %v2416, %v2526
        %v2528 = vpop.f32.mrb[0].mxu0
        %v2529 = vadd.f32 %v2418, %v2528
        %2530 = vdwg.mxu0
        %v2531 = vand.u32 %v2014, 4294901760
        %v2532 = vsub.f32 %v2014, %v2531
        %v2533 = vand.u32 %v2532, 4294901760
        %2534 = vmatprep.subr.mxu0 %v2533
        %v2535 = vand.u32 %v2013, 4294901760
        %v2536 = vsub.f32 %v2013, %v2535
        %v2537 = vand.u32 %v2536, 4294901760
        %2538 = vmatpush1.msra.mxu0 %v2537
        %v2539 = vand.u32 %v2016, 4294901760
        %v2540 = vsub.f32 %v2016, %v2539
        %v2541 = vand.u32 %v2540, 4294901760
        %2542 = vmatprep.subr.mxu0 %v2541
        %v2543 = vand.u32 %v2015, 4294901760
        %v2544 = vsub.f32 %v2015, %v2543
        %v2545 = vand.u32 %v2544, 4294901760
        %2546 = vmatpush1.msra.mxu0 %v2545
        %v2547 = vand.u32 %v2018, 4294901760
        %v2548 = vsub.f32 %v2018, %v2547
        %v2549 = vand.u32 %v2548, 4294901760
        %2550 = vmatprep.subr.mxu0 %v2549
        %v2551 = vand.u32 %v2017, 4294901760
        %v2552 = vsub.f32 %v2017, %v2551
        %v2553 = vand.u32 %v2552, 4294901760
        %2554 = vmatpush1.msra.mxu0 %v2553
        %v2555 = vand.u32 %v2020, 4294901760
        %v2556 = vsub.f32 %v2020, %v2555
        %v2557 = vand.u32 %v2556, 4294901760
        %2558 = vmatprep.subr.mxu0 %v2557
        %v2559 = vand.u32 %v2019, 4294901760
        %v2560 = vsub.f32 %v2019, %v2559
        %v2561 = vand.u32 %v2560, 4294901760
        %2562 = vmatpush1.msra.mxu0 %v2561
        %v2563 = vand.u32 %v2039, 4294901760
        %v2564 = vsub.f32 %v2039, %v2563
        %v2565 = vand.u32 %v2564, 4294901760
        %2566 = vmatprep.subr.mxu0 %v2565
        %v2567 = vand.u32 %v2036, 4294901760
        %v2568 = vsub.f32 %v2036, %v2567
        %v2569 = vand.u32 %v2568, 4294901760
        %2570 = vmatpush1.msra.mxu0 %v2569
        %2571 = vmatprep.subr.mxu0 0.0
        %2572 = vmatpush1.msra.mxu0 0.0
        %2573 = vmatprep.subr.mxu0 0.0
        %2574 = vmatpush1.msra.mxu0 0.0
        %2575 = vmatprep.subr.mxu0 0.0
        %2576 = vmatpush1.msra.mxu0 0.0
        %2577 = vmatprep.subr.mxu0 0.0
        %2578 = vmatpush1.msra.mxu0 0.0
        %2579 = vmatprep.subr.mxu0 0.0
        %2580 = vmatpush1.msra.mxu0 0.0
        %2581 = vmatprep.subr.mxu0 0.0
        %2582 = vmatpush1.msra.mxu0 0.0
        %2583 = vmatprep.subr.mxu0 0.0
        %2584 = vmatpush1.msra.mxu0 0.0
        %2585 = vmatprep.subr.mxu0 0.0
        %2586 = vmatpush1.msra.mxu0 0.0
        %2587 = vmatprep.subr.mxu0 0.0
        %2588 = vmatpush1.msra.mxu0 0.0
        %2589 = vmatprep.subr.mxu0 0.0
        %2590 = vmatpush1.msra.mxu0 0.0
        %2591 = vmatprep.subr.mxu0 0.0
        %2592 = vmatpush1.msra.mxu0 0.0
        %2593 = vmatprep.subr.mxu0 0.0
        %2594 = vmatpush1.msra.mxu0 0.0
        %2595 = vmatprep.subr.mxu0 0.0
        %2596 = vmatpush1.msra.mxu0 0.0
        %2597 = vmatprep.subr.mxu0 0.0
        %2598 = vmatpush1.msra.mxu0 0.0
        %2599 = vmatprep.subr.mxu0 0.0
        %2600 = vmatpush1.msra.mxu0 0.0
        %2601 = vmatprep.subr.mxu0 0.0
        %2602 = vmatpush1.msra.mxu0 0.0
        %2603 = vmatprep.subr.mxu0 0.0
        %2604 = vmatpush1.msra.mxu0 0.0
        %2605 = vmatprep.subr.mxu0 0.0
        %2606 = vmatpush1.msra.mxu0 0.0
        %2607 = vmatprep.subr.mxu0 0.0
        %2608 = vmatpush1.msra.mxu0 0.0
        %2609 = vmatprep.subr.mxu0 0.0
        %2610 = vmatpush1.msra.mxu0 0.0
        %2611 = vmatprep.subr.mxu0 0.0
        %2612 = vmatpush1.msra.mxu0 0.0
        %2613 = vmatprep.subr.mxu0 0.0
        %2614 = vmatpush1.msra.mxu0 0.0
        %2615 = vmatprep.subr.mxu0 0.0
        %2616 = vmatpush1.msra.mxu0 0.0
        %2617 = vmatprep.subr.mxu0 0.0
        %2618 = vmatpush1.msra.mxu0 0.0
        %2619 = vmatprep.subr.mxu0 0.0
        %2620 = vmatpush1.msra.mxu0 0.0
        %2621 = vmatprep.subr.mxu0 0.0
        %2622 = vmatpush1.msra.mxu0 0.0
        %2623 = vmatprep.subr.mxu0 0.0
        %2624 = vmatpush1.msra.mxu0 0.0
        %2625 = vmatprep.mubr.f32.mxu0 0.0
        %v2626 = vand.u32 %v2024, 4294901760
        %2627 = vmatmul.mubr.f32.gmra.mrb[0].mxu0 %v2626
        %v2628 = vpop.f32.mrb[0].mxu0
        %v2629 = vadd.f32 %v2500, %v2628
        %v2630 = vpop.f32.mrb[0].mxu0
        %v2631 = vadd.f32 %v2502, %v2630
        %2632 = vmatprep.mubr.f32.mxu0 0.0
        %v2633 = vand.u32 %v2027, 4294901760
        %2634 = vmatmul.mubr.f32.gmra.mrb[0].mxu0 %v2633
        %v2635 = vpop.f32.mrb[0].mxu0
        %v2636 = vadd.f32 %v2509, %v2635
        %v2637 = vpop.f32.mrb[0].mxu0
        %v2638 = vadd.f32 %v2511, %v2637
        %2639 = vmatprep.mubr.f32.mxu0 0.0
        %v2640 = vand.u32 %v2030, 4294901760
        %2641 = vmatmul.mubr.f32.gmra.mrb[0].mxu0 %v2640
        %v2642 = vpop.f32.mrb[0].mxu0
        %v2643 = vadd.f32 %v2518, %v2642
        %v2644 = vpop.f32.mrb[0].mxu0
        %v2645 = vadd.f32 %v2520, %v2644
        %2646 = vmatprep.mubr.f32.mxu0 0.0
        %v2647 = vand.u32 %v2033, 4294901760
        %2648 = vmatmul.mubr.f32.gmra.mrb[0].mxu0 %v2647
        %v2649 = vpop.f32.mrb[0].mxu0
        %v2650 = vadd.f32 %v2527, %v2649
        %v2651 = vpop.f32.mrb[0].mxu0
        %v2652 = vadd.f32 %v2529, %v2651
        %2653 = vdwg.mxu0
        %v2654 = vand.u32 %v2014, 4294901760
        %2655 = vmatprep.subr.mxu0 %v2654
        %v2656 = vand.u32 %v2013, 4294901760
        %2657 = vmatpush1.msra.mxu0 %v2656
        %v2658 = vand.u32 %v2016, 4294901760
        %2659 = vmatprep.subr.mxu0 %v2658
        %v2660 = vand.u32 %v2015, 4294901760
        %2661 = vmatpush1.msra.mxu0 %v2660
        %v2662 = vand.u32 %v2018, 4294901760
        %2663 = vmatprep.subr.mxu0 %v2662
        %v2664 = vand.u32 %v2017, 4294901760
        %2665 = vmatpush1.msra.mxu0 %v2664
        %v2666 = vand.u32 %v2020, 4294901760
        %2667 = vmatprep.subr.mxu0 %v2666
        %v2668 = vand.u32 %v2019, 4294901760
        %2669 = vmatpush1.msra.mxu0 %v2668
        %v2670 = vand.u32 %v2039, 4294901760
        %2671 = vmatprep.subr.mxu0 %v2670
        %v2672 = vand.u32 %v2036, 4294901760
        %2673 = vmatpush1.msra.mxu0 %v2672
        %2674 = vmatprep.subr.mxu0 0.0
        %2675 = vmatpush1.msra.mxu0 0.0
        %2676 = vmatprep.subr.mxu0 0.0
        %2677 = vmatpush1.msra.mxu0 0.0
        %2678 = vmatprep.subr.mxu0 0.0
        %2679 = vmatpush1.msra.mxu0 0.0
        %2680 = vmatprep.subr.mxu0 0.0
        %2681 = vmatpush1.msra.mxu0 0.0
        %2682 = vmatprep.subr.mxu0 0.0
        %2683 = vmatpush1.msra.mxu0 0.0
        %2684 = vmatprep.subr.mxu0 0.0
        %2685 = vmatpush1.msra.mxu0 0.0
        %2686 = vmatprep.subr.mxu0 0.0
        %2687 = vmatpush1.msra.mxu0 0.0
        %2688 = vmatprep.subr.mxu0 0.0
        %2689 = vmatpush1.msra.mxu0 0.0
        %2690 = vmatprep.subr.mxu0 0.0
        %2691 = vmatpush1.msra.mxu0 0.0
        %2692 = vmatprep.subr.mxu0 0.0
        %2693 = vmatpush1.msra.mxu0 0.0
        %2694 = vmatprep.subr.mxu0 0.0
        %2695 = vmatpush1.msra.mxu0 0.0
        %2696 = vmatprep.subr.mxu0 0.0
        %2697 = vmatpush1.msra.mxu0 0.0
        %2698 = vmatprep.subr.mxu0 0.0
        %2699 = vmatpush1.msra.mxu0 0.0
        %2700 = vmatprep.subr.mxu0 0.0
        %2701 = vmatpush1.msra.mxu0 0.0
        %2702 = vmatprep.subr.mxu0 0.0
        %2703 = vmatpush1.msra.mxu0 0.0
        %2704 = vmatprep.subr.mxu0 0.0
        %2705 = vmatpush1.msra.mxu0 0.0
        %2706 = vmatprep.subr.mxu0 0.0
        %2707 = vmatpush1.msra.mxu0 0.0
        %2708 = vmatprep.subr.mxu0 0.0
        %2709 = vmatpush1.msra.mxu0 0.0
        %2710 = vmatprep.subr.mxu0 0.0
        %2711 = vmatpush1.msra.mxu0 0.0
        %2712 = vmatprep.subr.mxu0 0.0
        %2713 = vmatpush1.msra.mxu0 0.0
        %2714 = vmatprep.subr.mxu0 0.0
        %2715 = vmatpush1.msra.mxu0 0.0
        %2716 = vmatprep.subr.mxu0 0.0
        %2717 = vmatpush1.msra.mxu0 0.0
        %2718 = vmatprep.subr.mxu0 0.0
        %2719 = vmatpush1.msra.mxu0 0.0
        %2720 = vmatprep.subr.mxu0 0.0
        %2721 = vmatpush1.msra.mxu0 0.0
        %2722 = vmatprep.subr.mxu0 0.0
        %2723 = vmatpush1.msra.mxu0 0.0
        %2724 = vmatprep.subr.mxu0 0.0
        %2725 = vmatpush1.msra.mxu0 0.0
        %2726 = vmatprep.subr.mxu0 0.0
        %2727 = vmatpush1.msra.mxu0 0.0
        %2728 = vmatprep.mubr.f32.mxu0 0.0
        %v2729 = vand.u32 %v2024, 4294901760
        %2730 = vmatmul.mubr.f32.gmra.mrb[0].mxu0 %v2729
        %v2731 = vpop.f32.mrb[0].mxu0
        %v2732 = vadd.f32 %v2629, %v2731
        %v2733 = vpop.f32.mrb[0].mxu0
        %v2734 = vadd.f32 %v2631, %v2733
        %2735 = vmatprep.mubr.f32.mxu0 0.0
        %v2736 = vand.u32 %v2027, 4294901760
        %2737 = vmatmul.mubr.f32.gmra.mrb[0].mxu0 %v2736
        %v2738 = vpop.f32.mrb[0].mxu0
        %v2739 = vadd.f32 %v2636, %v2738
        %v2740 = vpop.f32.mrb[0].mxu0
        %v2741 = vadd.f32 %v2638, %v2740
        %2742 = vmatprep.mubr.f32.mxu0 0.0
        %v2743 = vand.u32 %v2030, 4294901760
        %2744 = vmatmul.mubr.f32.gmra.mrb[0].mxu0 %v2743
        %v2745 = vpop.f32.mrb[0].mxu0
        %v2746 = vadd.f32 %v2643, %v2745
        %v2747 = vpop.f32.mrb[0].mxu0
        %v2748 = vadd.f32 %v2645, %v2747
        %2749 = vmatprep.mubr.f32.mxu0 0.0
        %v2750 = vand.u32 %v2033, 4294901760
        %2751 = vmatmul.mubr.f32.gmra.mrb[0].mxu0 %v2750
        %v2752 = vpop.f32.mrb[0].mxu0
        %v2753 = vadd.f32 %v2650, %v2752
        %v2754 = vpop.f32.mrb[0].mxu0
        %v2755 = vadd.f32 %v2652, %v2754
        %2756 = vdwg.mxu0
        %v2757 = vmul.f32 %v2732, 0.31830987
        %v2758 = vmul.f32 %v2734, 0.31830987
        %v2759 = vmul.f32 %v2739, 0.31830987
        %v2760 = vmul.f32 %v2741, 0.31830987
        %v2761 = vmul.f32 %v2746, 0.31830987
        %v2762 = vmul.f32 %v2748, 0.31830987
        %v2763 = vmul.f32 %v2753, 0.31830987
        %v2764 = vmul.f32 %v2755, 0.31830987
        %v2765 = vadd.f32 %v2757, 0.5
        %v2766 = vadd.f32 %v2758, 0.5
        %v2767 = vadd.f32 %v2759, 0.5
        %v2768 = vadd.f32 %v2760, 0.5
        %v2769 = vadd.f32 %v2761, 0.5
        %v2770 = vadd.f32 %v2762, 0.5
        %v2771 = vadd.f32 %v2763, 0.5
        %v2772 = vadd.f32 %v2764, 0.5
        %v2773 = vfloor.f32 %v2765
        %v2774 = vfloor.f32 %v2766
        %v2775 = vfloor.f32 %v2767
        %v2776 = vfloor.f32 %v2768
        %v2777 = vfloor.f32 %v2769
        %v2778 = vfloor.f32 %v2770
        %v2779 = vfloor.f32 %v2771
        %v2780 = vfloor.f32 %v2772
        %v2781 = vmul.f32 %v2773, 3.1414795
        %v2782 = vmul.f32 %v2774, 3.1414795
        %v2783 = vmul.f32 %v2775, 3.1414795
        %v2784 = vmul.f32 %v2776, 3.1414795
        %v2785 = vmul.f32 %v2777, 3.1414795
        %v2786 = vmul.f32 %v2778, 3.1414795
        %v2787 = vmul.f32 %v2779, 3.1414795
        %v2788 = vmul.f32 %v2780, 3.1414795
        %v2789 = vsub.f32 %v2732, %v2781
        %v2790 = vsub.f32 %v2734, %v2782
        %v2791 = vsub.f32 %v2739, %v2783
        %v2792 = vsub.f32 %v2741, %v2784
        %v2793 = vsub.f32 %v2746, %v2785
        %v2794 = vsub.f32 %v2748, %v2786
        %v2795 = vsub.f32 %v2753, %v2787
        %v2796 = vsub.f32 %v2755, %v2788
        %v2797 = vmul.f32 %v2773, 0.00011315942
        %v2798 = vmul.f32 %v2774, 0.00011315942
        %v2799 = vmul.f32 %v2775, 0.00011315942
        %v2800 = vmul.f32 %v2776, 0.00011315942
        %v2801 = vmul.f32 %v2777, 0.00011315942
        %v2802 = vmul.f32 %v2778, 0.00011315942
        %v2803 = vmul.f32 %v2779, 0.00011315942
        %v2804 = vmul.f32 %v2780, 0.00011315942
        %v2805 = vsub.f32 %v2789, %v2797
        %v2806 = vsub.f32 %v2790, %v2798
        %v2807 = vsub.f32 %v2791, %v2799
        %v2808 = vsub.f32 %v2792, %v2800
        %v2809 = vsub.f32 %v2793, %v2801
        %v2810 = vsub.f32 %v2794, %v2802
        %v2811 = vsub.f32 %v2795, %v2803
        %v2812 = vsub.f32 %v2796, %v2804
        %v2813 = vmul.f32 %v2773, 1.9841873e-09
        %v2814 = vmul.f32 %v2774, 1.9841873e-09
        %v2815 = vmul.f32 %v2775, 1.9841873e-09
        %v2816 = vmul.f32 %v2776, 1.9841873e-09
        %v2817 = vmul.f32 %v2777, 1.9841873e-09
        %v2818 = vmul.f32 %v2778, 1.9841873e-09
        %v2819 = vmul.f32 %v2779, 1.9841873e-09
        %v2820 = vmul.f32 %v2780, 1.9841873e-09
        %v2821 = vsub.f32 %v2805, %v2813
        %v2822 = vsub.f32 %v2806, %v2814
        %v2823 = vsub.f32 %v2807, %v2815
        %v2824 = vsub.f32 %v2808, %v2816
        %v2825 = vsub.f32 %v2809, %v2817
        %v2826 = vsub.f32 %v2810, %v2818
        %v2827 = vsub.f32 %v2811, %v2819
        %v2828 = vsub.f32 %v2812, %v2820
        %v2829 = vmul.f32 %v2821, %v2821
        %v2830 = vmul.f32 %v2822, %v2822
        %v2831 = vmul.f32 %v2823, %v2823
        %v2832 = vmul.f32 %v2824, %v2824
        %v2833 = vmul.f32 %v2825, %v2825
        %v2834 = vmul.f32 %v2826, %v2826
        %v2835 = vmul.f32 %v2827, %v2827
        %v2836 = vmul.f32 %v2828, %v2828
        %v2837 = vmul.f32 %v2829, 2.608316e-06
        %v2838 = vmul.f32 %v2830, 2.608316e-06
        %v2839 = vmul.f32 %v2831, 2.608316e-06
        %v2840 = vmul.f32 %v2832, 2.608316e-06
        %v2841 = vmul.f32 %v2833, 2.608316e-06
        %v2842 = vmul.f32 %v2834, 2.608316e-06
        %v2843 = vmul.f32 %v2835, 2.608316e-06
        %v2844 = vmul.f32 %v2836, 2.608316e-06
        %v2845 = vadd.f32 %v2837, -0.0001981069
        %v2846 = vadd.f32 %v2838, -0.0001981069
        %v2847 = vadd.f32 %v2839, -0.0001981069
        %v2848 = vadd.f32 %v2840, -0.0001981069
        %v2849 = vadd.f32 %v2841, -0.0001981069
        %v2850 = vadd.f32 %v2842, -0.0001981069
        %v2851 = vadd.f32 %v2843, -0.0001981069
        %v2852 = vadd.f32 %v2844, -0.0001981069
        %v2853 = vmul.f32 %v2845, %v2829
        %v2854 = vmul.f32 %v2846, %v2830
        %v2855 = vmul.f32 %v2847, %v2831
        %v2856 = vmul.f32 %v2848, %v2832
        %v2857 = vmul.f32 %v2849, %v2833
        %v2858 = vmul.f32 %v2850, %v2834
        %v2859 = vmul.f32 %v2851, %v2835
        %v2860 = vmul.f32 %v2852, %v2836
        %v2861 = vadd.f32 %v2853, 0.008333079
        %v2862 = vadd.f32 %v2854, 0.008333079
        %v2863 = vadd.f32 %v2855, 0.008333079
        %v2864 = vadd.f32 %v2856, 0.008333079
        %v2865 = vadd.f32 %v2857, 0.008333079
        %v2866 = vadd.f32 %v2858, 0.008333079
        %v2867 = vadd.f32 %v2859, 0.008333079
        %v2868 = vadd.f32 %v2860, 0.008333079
        %v2869 = vmul.f32 %v2861, %v2829
        %v2870 = vmul.f32 %v2862, %v2830
        %v2871 = vmul.f32 %v2863, %v2831
        %v2872 = vmul.f32 %v2864, %v2832
        %v2873 = vmul.f32 %v2865, %v2833
        %v2874 = vmul.f32 %v2866, %v2834
        %v2875 = vmul.f32 %v2867, %v2835
        %v2876 = vmul.f32 %v2868, %v2836
        %v2877 = vadd.f32 %v2869, -0.1666666
        %v2878 = vadd.f32 %v2870, -0.1666666
        %v2879 = vadd.f32 %v2871, -0.1666666
        %v2880 = vadd.f32 %v2872, -0.1666666
        %v2881 = vadd.f32 %v2873, -0.1666666
        %v2882 = vadd.f32 %v2874, -0.1666666
        %v2883 = vadd.f32 %v2875, -0.1666666
        %v2884 = vadd.f32 %v2876, -0.1666666
        %v2885 = vmul.f32 %v2829, %v2821
        %v2886 = vmul.f32 %v2830, %v2822
        %v2887 = vmul.f32 %v2831, %v2823
        %v2888 = vmul.f32 %v2832, %v2824
        %v2889 = vmul.f32 %v2833, %v2825
        %v2890 = vmul.f32 %v2834, %v2826
        %v2891 = vmul.f32 %v2835, %v2827
        %v2892 = vmul.f32 %v2836, %v2828
        %v2893 = vmul.f32 %v2885, %v2877
        %v2894 = vmul.f32 %v2886, %v2878
        %v2895 = vmul.f32 %v2887, %v2879
        %v2896 = vmul.f32 %v2888, %v2880
        %v2897 = vmul.f32 %v2889, %v2881
        %v2898 = vmul.f32 %v2890, %v2882
        %v2899 = vmul.f32 %v2891, %v2883
        %v2900 = vmul.f32 %v2892, %v2884
        %v2901 = vadd.f32 %v2893, %v2821
        %v2902 = vadd.f32 %v2894, %v2822
        %v2903 = vadd.f32 %v2895, %v2823
        %v2904 = vadd.f32 %v2896, %v2824
        %v2905 = vadd.f32 %v2897, %v2825
        %v2906 = vadd.f32 %v2898, %v2826
        %v2907 = vadd.f32 %v2899, %v2827
        %v2908 = vadd.f32 %v2900, %v2828
        %v2909 = vcvt.f32.s32.to.zero.pseudo %v2773
        %v2910 = vcvt.f32.s32.to.zero.pseudo %v2774
        %v2911 = vcvt.f32.s32.to.zero.pseudo %v2775
        %v2912 = vcvt.f32.s32.to.zero.pseudo %v2776
        %v2913 = vcvt.f32.s32.to.zero.pseudo %v2777
        %v2914 = vcvt.f32.s32.to.zero.pseudo %v2778
        %v2915 = vcvt.f32.s32.to.zero.pseudo %v2779
        %v2916 = vcvt.f32.s32.to.zero.pseudo %v2780
        %v2917 = vand.u32 %v2909, 1
        %v2918 = vand.u32 %v2910, 1
        %v2919 = vand.u32 %v2911, 1
        %v2920 = vand.u32 %v2912, 1
        %v2921 = vand.u32 %v2913, 1
        %v2922 = vand.u32 %v2914, 1
        %v2923 = vand.u32 %v2915, 1
        %v2924 = vand.u32 %v2916, 1
        %vm2925 = vcmp.eq.s32.totalorder %v2917, 1
        %vm2926 = vcmp.eq.s32.totalorder %v2918, 1
        %vm2927 = vcmp.eq.s32.totalorder %v2919, 1
        %vm2928 = vcmp.eq.s32.totalorder %v2920, 1
        %vm2929 = vcmp.eq.s32.totalorder %v2921, 1
        %vm2930 = vcmp.eq.s32.totalorder %v2922, 1
        %vm2931 = vcmp.eq.s32.totalorder %v2923, 1
        %vm2932 = vcmp.eq.s32.totalorder %v2924, 1
        %v2933 = vsub.f32 0.0, %v2901
        %v2934 = vsub.f32 0.0, %v2902
        %v2935 = vsub.f32 0.0, %v2903
        %v2936 = vsub.f32 0.0, %v2904
        %v2937 = vsub.f32 0.0, %v2905
        %v2938 = vsub.f32 0.0, %v2906
        %v2939 = vsub.f32 0.0, %v2907
        %v2940 = vsub.f32 0.0, %v2908
        %v2941 = vsel %vm2925, %v2933, %v2901
        %v2942 = vsel %vm2926, %v2934, %v2902
        %v2943 = vsel %vm2927, %v2935, %v2903
        %v2944 = vsel %vm2928, %v2936, %v2904
        %v2945 = vsel %vm2929, %v2937, %v2905
        %v2946 = vsel %vm2930, %v2938, %v2906
        %v2947 = vsel %vm2931, %v2939, %v2907
        %v2948 = vsel %vm2932, %v2940, %v2908
        %2949 = vst [vmem:[#allocation2] sm:$0xff] %v2941
        %2950 = vst [vmem:[#allocation2 + $0x8] sm:$0xff] %v2942
        %2951 = vst [vmem:[#allocation2 + $0x10] sm:$0xff] %v2943
        %2952 = vst [vmem:[#allocation2 + $0x18] sm:$0xff] %v2944
        %2953 = vst [vmem:[#allocation2 + $0x20] sm:$0xff] %v2945
        %2954 = vst [vmem:[#allocation2 + $0x28] sm:$0xff] %v2946
        %2955 = vst [vmem:[#allocation2 + $0x30] sm:$0xff] %v2947
        %2956 = vst [vmem:[#allocation2 + $0x38] sm:$0xff] %v2948
        %v2957 = vld [vmem:[%s3] sm:$0x1]
        %v2958 = vld [vmem:[#allocation2] sm:$0xff]
        %v2959 = vld [vmem:[#allocation2 + $0x8] sm:$0xff]
        %v2960 = vld [vmem:[#allocation2 + $0x10] sm:$0xff]
        %v2961 = vld [vmem:[#allocation2 + $0x18] sm:$0xff]
        %v2962 = vld [vmem:[#allocation2 + $0x20] sm:$0xff]
        %v2963 = vld [vmem:[#allocation2 + $0x28] sm:$0xff]
        %v2964 = vld [vmem:[#allocation2 + $0x30] sm:$0xff]
        %v2965 = vld [vmem:[#allocation2 + $0x38] sm:$0xff]
        %v2966 = vld [vmem:[#allocation2 + $0x40] sm:$0x1]
        %v2967 = vld [vmem:[#allocation2 + $0x48] sm:$0x1]
        %v2969 = vsel %vm1072, %v2957, 0
        %v2972 = vsel %vm1085, %v2966, 0
        %v2975 = vsel %vm1085, %v2967, 0
        %v2977 = vand.u32 %v2959, 4294901760
        %2978 = vmatprep.subr.mxu0 %v2977
        %v2979 = vand.u32 %v2958, 4294901760
        %2980 = vmatpush1.msra.mxu0 %v2979
        %v2981 = vand.u32 %v2961, 4294901760
        %2982 = vmatprep.subr.mxu0 %v2981
        %v2983 = vand.u32 %v2960, 4294901760
        %2984 = vmatpush1.msra.mxu0 %v2983
        %v2985 = vand.u32 %v2963, 4294901760
        %2986 = vmatprep.subr.mxu0 %v2985
        %v2987 = vand.u32 %v2962, 4294901760
        %2988 = vmatpush1.msra.mxu0 %v2987
        %v2989 = vand.u32 %v2965, 4294901760
        %2990 = vmatprep.subr.mxu0 %v2989
        %v2991 = vand.u32 %v2964, 4294901760
        %2992 = vmatpush1.msra.mxu0 %v2991
        %v2993 = vand.u32 %v2975, 4294901760
        %2994 = vmatprep.subr.mxu0 %v2993
        %v2995 = vand.u32 %v2972, 4294901760
        %2996 = vmatpush1.msra.mxu0 %v2995
        %2997 = vmatprep.subr.mxu0 0.0
        %2998 = vmatpush1.msra.mxu0 0.0
        %2999 = vmatprep.subr.mxu0 0.0
        %3000 = vmatpush1.msra.mxu0 0.0
        %3001 = vmatprep.subr.mxu0 0.0
        %3002 = vmatpush1.msra.mxu0 0.0
        %3003 = vmatprep.subr.mxu0 0.0
        %3004 = vmatpush1.msra.mxu0 0.0
        %3005 = vmatprep.subr.mxu0 0.0
        %3006 = vmatpush1.msra.mxu0 0.0
        %3007 = vmatprep.subr.mxu0 0.0
        %3008 = vmatpush1.msra.mxu0 0.0
        %3009 = vmatprep.subr.mxu0 0.0
        %3010 = vmatpush1.msra.mxu0 0.0
        %3011 = vmatprep.subr.mxu0 0.0
        %3012 = vmatpush1.msra.mxu0 0.0
        %3013 = vmatprep.subr.mxu0 0.0
        %3014 = vmatpush1.msra.mxu0 0.0
        %3015 = vmatprep.subr.mxu0 0.0
        %3016 = vmatpush1.msra.mxu0 0.0
        %3017 = vmatprep.subr.mxu0 0.0
        %3018 = vmatpush1.msra.mxu0 0.0
        %3019 = vmatprep.subr.mxu0 0.0
        %3020 = vmatpush1.msra.mxu0 0.0
        %3021 = vmatprep.subr.mxu0 0.0
        %3022 = vmatpush1.msra.mxu0 0.0
        %3023 = vmatprep.subr.mxu0 0.0
        %3024 = vmatpush1.msra.mxu0 0.0
        %3025 = vmatprep.subr.mxu0 0.0
        %3026 = vmatpush1.msra.mxu0 0.0
        %3027 = vmatprep.subr.mxu0 0.0
        %3028 = vmatpush1.msra.mxu0 0.0
        %3029 = vmatprep.subr.mxu0 0.0
        %3030 = vmatpush1.msra.mxu0 0.0
        %3031 = vmatprep.subr.mxu0 0.0
        %3032 = vmatpush1.msra.mxu0 0.0
        %3033 = vmatprep.subr.mxu0 0.0
        %3034 = vmatpush1.msra.mxu0 0.0
        %3035 = vmatprep.subr.mxu0 0.0
        %3036 = vmatpush1.msra.mxu0 0.0
        %3037 = vmatprep.subr.mxu0 0.0
        %3038 = vmatpush1.msra.mxu0 0.0
        %3039 = vmatprep.subr.mxu0 0.0
        %3040 = vmatpush1.msra.mxu0 0.0
        %3041 = vmatprep.subr.mxu0 0.0
        %3042 = vmatpush1.msra.mxu0 0.0
        %3043 = vmatprep.subr.mxu0 0.0
        %3044 = vmatpush1.msra.mxu0 0.0
        %3045 = vmatprep.subr.mxu0 0.0
        %3046 = vmatpush1.msra.mxu0 0.0
        %3047 = vmatprep.subr.mxu0 0.0
        %3048 = vmatpush1.msra.mxu0 0.0
        %3049 = vmatprep.subr.mxu0 0.0
        %3050 = vmatpush1.msra.mxu0 0.0
        %3051 = vmatprep.mubr.f32.mxu0 0.0
        %v3052 = vand.u32 %v2969, 4294901760
        %v3053 = vsub.f32 %v2969, %v3052
        %v3054 = vand.u32 %v3053, 4294901760
        %v3055 = vsub.f32 %v3053, %v3054
        %v3056 = vand.u32 %v3055, 4294901760
        %3057 = vmatmul.mubr.f32.gmra.mrb[0].mxu0 %v3056
        %v3058 = vpop.f32.mrb[0].mxu0
        %v3059 = vadd.f32 0.0, %v3058
        %v3060 = vpop.f32.mrb[0].mxu0
        %v3061 = vadd.f32 0.0, %v3060
        %3062 = vdwg.mxu0
        %v3063 = vand.u32 %v2959, 4294901760
        %v3064 = vsub.f32 %v2959, %v3063
        %v3065 = vand.u32 %v3064, 4294901760
        %v3066 = vsub.f32 %v3064, %v3065
        %v3067 = vand.u32 %v3066, 4294901760
        %3068 = vmatprep.subr.mxu0 %v3067
        %v3069 = vand.u32 %v2958, 4294901760
        %v3070 = vsub.f32 %v2958, %v3069
        %v3071 = vand.u32 %v3070, 4294901760
        %v3072 = vsub.f32 %v3070, %v3071
        %v3073 = vand.u32 %v3072, 4294901760
        %3074 = vmatpush1.msra.mxu0 %v3073
        %v3075 = vand.u32 %v2961, 4294901760
        %v3076 = vsub.f32 %v2961, %v3075
        %v3077 = vand.u32 %v3076, 4294901760
        %v3078 = vsub.f32 %v3076, %v3077
        %v3079 = vand.u32 %v3078, 4294901760
        %3080 = vmatprep.subr.mxu0 %v3079
        %v3081 = vand.u32 %v2960, 4294901760
        %v3082 = vsub.f32 %v2960, %v3081
        %v3083 = vand.u32 %v3082, 4294901760
        %v3084 = vsub.f32 %v3082, %v3083
        %v3085 = vand.u32 %v3084, 4294901760
        %3086 = vmatpush1.msra.mxu0 %v3085
        %v3087 = vand.u32 %v2963, 4294901760
        %v3088 = vsub.f32 %v2963, %v3087
        %v3089 = vand.u32 %v3088, 4294901760
        %v3090 = vsub.f32 %v3088, %v3089
        %v3091 = vand.u32 %v3090, 4294901760
        %3092 = vmatprep.subr.mxu0 %v3091
        %v3093 = vand.u32 %v2962, 4294901760
        %v3094 = vsub.f32 %v2962, %v3093
        %v3095 = vand.u32 %v3094, 4294901760
        %v3096 = vsub.f32 %v3094, %v3095
        %v3097 = vand.u32 %v3096, 4294901760
        %3098 = vmatpush1.msra.mxu0 %v3097
        %v3099 = vand.u32 %v2965, 4294901760
        %v3100 = vsub.f32 %v2965, %v3099
        %v3101 = vand.u32 %v3100, 4294901760
        %v3102 = vsub.f32 %v3100, %v3101
        %v3103 = vand.u32 %v3102, 4294901760
        %3104 = vmatprep.subr.mxu0 %v3103
        %v3105 = vand.u32 %v2964, 4294901760
        %v3106 = vsub.f32 %v2964, %v3105
        %v3107 = vand.u32 %v3106, 4294901760
        %v3108 = vsub.f32 %v3106, %v3107
        %v3109 = vand.u32 %v3108, 4294901760
        %3110 = vmatpush1.msra.mxu0 %v3109
        %v3111 = vand.u32 %v2975, 4294901760
        %v3112 = vsub.f32 %v2975, %v3111
        %v3113 = vand.u32 %v3112, 4294901760
        %v3114 = vsub.f32 %v3112, %v3113
        %v3115 = vand.u32 %v3114, 4294901760
        %3116 = vmatprep.subr.mxu0 %v3115
        %v3117 = vand.u32 %v2972, 4294901760
        %v3118 = vsub.f32 %v2972, %v3117
        %v3119 = vand.u32 %v3118, 4294901760
        %v3120 = vsub.f32 %v3118, %v3119
        %v3121 = vand.u32 %v3120, 4294901760
        %3122 = vmatpush1.msra.mxu0 %v3121
        %3123 = vmatprep.subr.mxu0 0.0
        %3124 = vmatpush1.msra.mxu0 0.0
        %3125 = vmatprep.subr.mxu0 0.0
        %3126 = vmatpush1.msra.mxu0 0.0
        %3127 = vmatprep.subr.mxu0 0.0
        %3128 = vmatpush1.msra.mxu0 0.0
        %3129 = vmatprep.subr.mxu0 0.0
        %3130 = vmatpush1.msra.mxu0 0.0
        %3131 = vmatprep.subr.mxu0 0.0
        %3132 = vmatpush1.msra.mxu0 0.0
        %3133 = vmatprep.subr.mxu0 0.0
        %3134 = vmatpush1.msra.mxu0 0.0
        %3135 = vmatprep.subr.mxu0 0.0
        %3136 = vmatpush1.msra.mxu0 0.0
        %3137 = vmatprep.subr.mxu0 0.0
        %3138 = vmatpush1.msra.mxu0 0.0
        %3139 = vmatprep.subr.mxu0 0.0
        %3140 = vmatpush1.msra.mxu0 0.0
        %3141 = vmatprep.subr.mxu0 0.0
        %3142 = vmatpush1.msra.mxu0 0.0
        %3143 = vmatprep.subr.mxu0 0.0
        %3144 = vmatpush1.msra.mxu0 0.0
        %3145 = vmatprep.subr.mxu0 0.0
        %3146 = vmatpush1.msra.mxu0 0.0
        %3147 = vmatprep.subr.mxu0 0.0
        %3148 = vmatpush1.msra.mxu0 0.0
        %3149 = vmatprep.subr.mxu0 0.0
        %3150 = vmatpush1.msra.mxu0 0.0
        %3151 = vmatprep.subr.mxu0 0.0
        %3152 = vmatpush1.msra.mxu0 0.0
        %3153 = vmatprep.subr.mxu0 0.0
        %3154 = vmatpush1.msra.mxu0 0.0
        %3155 = vmatprep.subr.mxu0 0.0
        %3156 = vmatpush1.msra.mxu0 0.0
        %3157 = vmatprep.subr.mxu0 0.0
        %3158 = vmatpush1.msra.mxu0 0.0
        %3159 = vmatprep.subr.mxu0 0.0
        %3160 = vmatpush1.msra.mxu0 0.0
        %3161 = vmatprep.subr.mxu0 0.0
        %3162 = vmatpush1.msra.mxu0 0.0
        %3163 = vmatprep.subr.mxu0 0.0
        %3164 = vmatpush1.msra.mxu0 0.0
        %3165 = vmatprep.subr.mxu0 0.0
        %3166 = vmatpush1.msra.mxu0 0.0
        %3167 = vmatprep.subr.mxu0 0.0
        %3168 = vmatpush1.msra.mxu0 0.0
        %3169 = vmatprep.subr.mxu0 0.0
        %3170 = vmatpush1.msra.mxu0 0.0
        %3171 = vmatprep.subr.mxu0 0.0
        %3172 = vmatpush1.msra.mxu0 0.0
        %3173 = vmatprep.subr.mxu0 0.0
        %3174 = vmatpush1.msra.mxu0 0.0
        %3175 = vmatprep.subr.mxu0 0.0
        %3176 = vmatpush1.msra.mxu0 0.0
        %3177 = vmatprep.mubr.f32.mxu0 0.0
        %v3178 = vand.u32 %v2969, 4294901760
        %3179 = vmatmul.mubr.f32.gmra.mrb[0].mxu0 %v3178
        %v3180 = vpop.f32.mrb[0].mxu0
        %v3181 = vadd.f32 %v3059, %v3180
        %v3182 = vpop.f32.mrb[0].mxu0
        %v3183 = vadd.f32 %v3061, %v3182
        %3184 = vdwg.mxu0
        %v3185 = vand.u32 %v2959, 4294901760
        %v3186 = vsub.f32 %v2959, %v3185
        %3187 = vmatprep.subr.mxu0 %v3186
        %v3188 = vand.u32 %v2958, 4294901760
        %v3189 = vsub.f32 %v2958, %v3188
        %3190 = vmatpush1.msra.mxu0 %v3189
        %v3191 = vand.u32 %v2961, 4294901760
        %v3192 = vsub.f32 %v2961, %v3191
        %3193 = vmatprep.subr.mxu0 %v3192
        %v3194 = vand.u32 %v2960, 4294901760
        %v3195 = vsub.f32 %v2960, %v3194
        %3196 = vmatpush1.msra.mxu0 %v3195
        %v3197 = vand.u32 %v2963, 4294901760
        %v3198 = vsub.f32 %v2963, %v3197
        %3199 = vmatprep.subr.mxu0 %v3198
        %v3200 = vand.u32 %v2962, 4294901760
        %v3201 = vsub.f32 %v2962, %v3200
        %3202 = vmatpush1.msra.mxu0 %v3201
        %v3203 = vand.u32 %v2965, 4294901760
        %v3204 = vsub.f32 %v2965, %v3203
        %3205 = vmatprep.subr.mxu0 %v3204
        %v3206 = vand.u32 %v2964, 4294901760
        %v3207 = vsub.f32 %v2964, %v3206
        %3208 = vmatpush1.msra.mxu0 %v3207
        %v3209 = vand.u32 %v2975, 4294901760
        %v3210 = vsub.f32 %v2975, %v3209
        %3211 = vmatprep.subr.mxu0 %v3210
        %v3212 = vand.u32 %v2972, 4294901760
        %v3213 = vsub.f32 %v2972, %v3212
        %3214 = vmatpush1.msra.mxu0 %v3213
        %3215 = vmatprep.subr.mxu0 0.0
        %3216 = vmatpush1.msra.mxu0 0.0
        %3217 = vmatprep.subr.mxu0 0.0
        %3218 = vmatpush1.msra.mxu0 0.0
        %3219 = vmatprep.subr.mxu0 0.0
        %3220 = vmatpush1.msra.mxu0 0.0
        %3221 = vmatprep.subr.mxu0 0.0
        %3222 = vmatpush1.msra.mxu0 0.0
        %3223 = vmatprep.subr.mxu0 0.0
        %3224 = vmatpush1.msra.mxu0 0.0
        %3225 = vmatprep.subr.mxu0 0.0
        %3226 = vmatpush1.msra.mxu0 0.0
        %3227 = vmatprep.subr.mxu0 0.0
        %3228 = vmatpush1.msra.mxu0 0.0
        %3229 = vmatprep.subr.mxu0 0.0
        %3230 = vmatpush1.msra.mxu0 0.0
        %3231 = vmatprep.subr.mxu0 0.0
        %3232 = vmatpush1.msra.mxu0 0.0
        %3233 = vmatprep.subr.mxu0 0.0
        %3234 = vmatpush1.msra.mxu0 0.0
        %3235 = vmatprep.subr.mxu0 0.0
        %3236 = vmatpush1.msra.mxu0 0.0
        %3237 = vmatprep.subr.mxu0 0.0
        %3238 = vmatpush1.msra.mxu0 0.0
        %3239 = vmatprep.subr.mxu0 0.0
        %3240 = vmatpush1.msra.mxu0 0.0
        %3241 = vmatprep.subr.mxu0 0.0
        %3242 = vmatpush1.msra.mxu0 0.0
        %3243 = vmatprep.subr.mxu0 0.0
        %3244 = vmatpush1.msra.mxu0 0.0
        %3245 = vmatprep.subr.mxu0 0.0
        %3246 = vmatpush1.msra.mxu0 0.0
        %3247 = vmatprep.subr.mxu0 0.0
        %3248 = vmatpush1.msra.mxu0 0.0
        %3249 = vmatprep.subr.mxu0 0.0
        %3250 = vmatpush1.msra.mxu0 0.0
        %3251 = vmatprep.subr.mxu0 0.0
        %3252 = vmatpush1.msra.mxu0 0.0
        %3253 = vmatprep.subr.mxu0 0.0
        %3254 = vmatpush1.msra.mxu0 0.0
        %3255 = vmatprep.subr.mxu0 0.0
        %3256 = vmatpush1.msra.mxu0 0.0
        %3257 = vmatprep.subr.mxu0 0.0
        %3258 = vmatpush1.msra.mxu0 0.0
        %3259 = vmatprep.subr.mxu0 0.0
        %3260 = vmatpush1.msra.mxu0 0.0
        %3261 = vmatprep.subr.mxu0 0.0
        %3262 = vmatpush1.msra.mxu0 0.0
        %3263 = vmatprep.subr.mxu0 0.0
        %3264 = vmatpush1.msra.mxu0 0.0
        %3265 = vmatprep.subr.mxu0 0.0
        %3266 = vmatpush1.msra.mxu0 0.0
        %3267 = vmatprep.subr.mxu0 0.0
        %3268 = vmatpush1.msra.mxu0 0.0
        %3269 = vmatprep.mubr.f32.mxu0 0.0
        %v3270 = vand.u32 %v2969, 4294901760
        %v3271 = vsub.f32 %v2969, %v3270
        %3272 = vmatmul.mubr.f32.gmra.mrb[0].mxu0 %v3271
        %v3273 = vpop.f32.mrb[0].mxu0
        %v3274 = vadd.f32 %v3181, %v3273
        %v3275 = vpop.f32.mrb[0].mxu0
        %v3276 = vadd.f32 %v3183, %v3275
        %3277 = vdwg.mxu0
        %v3278 = vand.u32 %v2959, 4294901760
        %3279 = vmatprep.subr.mxu0 %v3278
        %v3280 = vand.u32 %v2958, 4294901760
        %3281 = vmatpush1.msra.mxu0 %v3280
        %v3282 = vand.u32 %v2961, 4294901760
        %3283 = vmatprep.subr.mxu0 %v3282
        %v3284 = vand.u32 %v2960, 4294901760
        %3285 = vmatpush1.msra.mxu0 %v3284
        %v3286 = vand.u32 %v2963, 4294901760
        %3287 = vmatprep.subr.mxu0 %v3286
        %v3288 = vand.u32 %v2962, 4294901760
        %3289 = vmatpush1.msra.mxu0 %v3288
        %v3290 = vand.u32 %v2965, 4294901760
        %3291 = vmatprep.subr.mxu0 %v3290
        %v3292 = vand.u32 %v2964, 4294901760
        %3293 = vmatpush1.msra.mxu0 %v3292
        %v3294 = vand.u32 %v2975, 4294901760
        %3295 = vmatprep.subr.mxu0 %v3294
        %v3296 = vand.u32 %v2972, 4294901760
        %3297 = vmatpush1.msra.mxu0 %v3296
        %3298 = vmatprep.subr.mxu0 0.0
        %3299 = vmatpush1.msra.mxu0 0.0
        %3300 = vmatprep.subr.mxu0 0.0
        %3301 = vmatpush1.msra.mxu0 0.0
        %3302 = vmatprep.subr.mxu0 0.0
        %3303 = vmatpush1.msra.mxu0 0.0
        %3304 = vmatprep.subr.mxu0 0.0
        %3305 = vmatpush1.msra.mxu0 0.0
        %3306 = vmatprep.subr.mxu0 0.0
        %3307 = vmatpush1.msra.mxu0 0.0
        %3308 = vmatprep.subr.mxu0 0.0
        %3309 = vmatpush1.msra.mxu0 0.0
        %3310 = vmatprep.subr.mxu0 0.0
        %3311 = vmatpush1.msra.mxu0 0.0
        %3312 = vmatprep.subr.mxu0 0.0
        %3313 = vmatpush1.msra.mxu0 0.0
        %3314 = vmatprep.subr.mxu0 0.0
        %3315 = vmatpush1.msra.mxu0 0.0
        %3316 = vmatprep.subr.mxu0 0.0
        %3317 = vmatpush1.msra.mxu0 0.0
        %3318 = vmatprep.subr.mxu0 0.0
        %3319 = vmatpush1.msra.mxu0 0.0
        %3320 = vmatprep.subr.mxu0 0.0
        %3321 = vmatpush1.msra.mxu0 0.0
        %3322 = vmatprep.subr.mxu0 0.0
        %3323 = vmatpush1.msra.mxu0 0.0
        %3324 = vmatprep.subr.mxu0 0.0
        %3325 = vmatpush1.msra.mxu0 0.0
        %3326 = vmatprep.subr.mxu0 0.0
        %3327 = vmatpush1.msra.mxu0 0.0
        %3328 = vmatprep.subr.mxu0 0.0
        %3329 = vmatpush1.msra.mxu0 0.0
        %3330 = vmatprep.subr.mxu0 0.0
        %3331 = vmatpush1.msra.mxu0 0.0
        %3332 = vmatprep.subr.mxu0 0.0
        %3333 = vmatpush1.msra.mxu0 0.0
        %3334 = vmatprep.subr.mxu0 0.0
        %3335 = vmatpush1.msra.mxu0 0.0
        %3336 = vmatprep.subr.mxu0 0.0
        %3337 = vmatpush1.msra.mxu0 0.0
        %3338 = vmatprep.subr.mxu0 0.0
        %3339 = vmatpush1.msra.mxu0 0.0
        %3340 = vmatprep.subr.mxu0 0.0
        %3341 = vmatpush1.msra.mxu0 0.0
        %3342 = vmatprep.subr.mxu0 0.0
        %3343 = vmatpush1.msra.mxu0 0.0
        %3344 = vmatprep.subr.mxu0 0.0
        %3345 = vmatpush1.msra.mxu0 0.0
        %3346 = vmatprep.subr.mxu0 0.0
        %3347 = vmatpush1.msra.mxu0 0.0
        %3348 = vmatprep.subr.mxu0 0.0
        %3349 = vmatpush1.msra.mxu0 0.0
        %3350 = vmatprep.subr.mxu0 0.0
        %3351 = vmatpush1.msra.mxu0 0.0
        %3352 = vmatprep.mubr.f32.mxu0 0.0
        %v3353 = vand.u32 %v2969, 4294901760
        %v3354 = vsub.f32 %v2969, %v3353
        %v3355 = vand.u32 %v3354, 4294901760
        %3356 = vmatmul.mubr.f32.gmra.mrb[0].mxu0 %v3355
        %v3357 = vpop.f32.mrb[0].mxu0
        %v3358 = vadd.f32 %v3274, %v3357
        %v3359 = vpop.f32.mrb[0].mxu0
        %v3360 = vadd.f32 %v3276, %v3359
        %3361 = vdwg.mxu0
        %v3362 = vand.u32 %v2959, 4294901760
        %v3363 = vsub.f32 %v2959, %v3362
        %v3364 = vand.u32 %v3363, 4294901760
        %3365 = vmatprep.subr.mxu0 %v3364
        %v3366 = vand.u32 %v2958, 4294901760
        %v3367 = vsub.f32 %v2958, %v3366
        %v3368 = vand.u32 %v3367, 4294901760
        %3369 = vmatpush1.msra.mxu0 %v3368
        %v3370 = vand.u32 %v2961, 4294901760
        %v3371 = vsub.f32 %v2961, %v3370
        %v3372 = vand.u32 %v3371, 4294901760
        %3373 = vmatprep.subr.mxu0 %v3372
        %v3374 = vand.u32 %v2960, 4294901760
        %v3375 = vsub.f32 %v2960, %v3374
        %v3376 = vand.u32 %v3375, 4294901760
        %3377 = vmatpush1.msra.mxu0 %v3376
        %v3378 = vand.u32 %v2963, 4294901760
        %v3379 = vsub.f32 %v2963, %v3378
        %v3380 = vand.u32 %v3379, 4294901760
        %3381 = vmatprep.subr.mxu0 %v3380
        %v3382 = vand.u32 %v2962, 4294901760
        %v3383 = vsub.f32 %v2962, %v3382
        %v3384 = vand.u32 %v3383, 4294901760
        %3385 = vmatpush1.msra.mxu0 %v3384
        %v3386 = vand.u32 %v2965, 4294901760
        %v3387 = vsub.f32 %v2965, %v3386
        %v3388 = vand.u32 %v3387, 4294901760
        %3389 = vmatprep.subr.mxu0 %v3388
        %v3390 = vand.u32 %v2964, 4294901760
        %v3391 = vsub.f32 %v2964, %v3390
        %v3392 = vand.u32 %v3391, 4294901760
        %3393 = vmatpush1.msra.mxu0 %v3392
        %v3394 = vand.u32 %v2975, 4294901760
        %v3395 = vsub.f32 %v2975, %v3394
        %v3396 = vand.u32 %v3395, 4294901760
        %3397 = vmatprep.subr.mxu0 %v3396
        %v3398 = vand.u32 %v2972, 4294901760
        %v3399 = vsub.f32 %v2972, %v3398
        %v3400 = vand.u32 %v3399, 4294901760
        %3401 = vmatpush1.msra.mxu0 %v3400
        %3402 = vmatprep.subr.mxu0 0.0
        %3403 = vmatpush1.msra.mxu0 0.0
        %3404 = vmatprep.subr.mxu0 0.0
        %3405 = vmatpush1.msra.mxu0 0.0
        %3406 = vmatprep.subr.mxu0 0.0
        %3407 = vmatpush1.msra.mxu0 0.0
        %3408 = vmatprep.subr.mxu0 0.0
        %3409 = vmatpush1.msra.mxu0 0.0
        %3410 = vmatprep.subr.mxu0 0.0
        %3411 = vmatpush1.msra.mxu0 0.0
        %3412 = vmatprep.subr.mxu0 0.0
        %3413 = vmatpush1.msra.mxu0 0.0
        %3414 = vmatprep.subr.mxu0 0.0
        %3415 = vmatpush1.msra.mxu0 0.0
        %3416 = vmatprep.subr.mxu0 0.0
        %3417 = vmatpush1.msra.mxu0 0.0
        %3418 = vmatprep.subr.mxu0 0.0
        %3419 = vmatpush1.msra.mxu0 0.0
        %3420 = vmatprep.subr.mxu0 0.0
        %3421 = vmatpush1.msra.mxu0 0.0
        %3422 = vmatprep.subr.mxu0 0.0
        %3423 = vmatpush1.msra.mxu0 0.0
        %3424 = vmatprep.subr.mxu0 0.0
        %3425 = vmatpush1.msra.mxu0 0.0
        %3426 = vmatprep.subr.mxu0 0.0
        %3427 = vmatpush1.msra.mxu0 0.0
        %3428 = vmatprep.subr.mxu0 0.0
        %3429 = vmatpush1.msra.mxu0 0.0
        %3430 = vmatprep.subr.mxu0 0.0
        %3431 = vmatpush1.msra.mxu0 0.0
        %3432 = vmatprep.subr.mxu0 0.0
        %3433 = vmatpush1.msra.mxu0 0.0
        %3434 = vmatprep.subr.mxu0 0.0
        %3435 = vmatpush1.msra.mxu0 0.0
        %3436 = vmatprep.subr.mxu0 0.0
        %3437 = vmatpush1.msra.mxu0 0.0
        %3438 = vmatprep.subr.mxu0 0.0
        %3439 = vmatpush1.msra.mxu0 0.0
        %3440 = vmatprep.subr.mxu0 0.0
        %3441 = vmatpush1.msra.mxu0 0.0
        %3442 = vmatprep.subr.mxu0 0.0
        %3443 = vmatpush1.msra.mxu0 0.0
        %3444 = vmatprep.subr.mxu0 0.0
        %3445 = vmatpush1.msra.mxu0 0.0
        %3446 = vmatprep.subr.mxu0 0.0
        %3447 = vmatpush1.msra.mxu0 0.0
        %3448 = vmatprep.subr.mxu0 0.0
        %3449 = vmatpush1.msra.mxu0 0.0
        %3450 = vmatprep.subr.mxu0 0.0
        %3451 = vmatpush1.msra.mxu0 0.0
        %3452 = vmatprep.subr.mxu0 0.0
        %3453 = vmatpush1.msra.mxu0 0.0
        %3454 = vmatprep.subr.mxu0 0.0
        %3455 = vmatpush1.msra.mxu0 0.0
        %3456 = vmatprep.mubr.f32.mxu0 0.0
        %v3457 = vand.u32 %v2969, 4294901760
        %3458 = vmatmul.mubr.f32.gmra.mrb[0].mxu0 %v3457
        %v3459 = vpop.f32.mrb[0].mxu0
        %v3460 = vadd.f32 %v3358, %v3459
        %v3461 = vpop.f32.mrb[0].mxu0
        %v3462 = vadd.f32 %v3360, %v3461
        %3463 = vdwg.mxu0
        %v3464 = vand.u32 %v2959, 4294901760
        %3465 = vmatprep.subr.mxu0 %v3464
        %v3466 = vand.u32 %v2958, 4294901760
        %3467 = vmatpush1.msra.mxu0 %v3466
        %v3468 = vand.u32 %v2961, 4294901760
        %3469 = vmatprep.subr.mxu0 %v3468
        %v3470 = vand.u32 %v2960, 4294901760
        %3471 = vmatpush1.msra.mxu0 %v3470
        %v3472 = vand.u32 %v2963, 4294901760
        %3473 = vmatprep.subr.mxu0 %v3472
        %v3474 = vand.u32 %v2962, 4294901760
        %3475 = vmatpush1.msra.mxu0 %v3474
        %v3476 = vand.u32 %v2965, 4294901760
        %3477 = vmatprep.subr.mxu0 %v3476
        %v3478 = vand.u32 %v2964, 4294901760
        %3479 = vmatpush1.msra.mxu0 %v3478
        %v3480 = vand.u32 %v2975, 4294901760
        %3481 = vmatprep.subr.mxu0 %v3480
        %v3482 = vand.u32 %v2972, 4294901760
        %3483 = vmatpush1.msra.mxu0 %v3482
        %3484 = vmatprep.subr.mxu0 0.0
        %3485 = vmatpush1.msra.mxu0 0.0
        %3486 = vmatprep.subr.mxu0 0.0
        %3487 = vmatpush1.msra.mxu0 0.0
        %3488 = vmatprep.subr.mxu0 0.0
        %3489 = vmatpush1.msra.mxu0 0.0
        %3490 = vmatprep.subr.mxu0 0.0
        %3491 = vmatpush1.msra.mxu0 0.0
        %3492 = vmatprep.subr.mxu0 0.0
        %3493 = vmatpush1.msra.mxu0 0.0
        %3494 = vmatprep.subr.mxu0 0.0
        %3495 = vmatpush1.msra.mxu0 0.0
        %3496 = vmatprep.subr.mxu0 0.0
        %3497 = vmatpush1.msra.mxu0 0.0
        %3498 = vmatprep.subr.mxu0 0.0
        %3499 = vmatpush1.msra.mxu0 0.0
        %3500 = vmatprep.subr.mxu0 0.0
        %3501 = vmatpush1.msra.mxu0 0.0
        %3502 = vmatprep.subr.mxu0 0.0
        %3503 = vmatpush1.msra.mxu0 0.0
        %3504 = vmatprep.subr.mxu0 0.0
        %3505 = vmatpush1.msra.mxu0 0.0
        %3506 = vmatprep.subr.mxu0 0.0
        %3507 = vmatpush1.msra.mxu0 0.0
        %3508 = vmatprep.subr.mxu0 0.0
        %3509 = vmatpush1.msra.mxu0 0.0
        %3510 = vmatprep.subr.mxu0 0.0
        %3511 = vmatpush1.msra.mxu0 0.0
        %3512 = vmatprep.subr.mxu0 0.0
        %3513 = vmatpush1.msra.mxu0 0.0
        %3514 = vmatprep.subr.mxu0 0.0
        %3515 = vmatpush1.msra.mxu0 0.0
        %3516 = vmatprep.subr.mxu0 0.0
        %3517 = vmatpush1.msra.mxu0 0.0
        %3518 = vmatprep.subr.mxu0 0.0
        %3519 = vmatpush1.msra.mxu0 0.0
        %3520 = vmatprep.subr.mxu0 0.0
        %3521 = vmatpush1.msra.mxu0 0.0
        %3522 = vmatprep.subr.mxu0 0.0
        %3523 = vmatpush1.msra.mxu0 0.0
        %3524 = vmatprep.subr.mxu0 0.0
        %3525 = vmatpush1.msra.mxu0 0.0
        %3526 = vmatprep.subr.mxu0 0.0
        %3527 = vmatpush1.msra.mxu0 0.0
        %3528 = vmatprep.subr.mxu0 0.0
        %3529 = vmatpush1.msra.mxu0 0.0
        %3530 = vmatprep.subr.mxu0 0.0
        %3531 = vmatpush1.msra.mxu0 0.0
        %3532 = vmatprep.subr.mxu0 0.0
        %3533 = vmatpush1.msra.mxu0 0.0
        %3534 = vmatprep.subr.mxu0 0.0
        %3535 = vmatpush1.msra.mxu0 0.0
        %3536 = vmatprep.subr.mxu0 0.0
        %3537 = vmatpush1.msra.mxu0 0.0
        %3538 = vmatprep.mubr.f32.mxu0 0.0
        %v3539 = vand.u32 %v2969, 4294901760
        %3540 = vmatmul.mubr.f32.gmra.mrb[0].mxu0 %v3539
        %v3541 = vpop.f32.mrb[0].mxu0
        %v3542 = vadd.f32 %v3460, %v3541
        %v3543 = vpop.f32.mrb[0].mxu0
        %v3544 = vadd.f32 %v3462, %v3543
        %3545 = vdwg.mxu0
        %v3548 = vcombine.low %v3542, %v3544
        %v3550 = vunpack.c.l.s4 1966171168
        %v3551 = vunpack.c.0.s8 %v3550
        %v3552 = vlaneseq
        %v3553 = vshrl.u32 %v3552, 7
        %v3554 = vsub.s32 %v3551, %v3553
        %v3555 = vrot.slane %v3548, %v3554
        %v3557 = vunpack.c.l.s4 1966171168
        %v3558 = vunpack.c.0.s8 %v3557
        %v3559 = vlaneseq
        %v3560 = vshrl.u32 %v3559, 7
        %v3561 = vsub.s32 %v3558, %v3560
        %v3562 = vrot.slane %v3555, %v3561
        %3564 = vst.msk [vmem:[%s206] sm:$0x3] %vm217, %v3562
        %s3565 = sand.u32 %s116, 1
        %s3566 = scalar_lea.sflag [#allocation5], %s3565
        %s3567 = sand.u32 %s116, 1
        %s3568 = smul.addr %s3567, 2
        %s3569 = scalar_lea.vmem [#allocation6], %s3568
        // Predicated region
        $region41: #{tpu_custom_call.1} parent=35 // pred_check
          %p3570 = pneg %p126
        $region42: #{tpu_custom_call.1} parent=35 // pred_check_branch
          %3572 = sbr.rel (%p3570) target = $region44
        $region43: #{tpu_custom_call.1} parent=35 // pred_region
          %s3573 = smul.u32 2, %s19
          %s3575 = ssub.s32 32, 32
          %3576 = vsyncadd %s3566, %s3575
          %s3577 = smul.addr %s3573, 16
          %s3578 = scalar_lea.hbm %s4, %s3577
          %s3580 = sshll.u32 %s3569, 4
          %s3581 = int_to_ptr.vmem [resolvable:$true] %s3580
          %3583 = dma.vmem_to_hbm [thread:$0]  %s3581, 32, %s3578, %s3566
        $region44: #{tpu_custom_call.1} parent=35 // pred_fallthru
          _
      $region36: #{tpu_custom_call.1} parent=5 // pred_fallthru
        _
      %p3584 = scmp.le.s32.totalorder 2, %s14
      // Predicated region
      $region45: #{tpu_custom_call.1} parent=5 // pred_check
        %p3585 = pneg %p3584
      $region46: #{tpu_custom_call.1} parent=5 // pred_check_branch
        %3587 = sbr.rel (%p3585) target = $region48
      $region47: #{tpu_custom_call.1} parent=5 // pred_region
        %s3588 = ssub.s32 %s14, 2
        // Predicated region
        $region49: #{tpu_custom_call.1} parent=47 // pred_check
          %p3589 = pneg %p132
        $region50: #{tpu_custom_call.1} parent=47 // pred_check_branch
          %3591 = sbr.rel (%p3589) target = $region52
        $region51: #{tpu_custom_call.1} parent=47 // pred_region
          %s3592 = sand.u32 %s117, 1
          %s3593 = scalar_lea.sflag [#allocation5], %s3592
          %s3594 = sand.u32 %s117, 1
          %s3595 = smul.addr %s3594, 2
          %s3596 = scalar_lea.vmem [#allocation6], %s3595
          %3597 = dma.done %s3593, 32
        $region52: #{tpu_custom_call.1} parent=47 // pred_fallthru
          _
      $region48: #{tpu_custom_call.1} parent=5 // pred_fallthru
        _
    $region6: #{tpu_custom_call.1} parent=1 // loop_footer
      %s18 = sadd.s32 1, %s14
    $region7: #{tpu_custom_call.1} parent=1 // loop_footer_branch
      %13 = sbr.rel target = $region3
    $region8: #{tpu_custom_call.1} parent=1 // loop_exit
      _
    %3598 = vsyncpa [#allocation4], 1
    %s3599 = scalar_lea.sflag [#allocation4], 1
    %3600 = vsyncpa %s3599, 1
    %3601 = vsyncpa [#allocation5], 1
    %s3602 = scalar_lea.sflag [#allocation5], 1
    %3603 = vsyncpa %s3602, 1

</llo_original>
